<compile_context>
chip_gen: v5e
topology: v5e:2x2
jax: 0.10.0
libtpu: 0.0.40
codegen_flags: <defaults>
</compile_context>

<pallas_src>
import functools

import jax
import jax.numpy as jnp
from jax.experimental import pallas as pl
from jax.experimental.pallas import tpu as pltpu


# --------------------------------------------------------------------------
# Small helpers
# --------------------------------------------------------------------------
def _round_up(x, m):
    return (x + m - 1) // m * m


def _pad2d(x, rows, cols):
    r, c = x.shape
    if r == rows and c == cols:
        return x
    return jnp.pad(x, ((0, rows - r), (0, cols - c)))


_COMPILER_PARAMS_3D = pltpu.CompilerParams(
    dimension_semantics=("parallel", "parallel", "arbitrary"),
    vmem_limit_bytes=32 * 1024 * 1024,
)
_COMPILER_PARAMS_1D = pltpu.CompilerParams(
    dimension_semantics=("parallel",),
    vmem_limit_bytes=32 * 1024 * 1024,
)


# --------------------------------------------------------------------------
# Generic tiled matmul kernel with fused epilogue:
#   O = act(A @ B [+ bias] [+ add])
# grid = (M/tm, N/tn, K/tk); f32 accumulator in VMEM scratch.
# --------------------------------------------------------------------------
def _matmul_kernel(*refs, has_bias, has_add, activation):
    a_ref, b_ref = refs[0], refs[1]
    idx = 2
    bias_ref = None
    add_ref = None
    if has_bias:
        bias_ref = refs[idx]
        idx += 1
    if has_add:
        add_ref = refs[idx]
        idx += 1
    o_ref = refs[idx]
    acc_ref = refs[idx + 1]

    k = pl.program_id(2)

    @pl.when(k == 0)
    def _():
        acc_ref[...] = jnp.zeros_like(acc_ref)

    acc_ref[...] += jnp.dot(a_ref[...], b_ref[...],
                            preferred_element_type=jnp.float32)

    @pl.when(k == pl.num_programs(2) - 1)
    def _():
        out = acc_ref[...]
        if has_bias:
            out = out + bias_ref[...]          # (1, tn) broadcast over rows
        if has_add:
            out = out + add_ref[...]
        if activation == "relu":
            out = jnp.maximum(out, 0.0)
        elif activation == "tanh":
            out = jnp.tanh(out)
        o_ref[...] = out.astype(o_ref.dtype)


def matmul_act(a, b, bias=None, add=None, activation=None,
               compute_dtype=None, out_dtype=jnp.float32,
               tm=256, tn=256, tk=512):
    """act(a @ b [+ bias] [+ add]) with padding to tile-friendly shapes."""
    M, K = a.shape
    K2, N = b.shape
    assert K == K2

    tm = min(tm, _round_up(M, 8))
    tn = min(tn, _round_up(N, 128))
    tk = min(tk, _round_up(K, 128))
    Mp = _round_up(M, tm)
    Np = _round_up(N, tn)
    Kp = _round_up(K, tk)

    if compute_dtype is not None:
        a = a.astype(compute_dtype)
        b = b.astype(compute_dtype)

    inputs = [_pad2d(a, Mp, Kp), _pad2d(b, Kp, Np)]
    in_specs = [
        pl.BlockSpec((tm, tk), lambda i, j, k: (i, k)),
        pl.BlockSpec((tk, tn), lambda i, j, k: (k, j)),
    ]
    has_bias = bias is not None
    has_add = add is not None
    if has_bias:
        inputs.append(_pad2d(bias.astype(jnp.float32), 1, Np))
        in_specs.append(pl.BlockSpec((1, tn), lambda i, j, k: (0, j)))
    if has_add:
        inputs.append(_pad2d(add.astype(jnp.float32), Mp, Np))
        in_specs.append(pl.BlockSpec((tm, tn), lambda i, j, k: (i, j)))

    kern = functools.partial(_matmul_kernel, has_bias=has_bias,
                             has_add=has_add, activation=activation)

    out = pl.pallas_call(
        kern,
        out_shape=jax.ShapeDtypeStruct((Mp, Np), out_dtype),
        grid=(Mp // tm, Np // tn, Kp // tk),
        in_specs=in_specs,
        out_specs=pl.BlockSpec((tm, tn), lambda i, j, k: (i, j)),
        scratch_shapes=[pltpu.VMEM((tm, tn), jnp.float32)],
        compiler_params=_COMPILER_PARAMS_3D,
    )(*inputs)
    return out[:M, :N]


# --------------------------------------------------------------------------
# GraphSAGE (mean aggregation) convolution, reassociated:
#   out = Â @ (X_src @ Wl) + X_dst @ Wr + b     (optional fused ReLU)
# Â is the pre-normalized dense adjacency (row t = mean weights of t's
# in-neighbors), shape (n_dst, n_src).  Â is streamed in bf16; accumulation
# stays f32.  Only the first `out_rows` output rows are computed on request.
# --------------------------------------------------------------------------
def sage_conv(a_norm, x_src, wl, wr, b, x_dst=None, apply_relu=False,
              out_rows=None):
    if x_dst is None:
        x_dst = x_src
    if out_rows is None:
        out_rows = a_norm.shape[0]
    proj = matmul_act(x_src, wl)                                 # (n_src, O)
    self_term = matmul_act(x_dst[:out_rows], wr, bias=b)         # (rows, O)
    # TODO(synk): for genuinely sparse graphs replace this dense Â@P matmul
    # with a CSR / scalar-prefetch gather kernel; dense is fine at these sizes.
    return matmul_act(a_norm[:out_rows], proj, add=self_term,
                      activation="relu" if apply_relu else None,
                      compute_dtype=jnp.bfloat16)


# --------------------------------------------------------------------------
# FeatGenerator head (Sampling + fc1 + fc2 + fc_flat), row-tiled.
#   gen = tanh(relu(relu((z + noise) @ W1 + b1) @ W2 + b2) @ W3 + b3)
# Weights use constant index maps -> VMEM resident across row blocks.
# --------------------------------------------------------------------------
def _gen_kernel(z_ref, noise_ref, w1_ref, b1_ref, w2_ref, b2_ref,
                w3_ref, b3_ref, gen_ref):
    h = z_ref[...] + noise_ref[...]                              # Sampling()
    h = jnp.maximum(
        jnp.dot(h, w1_ref[...], preferred_element_type=jnp.float32)
        + b1_ref[...], 0.0)
    h = jnp.maximum(
        jnp.dot(h, w2_ref[...], preferred_element_type=jnp.float32)
        + b2_ref[...], 0.0)
    # TODO(synk): F.dropout between fc2 and fc_flat is identity in eval mode.
    gen_ref[...] = jnp.tanh(
        jnp.dot(h, w3_ref[...], preferred_element_type=jnp.float32)
        + b3_ref[...])


def feat_generator(z, noise, p, tm=256):
    n, gh = z.shape
    f1 = p["gen_w1"].shape[1]
    f2 = p["gen_w2"].shape[1]
    gen_dim = p["gen_w3"].shape[1]

    ghp = _round_up(gh, 128)
    f1p = _round_up(f1, 128)
    f2p = _round_up(f2, 128)
    genp = _round_up(gen_dim, 128)
    tm = min(tm, _round_up(n, 8))
    n_pad = _round_up(n, tm)

    args = (
        _pad2d(z, n_pad, ghp),
        _pad2d(noise, n_pad, ghp),
        _pad2d(p["gen_w1"], ghp, f1p),
        _pad2d(p["gen_b1"], 1, f1p),
        _pad2d(p["gen_w2"], f1p, f2p),
        _pad2d(p["gen_b2"], 1, f2p),
        _pad2d(p["gen_w3"], f2p, genp),
        _pad2d(p["gen_b3"], 1, genp),
    )
    out = pl.pallas_call(
        _gen_kernel,
        out_shape=jax.ShapeDtypeStruct((n_pad, genp), jnp.float32),
        grid=(n_pad // tm,),
        in_specs=[
            pl.BlockSpec((tm, ghp), lambda i: (i, 0)),
            pl.BlockSpec((tm, ghp), lambda i: (i, 0)),
            pl.BlockSpec((ghp, f1p), lambda i: (0, 0)),
            pl.BlockSpec((1, f1p), lambda i: (0, 0)),
            pl.BlockSpec((f1p, f2p), lambda i: (0, 0)),
            pl.BlockSpec((1, f2p), lambda i: (0, 0)),
            pl.BlockSpec((f2p, genp), lambda i: (0, 0)),
            pl.BlockSpec((1, genp), lambda i: (0, 0)),
        ],
        out_specs=pl.BlockSpec((tm, genp), lambda i: (i, 0)),
        compiler_params=_COMPILER_PARAMS_1D,
    )(*args)
    return out[:n, :gen_dim]


# --------------------------------------------------------------------------
# Plain-JAX glue: dense normalized adjacencies + MendGraph bookkeeping.
# --------------------------------------------------------------------------
def _normalize_rows(a):
    deg = jnp.sum(a, axis=1, keepdims=True)
    return a * jnp.where(deg > 0.0, 1.0 / deg, 0.0)   # scatter-mean: 0 if isolated


def build_norm_adj(edge_index, n):
    a = jnp.zeros((n, n), jnp.float32).at[edge_index[1], edge_index[0]].add(1.0)
    return _normalize_rows(a)


def build_mended_adj_left(edge_index, degree, n, num_pred):
    """Left (m, n) block of the normalized mended-graph adjacency.

    New edges follow the PyTorch spec: (source=i, target=n + i*num_pred + j)
    for j < round(degree_i), i.e. generated nodes only RECEIVE messages from
    their originating node, so columns n.. of the full (m, m) adjacency are
    identically zero and never need to be materialized (exact)."""
    m = n * (1 + num_pred)
    a = jnp.zeros((m, n), jnp.float32).at[edge_index[1], edge_index[0]].add(1.0)
    d = jnp.clip(jnp.round(degree[:, 0]).astype(jnp.int32), 0, num_pred)
    jj = jnp.arange(num_pred, dtype=jnp.int32)
    mask = (jj[None, :] < d[:, None]).astype(jnp.float32)            # (n, P)
    rows = n + jnp.arange(n * num_pred, dtype=jnp.int32)             # targets
    cols = jnp.repeat(jnp.arange(n, dtype=jnp.int32), num_pred)      # sources
    a = a.at[rows, cols].add(mask.reshape(-1))
    return _normalize_rows(a)


# --------------------------------------------------------------------------
# Full FedSage_Plus forward.
# --------------------------------------------------------------------------
def fedsage_plus_forward(params, x, edge_index, noise, num_pred):
    n, f = x.shape

    # --- encoder: SAGE_Net (in_channels -> hidden -> gen_hidden) ------------
    a = build_norm_adj(edge_index, n)
    h = sage_conv(a, x, *params["enc1"], apply_relu=True)
    z = sage_conv(a, h, *params["enc2"], apply_relu=False)

    # --- NumPredictor: relu(z @ Wreg + breg)  (lane-dense padded to 128) ----
    degree = matmul_act(z, params["reg_w"], bias=params["reg_b"],
                        activation="relu")

    # --- FeatGenerator -------------------------------------------------------
    gen_feat = feat_generator(z, noise, params)

    # --- MendGraph -----------------------------------------------------------
    fill_feats = jnp.concatenate([x, gen_feat.reshape(-1, f)], axis=0)
    a_mend_left = build_mended_adj_left(edge_index, degree, n, num_pred)

    # --- classifier: SAGE_Net (in_channels -> hidden -> out_channels) -------
    # Layer 1 over all m mended nodes.  Since generated-node columns of the
    # mended adjacency are zero, the neighbor projection only needs x (n rows).
    h2 = sage_conv(a_mend_left, x, *params["cls1"], x_dst=fill_feats,
                   apply_relu=True)
    # Layer 2: only the first n rows are returned, and rows :n of the mended
    # adjacency equal the original normalized adjacency (generated nodes never
    # send messages), so aggregating h2[:n] with `a` is exact.
    nc = sage_conv(a, h2[:n], *params["cls2"], apply_relu=False)

    return degree, gen_feat, nc


# --------------------------------------------------------------------------
# Deterministic parameter initialization (shapes follow the PyTorch module).
# --------------------------------------------------------------------------
def init_params(key, in_ch, hidden, gen_hidden, out_ch, num_pred):
    ks = list(jax.random.split(key, 24))

    def lin(k, fan_in, fan_out):
        return (jax.random.normal(k, (fan_in, fan_out), jnp.float32)
                / jnp.sqrt(jnp.float32(fan_in)))

    def bias(k, fan_out):
        return jax.random.normal(k, (1, fan_out), jnp.float32) * 0.01

    def sage(k0, k1, k2, fi, fo):
        # (W_l^T, W_r^T, bias) — weights pre-transposed for x @ W
        return (lin(k0, fi, fo), lin(k1, fi, fo), bias(k2, fo))

    p = {}
    p["enc1"] = sage(ks[0], ks[1], ks[2], in_ch, hidden)
    p["enc2"] = sage(ks[3], ks[4], ks[5], hidden, gen_hidden)
    p["cls1"] = sage(ks[6], ks[7], ks[8], in_ch, hidden)
    p["cls2"] = sage(ks[9], ks[10], ks[11], hidden, out_ch)
    # NumPredictor: Linear(gen_hidden, 1)
    p["reg_w"] = lin(ks[12], gen_hidden, 1)
    p["reg_b"] = bias(ks[13], 1)
    # FeatGenerator: fc1 (gen_hidden->256), fc2 (256->2048),
    #                fc_flat (2048 -> num_pred * in_ch)
    p["gen_w1"] = lin(ks[14], gen_hidden, 256)
    p["gen_b1"] = bias(ks[15], 256)
    p["gen_w2"] = lin(ks[16], 256, 2048)
    p["gen_b2"] = bias(ks[17], 2048)
    p["gen_w3"] = lin(ks[18], 2048, num_pred * in_ch)
    p["gen_b3"] = bias(ks[19], num_pred * in_ch)
    return p


if __name__ == "__main__":
    # small deterministic problem
    NUM_NODES = 16
    IN_CH = 16
    HIDDEN = 32
    GEN_HIDDEN = 32
    OUT_CH = 8
    NUM_PRED = 3

    root = jax.random.PRNGKey(0)
    k_param, k_x, k_noise = jax.random.split(root, 3)

    params = init_params(k_param, IN_CH, HIDDEN, GEN_HIDDEN, OUT_CH, NUM_PRED)

    x = jax.random.normal(k_x, (NUM_NODES, IN_CH), jnp.float32)
    # bidirectional ring graph
    src = jnp.arange(NUM_NODES, dtype=jnp.int32)
    dst = (src + 1) % NUM_NODES
    edge_index = jnp.concatenate(
        [jnp.stack([src, dst], axis=0), jnp.stack([dst, src], axis=0)], axis=1)
    # Sampling() noise for the encoder output (num_nodes, gen_hidden)
    noise = jax.random.normal(k_noise, (NUM_NODES, GEN_HIDDEN), jnp.float32)

    fwd = jax.jit(functools.partial(fedsage_plus_forward, num_pred=NUM_PRED))
    degree, gen_feat, nc_pred = fwd(params, x, edge_index, noise)
    jax.block_until_ready((degree, gen_feat, nc_pred))

    assert degree.shape == (NUM_NODES, 1)
    assert gen_feat.shape == (NUM_NODES, NUM_PRED * IN_CH)
    assert nc_pred.shape == (NUM_NODES, OUT_CH)
    print("KERNEL_OK")
</pallas_src>

<mosaic_0001>
module attributes {stable_mosaic.version = 11 : i64} {
  func.func @_matmul_kernel(%arg0: i32, %arg1: i32, %arg2: i32, %arg3: memref<16x128xf32, #tpu.memory_space<vmem>>, %arg4: memref<128x128xf32, #tpu.memory_space<vmem>>, %arg5: memref<1x128xf32, #tpu.memory_space<vmem>>, %arg6: memref<16x128xf32, #tpu.memory_space<vmem>>, %arg7: memref<16x128xf32, #tpu.memory_space<vmem>>) attributes {dimension_semantics = [#tpu.dimension_semantics<parallel>, #tpu.dimension_semantics<parallel>, #tpu.dimension_semantics<arbitrary>], iteration_bounds = array<i64: 1, 1, 1>, scalar_prefetch = 0 : i64, scratch_operands = 1 : i64, tpu.core_type = #tpu.core_type<tc>, window_params = [{transform_indices = @transform_0, window_bounds = array<i64: 16, 128>}, {transform_indices = @transform_1, window_bounds = array<i64: 128, 128>}, {transform_indices = @transform_2, window_bounds = array<i64: 1, 128>}, {transform_indices = @transform_3, window_bounds = array<i64: 16, 128>}]} {
    %c0_i32 = arith.constant 0 : i32
    %0 = arith.cmpi eq, %arg2, %c0_i32 : i32
    %1 = arith.extui %0 : i1 to i32
    %c0_i32_0 = arith.constant 0 : i32
    %2 = arith.cmpi ne, %1, %c0_i32_0 : i32
    scf.if %2 {
      %cst_10 = arith.constant 0.000000e+00 : f32
      %12 = vector.broadcast %cst_10 : f32 to vector<16x128xf32>
      %c0_11 = arith.constant 0 : index
      %c0_12 = arith.constant 0 : index
      %13 = vector.load %arg7[%c0_11, %c0_12] : memref<16x128xf32, #tpu.memory_space<vmem>>, vector<16x128xf32>
      tpu.vector_store %arg7[%c0_11, %c0_12], %12 {strides = array<i32>} : memref<16x128xf32, #tpu.memory_space<vmem>>, vector<16x128xf32>,
    } else {
    }
    %c0 = arith.constant 0 : index
    %c0_1 = arith.constant 0 : index
    %3 = vector.load %arg7[%c0, %c0_1] : memref<16x128xf32, #tpu.memory_space<vmem>>, vector<16x128xf32>
    %c0_2 = arith.constant 0 : index
    %c0_3 = arith.constant 0 : index
    %4 = vector.load %arg3[%c0_2, %c0_3] : memref<16x128xf32, #tpu.memory_space<vmem>>, vector<16x128xf32>
    %c0_4 = arith.constant 0 : index
    %c0_5 = arith.constant 0 : index
    %5 = vector.load %arg4[%c0_4, %c0_5] : memref<128x128xf32, #tpu.memory_space<vmem>>, vector<128x128xf32>
    %cst = arith.constant dense<0.000000e+00> : vector<16x128xf32>
    %6 = tpu.matmul %4, %5, %cst {dimension_numbers = #tpu.dot_dimension_numbers<[1], [0], [0], [1], [0, 0, 1, 1], [], []>} : vector<16x128xf32>, vector<128x128xf32>, vector<16x128xf32> -> vector<16x128xf32>
    %7 = arith.addf %3, %6 : vector<16x128xf32>
    %c0_6 = arith.constant 0 : index
    %c0_7 = arith.constant 0 : index
    %8 = vector.load %arg7[%c0_6, %c0_7] : memref<16x128xf32, #tpu.memory_space<vmem>>, vector<16x128xf32>
    tpu.vector_store %arg7[%c0_6, %c0_7], %7 {strides = array<i32>} : memref<16x128xf32, #tpu.memory_space<vmem>>, vector<16x128xf32>,
    %c0_i32_8 = arith.constant 0 : i32
    %9 = arith.cmpi eq, %arg2, %c0_i32_8 : i32
    %10 = arith.extui %9 : i1 to i32
    %c0_i32_9 = arith.constant 0 : i32
    %11 = arith.cmpi ne, %10, %c0_i32_9 : i32
    scf.if %11 {
      %c0_10 = arith.constant 0 : index
      %c0_11 = arith.constant 0 : index
      %12 = vector.load %arg7[%c0_10, %c0_11] : memref<16x128xf32, #tpu.memory_space<vmem>>, vector<16x128xf32>
      %c0_12 = arith.constant 0 : index
      %c0_13 = arith.constant 0 : index
      %13 = vector.load %arg5[%c0_12, %c0_13] : memref<1x128xf32, #tpu.memory_space<vmem>>, vector<1x128xf32>
      %14 = vector.broadcast %13 : vector<1x128xf32> to vector<16x128xf32>
      %15 = arith.addf %12, %14 : vector<16x128xf32>
      %c0_14 = arith.constant 0 : index
      %c0_15 = arith.constant 0 : index
      %16 = vector.load %arg6[%c0_14, %c0_15] : memref<16x128xf32, #tpu.memory_space<vmem>>, vector<16x128xf32>
      tpu.vector_store %arg6[%c0_14, %c0_15], %15 {strides = array<i32>} : memref<16x128xf32, #tpu.memory_space<vmem>>, vector<16x128xf32>,
    } else {
    }
    return
  }
  func.func @transform_0(%arg0: i32, %arg1: i32, %arg2: i32) -> (i32, i32) {
    %c0_i32 = arith.constant 0 : i32
    return %arg0, %arg2 : i32, i32
  }
  func.func @transform_1(%arg0: i32, %arg1: i32, %arg2: i32) -> (i32, i32) {
    %c0_i32 = arith.constant 0 : i32
    return %arg2, %arg1 : i32, i32
  }
  func.func @transform_2(%arg0: i32, %arg1: i32, %arg2: i32) -> (i32, i32) {
    %c0_i32 = arith.constant 0 : i32
    %c0_i32_0 = arith.constant 0 : i32
    return %c0_i32, %arg1 : i32, i32
  }
  func.func @transform_3(%arg0: i32, %arg1: i32, %arg2: i32) -> (i32, i32) {
    %c0_i32 = arith.constant 0 : i32
    return %arg0, %arg1 : i32, i32
  }
}

module attributes {stable_mosaic.version = 11 : i64} {
  func.func @_matmul_kernel(%arg0: i32, %arg1: i32, %arg2: i32, %arg3: memref<16x128xf32, #tpu.memory_space<vmem>>, %arg4: memref<128x128xf32, #tpu.memory_space<vmem>>, %arg5: memref<16x128xf32, #tpu.memory_space<vmem>>, %arg6: memref<16x128xf32, #tpu.memory_space<vmem>>) attributes {dimension_semantics = [#tpu.dimension_semantics<parallel>, #tpu.dimension_semantics<parallel>, #tpu.dimension_semantics<arbitrary>], iteration_bounds = array<i64: 1, 1, 1>, scalar_prefetch = 0 : i64, scratch_operands = 1 : i64, tpu.core_type = #tpu.core_type<tc>, window_params = [{transform_indices = @transform_0, window_bounds = array<i64: 16, 128>}, {transform_indices = @transform_1, window_bounds = array<i64: 128, 128>}, {transform_indices = @transform_2, window_bounds = array<i64: 16, 128>}]} {
    %c0_i32 = arith.constant 0 : i32
    %0 = arith.cmpi eq, %arg2, %c0_i32 : i32
    %1 = arith.extui %0 : i1 to i32
    %c0_i32_0 = arith.constant 0 : i32
    %2 = arith.cmpi ne, %1, %c0_i32_0 : i32
    scf.if %2 {
      %cst_10 = arith.constant 0.000000e+00 : f32
      %12 = vector.broadcast %cst_10 : f32 to vector<16x128xf32>
      %c0_11 = arith.constant 0 : index
      %c0_12 = arith.constant 0 : index
      %13 = vector.load %arg6[%c0_11, %c0_12] : memref<16x128xf32, #tpu.memory_space<vmem>>, vector<16x128xf32>
      tpu.vector_store %arg6[%c0_11, %c0_12], %12 {strides = array<i32>} : memref<16x128xf32, #tpu.memory_space<vmem>>, vector<16x128xf32>,
    } else {
    }
    %c0 = arith.constant 0 : index
    %c0_1 = arith.constant 0 : index
    %3 = vector.load %arg6[%c0, %c0_1] : memref<16x128xf32, #tpu.memory_space<vmem>>, vector<16x128xf32>
    %c0_2 = arith.constant 0 : index
    %c0_3 = arith.constant 0 : index
    %4 = vector.load %arg3[%c0_2, %c0_3] : memref<16x128xf32, #tpu.memory_space<vmem>>, vector<16x128xf32>
    %c0_4 = arith.constant 0 : index
    %c0_5 = arith.constant 0 : index
    %5 = vector.load %arg4[%c0_4, %c0_5] : memref<128x128xf32, #tpu.memory_space<vmem>>, vector<128x128xf32>
    %cst = arith.constant dense<0.000000e+00> : vector<16x128xf32>
    %6 = tpu.matmul %4, %5, %cst {dimension_numbers = #tpu.dot_dimension_numbers<[1], [0], [0], [1], [0, 0, 1, 1], [], []>} : vector<16x128xf32>, vector<128x128xf32>, vector<16x128xf32> -> vector<16x128xf32>
    %7 = arith.addf %3, %6 : vector<16x128xf32>
    %c0_6 = arith.constant 0 : index
    %c0_7 = arith.constant 0 : index
    %8 = vector.load %arg6[%c0_6, %c0_7] : memref<16x128xf32, #tpu.memory_space<vmem>>, vector<16x128xf32>
    tpu.vector_store %arg6[%c0_6, %c0_7], %7 {strides = array<i32>} : memref<16x128xf32, #tpu.memory_space<vmem>>, vector<16x128xf32>,
    %c0_i32_8 = arith.constant 0 : i32
    %9 = arith.cmpi eq, %arg2, %c0_i32_8 : i32
    %10 = arith.extui %9 : i1 to i32
    %c0_i32_9 = arith.constant 0 : i32
    %11 = arith.cmpi ne, %10, %c0_i32_9 : i32
    scf.if %11 {
      %c0_10 = arith.constant 0 : index
      %c0_11 = arith.constant 0 : index
      %12 = vector.load %arg6[%c0_10, %c0_11] : memref<16x128xf32, #tpu.memory_space<vmem>>, vector<16x128xf32>
      %c0_12 = arith.constant 0 : index
      %c0_13 = arith.constant 0 : index
      %13 = vector.load %arg5[%c0_12, %c0_13] : memref<16x128xf32, #tpu.memory_space<vmem>>, vector<16x128xf32>
      tpu.vector_store %arg5[%c0_12, %c0_13], %12 {strides = array<i32>} : memref<16x128xf32, #tpu.memory_space<vmem>>, vector<16x128xf32>,
    } else {
    }
    return
  }
  func.func @transform_0(%arg0: i32, %arg1: i32, %arg2: i32) -> (i32, i32) {
    %c0_i32 = arith.constant 0 : i32
    return %arg0, %arg2 : i32, i32
  }
  func.func @transform_1(%arg0: i32, %arg1: i32, %arg2: i32) -> (i32, i32) {
    %c0_i32 = arith.constant 0 : i32
    return %arg2, %arg1 : i32, i32
  }
  func.func @transform_2(%arg0: i32, %arg1: i32, %arg2: i32) -> (i32, i32) {
    %c0_i32 = arith.constant 0 : i32
    return %arg0, %arg1 : i32, i32
  }
}

module attributes {stable_mosaic.version = 11 : i64} {
  func.func @_matmul_kernel(%arg0: i32, %arg1: i32, %arg2: i32, %arg3: memref<16x128xbf16, #tpu.memory_space<vmem>>, %arg4: memref<128x128xbf16, #tpu.memory_space<vmem>>, %arg5: memref<16x128xf32, #tpu.memory_space<vmem>>, %arg6: memref<16x128xf32, #tpu.memory_space<vmem>>, %arg7: memref<16x128xf32, #tpu.memory_space<vmem>>) attributes {dimension_semantics = [#tpu.dimension_semantics<parallel>, #tpu.dimension_semantics<parallel>, #tpu.dimension_semantics<arbitrary>], iteration_bounds = array<i64: 1, 1, 1>, scalar_prefetch = 0 : i64, scratch_operands = 1 : i64, tpu.core_type = #tpu.core_type<tc>, window_params = [{transform_indices = @transform_0, window_bounds = array<i64: 16, 128>}, {transform_indices = @transform_1, window_bounds = array<i64: 128, 128>}, {transform_indices = @transform_2, window_bounds = array<i64: 16, 128>}, {transform_indices = @transform_3, window_bounds = array<i64: 16, 128>}]} {
    %c0_i32 = arith.constant 0 : i32
    %0 = arith.cmpi eq, %arg2, %c0_i32 : i32
    %1 = arith.extui %0 : i1 to i32
    %c0_i32_0 = arith.constant 0 : i32
    %2 = arith.cmpi ne, %1, %c0_i32_0 : i32
    scf.if %2 {
      %cst_10 = arith.constant 0.000000e+00 : f32
      %12 = vector.broadcast %cst_10 : f32 to vector<16x128xf32>
      %c0_11 = arith.constant 0 : index
      %c0_12 = arith.constant 0 : index
      %13 = vector.load %arg7[%c0_11, %c0_12] : memref<16x128xf32, #tpu.memory_space<vmem>>, vector<16x128xf32>
      tpu.vector_store %arg7[%c0_11, %c0_12], %12 {strides = array<i32>} : memref<16x128xf32, #tpu.memory_space<vmem>>, vector<16x128xf32>,
    } else {
    }
    %c0 = arith.constant 0 : index
    %c0_1 = arith.constant 0 : index
    %3 = vector.load %arg7[%c0, %c0_1] : memref<16x128xf32, #tpu.memory_space<vmem>>, vector<16x128xf32>
    %c0_2 = arith.constant 0 : index
    %c0_3 = arith.constant 0 : index
    %4 = vector.load %arg3[%c0_2, %c0_3] : memref<16x128xbf16, #tpu.memory_space<vmem>>, vector<16x128xbf16>
    %c0_4 = arith.constant 0 : index
    %c0_5 = arith.constant 0 : index
    %5 = vector.load %arg4[%c0_4, %c0_5] : memref<128x128xbf16, #tpu.memory_space<vmem>>, vector<128x128xbf16>
    %cst = arith.constant dense<0.000000e+00> : vector<16x128xf32>
    %6 = tpu.matmul %4, %5, %cst {dimension_numbers = #tpu.dot_dimension_numbers<[1], [0], [0], [1], [0, 0, 1, 1], [], []>} : vector<16x128xbf16>, vector<128x128xbf16>, vector<16x128xf32> -> vector<16x128xf32>
    %7 = arith.addf %3, %6 : vector<16x128xf32>
    %c0_6 = arith.constant 0 : index
    %c0_7 = arith.constant 0 : index
    %8 = vector.load %arg7[%c0_6, %c0_7] : memref<16x128xf32, #tpu.memory_space<vmem>>, vector<16x128xf32>
    tpu.vector_store %arg7[%c0_6, %c0_7], %7 {strides = array<i32>} : memref<16x128xf32, #tpu.memory_space<vmem>>, vector<16x128xf32>,
    %c0_i32_8 = arith.constant 0 : i32
    %9 = arith.cmpi eq, %arg2, %c0_i32_8 : i32
    %10 = arith.extui %9 : i1 to i32
    %c0_i32_9 = arith.constant 0 : i32
    %11 = arith.cmpi ne, %10, %c0_i32_9 : i32
    scf.if %11 {
      %c0_10 = arith.constant 0 : index
      %c0_11 = arith.constant 0 : index
      %12 = vector.load %arg7[%c0_10, %c0_11] : memref<16x128xf32, #tpu.memory_space<vmem>>, vector<16x128xf32>
      %c0_12 = arith.constant 0 : index
      %c0_13 = arith.constant 0 : index
      %13 = vector.load %arg5[%c0_12, %c0_13] : memref<16x128xf32, #tpu.memory_space<vmem>>, vector<16x128xf32>
      %14 = arith.addf %12, %13 : vector<16x128xf32>
      %cst_14 = arith.constant 0.000000e+00 : f32
      %15 = vector.broadcast %cst_14 : f32 to vector<16x128xf32>
      %16 = arith.maximumf %14, %15 : vector<16x128xf32>
      %c0_15 = arith.constant 0 : index
      %c0_16 = arith.constant 0 : index
      %17 = vector.load %arg6[%c0_15, %c0_16] : memref<16x128xf32, #tpu.memory_space<vmem>>, vector<16x128xf32>
      tpu.vector_store %arg6[%c0_15, %c0_16], %16 {strides = array<i32>} : memref<16x128xf32, #tpu.memory_space<vmem>>, vector<16x128xf32>,
    } else {
    }
    return
  }
  func.func @transform_0(%arg0: i32, %arg1: i32, %arg2: i32) -> (i32, i32) {
    %c0_i32 = arith.constant 0 : i32
    return %arg0, %arg2 : i32, i32
  }
  func.func @transform_1(%arg0: i32, %arg1: i32, %arg2: i32) -> (i32, i32) {
    %c0_i32 = arith.constant 0 : i32
    return %arg2, %arg1 : i32, i32
  }
  func.func @transform_2(%arg0: i32, %arg1: i32, %arg2: i32) -> (i32, i32) {
    %c0_i32 = arith.constant 0 : i32
    return %arg0, %arg1 : i32, i32
  }
  func.func @transform_3(%arg0: i32, %arg1: i32, %arg2: i32) -> (i32, i32) {
    %c0_i32 = arith.constant 0 : i32
    return %arg0, %arg1 : i32, i32
  }
}

module attributes {stable_mosaic.version = 11 : i64} {
  func.func @_matmul_kernel(%arg0: i32, %arg1: i32, %arg2: i32, %arg3: memref<16x128xbf16, #tpu.memory_space<vmem>>, %arg4: memref<128x128xbf16, #tpu.memory_space<vmem>>, %arg5: memref<16x128xf32, #tpu.memory_space<vmem>>, %arg6: memref<16x128xf32, #tpu.memory_space<vmem>>, %arg7: memref<16x128xf32, #tpu.memory_space<vmem>>) attributes {dimension_semantics = [#tpu.dimension_semantics<parallel>, #tpu.dimension_semantics<parallel>, #tpu.dimension_semantics<arbitrary>], iteration_bounds = array<i64: 1, 1, 1>, scalar_prefetch = 0 : i64, scratch_operands = 1 : i64, tpu.core_type = #tpu.core_type<tc>, window_params = [{transform_indices = @transform_0, window_bounds = array<i64: 16, 128>}, {transform_indices = @transform_1, window_bounds = array<i64: 128, 128>}, {transform_indices = @transform_2, window_bounds = array<i64: 16, 128>}, {transform_indices = @transform_3, window_bounds = array<i64: 16, 128>}]} {
    %c0_i32 = arith.constant 0 : i32
    %0 = arith.cmpi eq, %arg2, %c0_i32 : i32
    %1 = arith.extui %0 : i1 to i32
    %c0_i32_0 = arith.constant 0 : i32
    %2 = arith.cmpi ne, %1, %c0_i32_0 : i32
    scf.if %2 {
      %cst_10 = arith.constant 0.000000e+00 : f32
      %12 = vector.broadcast %cst_10 : f32 to vector<16x128xf32>
      %c0_11 = arith.constant 0 : index
      %c0_12 = arith.constant 0 : index
      %13 = vector.load %arg7[%c0_11, %c0_12] : memref<16x128xf32, #tpu.memory_space<vmem>>, vector<16x128xf32>
      tpu.vector_store %arg7[%c0_11, %c0_12], %12 {strides = array<i32>} : memref<16x128xf32, #tpu.memory_space<vmem>>, vector<16x128xf32>,
    } else {
    }
    %c0 = arith.constant 0 : index
    %c0_1 = arith.constant 0 : index
    %3 = vector.load %arg7[%c0, %c0_1] : memref<16x128xf32, #tpu.memory_space<vmem>>, vector<16x128xf32>
    %c0_2 = arith.constant 0 : index
    %c0_3 = arith.constant 0 : index
    %4 = vector.load %arg3[%c0_2, %c0_3] : memref<16x128xbf16, #tpu.memory_space<vmem>>, vector<16x128xbf16>
    %c0_4 = arith.constant 0 : index
    %c0_5 = arith.constant 0 : index
    %5 = vector.load %arg4[%c0_4, %c0_5] : memref<128x128xbf16, #tpu.memory_space<vmem>>, vector<128x128xbf16>
    %cst = arith.constant dense<0.000000e+00> : vector<16x128xf32>
    %6 = tpu.matmul %4, %5, %cst {dimension_numbers = #tpu.dot_dimension_numbers<[1], [0], [0], [1], [0, 0, 1, 1], [], []>} : vector<16x128xbf16>, vector<128x128xbf16>, vector<16x128xf32> -> vector<16x128xf32>
    %7 = arith.addf %3, %6 : vector<16x128xf32>
    %c0_6 = arith.constant 0 : index
    %c0_7 = arith.constant 0 : index
    %8 = vector.load %arg7[%c0_6, %c0_7] : memref<16x128xf32, #tpu.memory_space<vmem>>, vector<16x128xf32>
    tpu.vector_store %arg7[%c0_6, %c0_7], %7 {strides = array<i32>} : memref<16x128xf32, #tpu.memory_space<vmem>>, vector<16x128xf32>,
    %c0_i32_8 = arith.constant 0 : i32
    %9 = arith.cmpi eq, %arg2, %c0_i32_8 : i32
    %10 = arith.extui %9 : i1 to i32
    %c0_i32_9 = arith.constant 0 : i32
    %11 = arith.cmpi ne, %10, %c0_i32_9 : i32
    scf.if %11 {
      %c0_10 = arith.constant 0 : index
      %c0_11 = arith.constant 0 : index
      %12 = vector.load %arg7[%c0_10, %c0_11] : memref<16x128xf32, #tpu.memory_space<vmem>>, vector<16x128xf32>
      %c0_12 = arith.constant 0 : index
      %c0_13 = arith.constant 0 : index
      %13 = vector.load %arg5[%c0_12, %c0_13] : memref<16x128xf32, #tpu.memory_space<vmem>>, vector<16x128xf32>
      %14 = arith.addf %12, %13 : vector<16x128xf32>
      %c0_14 = arith.constant 0 : index
      %c0_15 = arith.constant 0 : index
      %15 = vector.load %arg6[%c0_14, %c0_15] : memref<16x128xf32, #tpu.memory_space<vmem>>, vector<16x128xf32>
      tpu.vector_store %arg6[%c0_14, %c0_15], %14 {strides = array<i32>} : memref<16x128xf32, #tpu.memory_space<vmem>>, vector<16x128xf32>,
    } else {
    }
    return
  }
  func.func @transform_0(%arg0: i32, %arg1: i32, %arg2: i32) -> (i32, i32) {
    %c0_i32 = arith.constant 0 : i32
    return %arg0, %arg2 : i32, i32
  }
  func.func @transform_1(%arg0: i32, %arg1: i32, %arg2: i32) -> (i32, i32) {
    %c0_i32 = arith.constant 0 : i32
    return %arg2, %arg1 : i32, i32
  }
  func.func @transform_2(%arg0: i32, %arg1: i32, %arg2: i32) -> (i32, i32) {
    %c0_i32 = arith.constant 0 : i32
    return %arg0, %arg1 : i32, i32
  }
  func.func @transform_3(%arg0: i32, %arg1: i32, %arg2: i32) -> (i32, i32) {
    %c0_i32 = arith.constant 0 : i32
    return %arg0, %arg1 : i32, i32
  }
}

module attributes {stable_mosaic.version = 11 : i64} {
  func.func @_matmul_kernel(%arg0: i32, %arg1: i32, %arg2: i32, %arg3: memref<16x128xf32, #tpu.memory_space<vmem>>, %arg4: memref<128x128xf32, #tpu.memory_space<vmem>>, %arg5: memref<1x128xf32, #tpu.memory_space<vmem>>, %arg6: memref<16x128xf32, #tpu.memory_space<vmem>>, %arg7: memref<16x128xf32, #tpu.memory_space<vmem>>) attributes {dimension_semantics = [#tpu.dimension_semantics<parallel>, #tpu.dimension_semantics<parallel>, #tpu.dimension_semantics<arbitrary>], iteration_bounds = array<i64: 1, 1, 1>, scalar_prefetch = 0 : i64, scratch_operands = 1 : i64, tpu.core_type = #tpu.core_type<tc>, window_params = [{transform_indices = @transform_0, window_bounds = array<i64: 16, 128>}, {transform_indices = @transform_1, window_bounds = array<i64: 128, 128>}, {transform_indices = @transform_2, window_bounds = array<i64: 1, 128>}, {transform_indices = @transform_3, window_bounds = array<i64: 16, 128>}]} {
    %c0_i32 = arith.constant 0 : i32
    %0 = arith.cmpi eq, %arg2, %c0_i32 : i32
    %1 = arith.extui %0 : i1 to i32
    %c0_i32_0 = arith.constant 0 : i32
    %2 = arith.cmpi ne, %1, %c0_i32_0 : i32
    scf.if %2 {
      %cst_10 = arith.constant 0.000000e+00 : f32
      %12 = vector.broadcast %cst_10 : f32 to vector<16x128xf32>
      %c0_11 = arith.constant 0 : index
      %c0_12 = arith.constant 0 : index
      %13 = vector.load %arg7[%c0_11, %c0_12] : memref<16x128xf32, #tpu.memory_space<vmem>>, vector<16x128xf32>
      tpu.vector_store %arg7[%c0_11, %c0_12], %12 {strides = array<i32>} : memref<16x128xf32, #tpu.memory_space<vmem>>, vector<16x128xf32>,
    } else {
    }
    %c0 = arith.constant 0 : index
    %c0_1 = arith.constant 0 : index
    %3 = vector.load %arg7[%c0, %c0_1] : memref<16x128xf32, #tpu.memory_space<vmem>>, vector<16x128xf32>
    %c0_2 = arith.constant 0 : index
    %c0_3 = arith.constant 0 : index
    %4 = vector.load %arg3[%c0_2, %c0_3] : memref<16x128xf32, #tpu.memory_space<vmem>>, vector<16x128xf32>
    %c0_4 = arith.constant 0 : index
    %c0_5 = arith.constant 0 : index
    %5 = vector.load %arg4[%c0_4, %c0_5] : memref<128x128xf32, #tpu.memory_space<vmem>>, vector<128x128xf32>
    %cst = arith.constant dense<0.000000e+00> : vector<16x128xf32>
    %6 = tpu.matmul %4, %5, %cst {dimension_numbers = #tpu.dot_dimension_numbers<[1], [0], [0], [1], [0, 0, 1, 1], [], []>} : vector<16x128xf32>, vector<128x128xf32>, vector<16x128xf32> -> vector<16x128xf32>
    %7 = arith.addf %3, %6 : vector<16x128xf32>
    %c0_6 = arith.constant 0 : index
    %c0_7 = arith.constant 0 : index
    %8 = vector.load %arg7[%c0_6, %c0_7] : memref<16x128xf32, #tpu.memory_space<vmem>>, vector<16x128xf32>
    tpu.vector_store %arg7[%c0_6, %c0_7], %7 {strides = array<i32>} : memref<16x128xf32, #tpu.memory_space<vmem>>, vector<16x128xf32>,
    %c0_i32_8 = arith.constant 0 : i32
    %9 = arith.cmpi eq, %arg2, %c0_i32_8 : i32
    %10 = arith.extui %9 : i1 to i32
    %c0_i32_9 = arith.constant 0 : i32
    %11 = arith.cmpi ne, %10, %c0_i32_9 : i32
    scf.if %11 {
      %c0_10 = arith.constant 0 : index
      %c0_11 = arith.constant 0 : index
      %12 = vector.load %arg7[%c0_10, %c0_11] : memref<16x128xf32, #tpu.memory_space<vmem>>, vector<16x128xf32>
      %c0_12 = arith.constant 0 : index
      %c0_13 = arith.constant 0 : index
      %13 = vector.load %arg5[%c0_12, %c0_13] : memref<1x128xf32, #tpu.memory_space<vmem>>, vector<1x128xf32>
      %14 = vector.broadcast %13 : vector<1x128xf32> to vector<16x128xf32>
      %15 = arith.addf %12, %14 : vector<16x128xf32>
      %cst_14 = arith.constant 0.000000e+00 : f32
      %16 = vector.broadcast %cst_14 : f32 to vector<16x128xf32>
      %17 = arith.maximumf %15, %16 : vector<16x128xf32>
      %c0_15 = arith.constant 0 : index
      %c0_16 = arith.constant 0 : index
      %18 = vector.load %arg6[%c0_15, %c0_16] : memref<16x128xf32, #tpu.memory_space<vmem>>, vector<16x128xf32>
      tpu.vector_store %arg6[%c0_15, %c0_16], %17 {strides = array<i32>} : memref<16x128xf32, #tpu.memory_space<vmem>>, vector<16x128xf32>,
    } else {
    }
    return
  }
  func.func @transform_0(%arg0: i32, %arg1: i32, %arg2: i32) -> (i32, i32) {
    %c0_i32 = arith.constant 0 : i32
    return %arg0, %arg2 : i32, i32
  }
  func.func @transform_1(%arg0: i32, %arg1: i32, %arg2: i32) -> (i32, i32) {
    %c0_i32 = arith.constant 0 : i32
    return %arg2, %arg1 : i32, i32
  }
  func.func @transform_2(%arg0: i32, %arg1: i32, %arg2: i32) -> (i32, i32) {
    %c0_i32 = arith.constant 0 : i32
    %c0_i32_0 = arith.constant 0 : i32
    return %c0_i32, %arg1 : i32, i32
  }
  func.func @transform_3(%arg0: i32, %arg1: i32, %arg2: i32) -> (i32, i32) {
    %c0_i32 = arith.constant 0 : i32
    return %arg0, %arg1 : i32, i32
  }
}

module attributes {stable_mosaic.version = 11 : i64} {
  func.func @_gen_kernel(%arg0: i32, %arg1: memref<16x128xf32, #tpu.memory_space<vmem>>, %arg2: memref<16x128xf32, #tpu.memory_space<vmem>>, %arg3: memref<128x256xf32, #tpu.memory_space<vmem>>, %arg4: memref<1x256xf32, #tpu.memory_space<vmem>>, %arg5: memref<256x2048xf32, #tpu.memory_space<vmem>>, %arg6: memref<1x2048xf32, #tpu.memory_space<vmem>>, %arg7: memref<2048x128xf32, #tpu.memory_space<vmem>>, %arg8: memref<1x128xf32, #tpu.memory_space<vmem>>, %arg9: memref<16x128xf32, #tpu.memory_space<vmem>>) attributes {dimension_semantics = [#tpu.dimension_semantics<parallel>], iteration_bounds = array<i64: 1>, scalar_prefetch = 0 : i64, scratch_operands = 0 : i64, tpu.core_type = #tpu.core_type<tc>, window_params = [{transform_indices = @transform_0, window_bounds = array<i64: 16, 128>}, {transform_indices = @transform_1, window_bounds = array<i64: 16, 128>}, {pipeline_mode = #tpu.pipeline_mode<synchronous>, transform_indices = @transform_2, window_bounds = array<i64: 128, 256>}, {pipeline_mode = #tpu.pipeline_mode<synchronous>, transform_indices = @transform_3, window_bounds = array<i64: 1, 256>}, {pipeline_mode = #tpu.pipeline_mode<synchronous>, transform_indices = @transform_4, window_bounds = array<i64: 256, 2048>}, {pipeline_mode = #tpu.pipeline_mode<synchronous>, transform_indices = @transform_5, window_bounds = array<i64: 1, 2048>}, {pipeline_mode = #tpu.pipeline_mode<synchronous>, transform_indices = @transform_6, window_bounds = array<i64: 2048, 128>}, {pipeline_mode = #tpu.pipeline_mode<synchronous>, transform_indices = @transform_7, window_bounds = array<i64: 1, 128>}, {transform_indices = @transform_8, window_bounds = array<i64: 16, 128>}]} {
    %c0 = arith.constant 0 : index
    %c0_0 = arith.constant 0 : index
    %0 = vector.load %arg1[%c0, %c0_0] : memref<16x128xf32, #tpu.memory_space<vmem>>, vector<16x128xf32>
    %c0_1 = arith.constant 0 : index
    %c0_2 = arith.constant 0 : index
    %1 = vector.load %arg2[%c0_1, %c0_2] : memref<16x128xf32, #tpu.memory_space<vmem>>, vector<16x128xf32>
    %2 = arith.addf %0, %1 : vector<16x128xf32>
    %c0_3 = arith.constant 0 : index
    %c0_4 = arith.constant 0 : index
    %3 = vector.load %arg3[%c0_3, %c0_4] : memref<128x256xf32, #tpu.memory_space<vmem>>, vector<128x256xf32>
    %cst = arith.constant dense<0.000000e+00> : vector<16x256xf32>
    %4 = tpu.matmul %2, %3, %cst {dimension_numbers = #tpu.dot_dimension_numbers<[1], [0], [0], [1], [0, 0, 1, 1], [], []>} : vector<16x128xf32>, vector<128x256xf32>, vector<16x256xf32> -> vector<16x256xf32>
    %c0_5 = arith.constant 0 : index
    %c0_6 = arith.constant 0 : index
    %5 = vector.load %arg4[%c0_5, %c0_6] : memref<1x256xf32, #tpu.memory_space<vmem>>, vector<1x256xf32>
    %6 = vector.broadcast %5 : vector<1x256xf32> to vector<16x256xf32>
    %7 = arith.addf %4, %6 : vector<16x256xf32>
    %cst_7 = arith.constant 0.000000e+00 : f32
    %8 = vector.broadcast %cst_7 : f32 to vector<16x256xf32>
    %9 = arith.maximumf %7, %8 : vector<16x256xf32>
    %c0_8 = arith.constant 0 : index
    %c0_9 = arith.constant 0 : index
    %10 = vector.load %arg5[%c0_8, %c0_9] : memref<256x2048xf32, #tpu.memory_space<vmem>>, vector<256x2048xf32>
    %cst_10 = arith.constant dense<0.000000e+00> : vector<16x2048xf32>
    %11 = tpu.matmul %9, %10, %cst_10 {dimension_numbers = #tpu.dot_dimension_numbers<[1], [0], [0], [1], [0, 0, 1, 1], [], []>} : vector<16x256xf32>, vector<256x2048xf32>, vector<16x2048xf32> -> vector<16x2048xf32>
    %c0_11 = arith.constant 0 : index
    %c0_12 = arith.constant 0 : index
    %12 = vector.load %arg6[%c0_11, %c0_12] : memref<1x2048xf32, #tpu.memory_space<vmem>>, vector<1x2048xf32>
    %13 = vector.broadcast %12 : vector<1x2048xf32> to vector<16x2048xf32>
    %14 = arith.addf %11, %13 : vector<16x2048xf32>
    %cst_13 = arith.constant 0.000000e+00 : f32
    %15 = vector.broadcast %cst_13 : f32 to vector<16x2048xf32>
    %16 = arith.maximumf %14, %15 : vector<16x2048xf32>
    %c0_14 = arith.constant 0 : index
    %c0_15 = arith.constant 0 : index
    %17 = vector.load %arg7[%c0_14, %c0_15] : memref<2048x128xf32, #tpu.memory_space<vmem>>, vector<2048x128xf32>
    %cst_16 = arith.constant dense<0.000000e+00> : vector<16x128xf32>
    %18 = tpu.matmul %16, %17, %cst_16 {dimension_numbers = #tpu.dot_dimension_numbers<[1], [0], [0], [1], [0, 0, 1, 1], [], []>} : vector<16x2048xf32>, vector<2048x128xf32>, vector<16x128xf32> -> vector<16x128xf32>
    %c0_17 = arith.constant 0 : index
    %c0_18 = arith.constant 0 : index
    %19 = vector.load %arg8[%c0_17, %c0_18] : memref<1x128xf32, #tpu.memory_space<vmem>>, vector<1x128xf32>
    %20 = vector.broadcast %19 : vector<1x128xf32> to vector<16x128xf32>
    %21 = arith.addf %18, %20 : vector<16x128xf32>
    %22 = math.tanh %21 : vector<16x128xf32>
    %c0_19 = arith.constant 0 : index
    %c0_20 = arith.constant 0 : index
    %23 = vector.load %arg9[%c0_19, %c0_20] : memref<16x128xf32, #tpu.memory_space<vmem>>, vector<16x128xf32>
    tpu.vector_store %arg9[%c0_19, %c0_20], %22 {strides = array<i32>} : memref<16x128xf32, #tpu.memory_space<vmem>>, vector<16x128xf32>,
    return
  }
  func.func @transform_0(%arg0: i32) -> (i32, i32) {
    %c0_i32 = arith.constant 0 : i32
    %c0_i32_0 = arith.constant 0 : i32
    return %arg0, %c0_i32 : i32, i32
  }
  func.func @transform_1(%arg0: i32) -> (i32, i32) {
    %c0_i32 = arith.constant 0 : i32
    %c0_i32_0 = arith.constant 0 : i32
    return %arg0, %c0_i32 : i32, i32
  }
  func.func @transform_2(%arg0: i32) -> (i32, i32) {
    %c0_i32 = arith.constant 0 : i32
    %c0_i32_0 = arith.constant 0 : i32
    %c0_i32_1 = arith.constant 0 : i32
    return %c0_i32, %c0_i32_0 : i32, i32
  }
  func.func @transform_3(%arg0: i32) -> (i32, i32) {
    %c0_i32 = arith.constant 0 : i32
    %c0_i32_0 = arith.constant 0 : i32
    %c0_i32_1 = arith.constant 0 : i32
    return %c0_i32, %c0_i32_0 : i32, i32
  }
  func.func @transform_4(%arg0: i32) -> (i32, i32) {
    %c0_i32 = arith.constant 0 : i32
    %c0_i32_0 = arith.constant 0 : i32
    %c0_i32_1 = arith.constant 0 : i32
    return %c0_i32, %c0_i32_0 : i32, i32
  }
  func.func @transform_5(%arg0: i32) -> (i32, i32) {
    %c0_i32 = arith.constant 0 : i32
    %c0_i32_0 = arith.constant 0 : i32
    %c0_i32_1 = arith.constant 0 : i32
    return %c0_i32, %c0_i32_0 : i32, i32
  }
  func.func @transform_6(%arg0: i32) -> (i32, i32) {
    %c0_i32 = arith.constant 0 : i32
    %c0_i32_0 = arith.constant 0 : i32
    %c0_i32_1 = arith.constant 0 : i32
    return %c0_i32, %c0_i32_0 : i32, i32
  }
  func.func @transform_7(%arg0: i32) -> (i32, i32) {
    %c0_i32 = arith.constant 0 : i32
    %c0_i32_0 = arith.constant 0 : i32
    %c0_i32_1 = arith.constant 0 : i32
    return %c0_i32, %c0_i32_0 : i32, i32
  }
  func.func @transform_8(%arg0: i32) -> (i32, i32) {
    %c0_i32 = arith.constant 0 : i32
    %c0_i32_0 = arith.constant 0 : i32
    return %arg0, %c0_i32 : i32, i32
  }
}

module attributes {stable_mosaic.version = 11 : i64} {
  func.func @_matmul_kernel(%arg0: i32, %arg1: i32, %arg2: i32, %arg3: memref<64x128xbf16, #tpu.memory_space<vmem>>, %arg4: memref<128x128xbf16, #tpu.memory_space<vmem>>, %arg5: memref<64x128xf32, #tpu.memory_space<vmem>>, %arg6: memref<64x128xf32, #tpu.memory_space<vmem>>, %arg7: memref<64x128xf32, #tpu.memory_space<vmem>>) attributes {dimension_semantics = [#tpu.dimension_semantics<parallel>, #tpu.dimension_semantics<parallel>, #tpu.dimension_semantics<arbitrary>], iteration_bounds = array<i64: 1, 1, 1>, scalar_prefetch = 0 : i64, scratch_operands = 1 : i64, tpu.core_type = #tpu.core_type<tc>, window_params = [{transform_indices = @transform_0, window_bounds = array<i64: 64, 128>}, {transform_indices = @transform_1, window_bounds = array<i64: 128, 128>}, {transform_indices = @transform_2, window_bounds = array<i64: 64, 128>}, {transform_indices = @transform_3, window_bounds = array<i64: 64, 128>}]} {
    %c0_i32 = arith.constant 0 : i32
    %0 = arith.cmpi eq, %arg2, %c0_i32 : i32
    %1 = arith.extui %0 : i1 to i32
    %c0_i32_0 = arith.constant 0 : i32
    %2 = arith.cmpi ne, %1, %c0_i32_0 : i32
    scf.if %2 {
      %cst_10 = arith.constant 0.000000e+00 : f32
      %12 = vector.broadcast %cst_10 : f32 to vector<64x128xf32>
      %c0_11 = arith.constant 0 : index
      %c0_12 = arith.constant 0 : index
      %13 = vector.load %arg7[%c0_11, %c0_12] : memref<64x128xf32, #tpu.memory_space<vmem>>, vector<64x128xf32>
      tpu.vector_store %arg7[%c0_11, %c0_12], %12 {strides = array<i32>} : memref<64x128xf32, #tpu.memory_space<vmem>>, vector<64x128xf32>,
    } else {
    }
    %c0 = arith.constant 0 : index
    %c0_1 = arith.constant 0 : index
    %3 = vector.load %arg7[%c0, %c0_1] : memref<64x128xf32, #tpu.memory_space<vmem>>, vector<64x128xf32>
    %c0_2 = arith.constant 0 : index
    %c0_3 = arith.constant 0 : index
    %4 = vector.load %arg3[%c0_2, %c0_3] : memref<64x128xbf16, #tpu.memory_space<vmem>>, vector<64x128xbf16>
    %c0_4 = arith.constant 0 : index
    %c0_5 = arith.constant 0 : index
    %5 = vector.load %arg4[%c0_4, %c0_5] : memref<128x128xbf16, #tpu.memory_space<vmem>>, vector<128x128xbf16>
    %cst = arith.constant dense<0.000000e+00> : vector<64x128xf32>
    %6 = tpu.matmul %4, %5, %cst {dimension_numbers = #tpu.dot_dimension_numbers<[1], [0], [0], [1], [0, 0, 1, 1], [], []>} : vector<64x128xbf16>, vector<128x128xbf16>, vector<64x128xf32> -> vector<64x128xf32>
    %7 = arith.addf %3, %6 : vector<64x128xf32>
    %c0_6 = arith.constant 0 : index
    %c0_7 = arith.constant 0 : index
    %8 = vector.load %arg7[%c0_6, %c0_7] : memref<64x128xf32, #tpu.memory_space<vmem>>, vector<64x128xf32>
    tpu.vector_store %arg7[%c0_6, %c0_7], %7 {strides = array<i32>} : memref<64x128xf32, #tpu.memory_space<vmem>>, vector<64x128xf32>,
    %c0_i32_8 = arith.constant 0 : i32
    %9 = arith.cmpi eq, %arg2, %c0_i32_8 : i32
    %10 = arith.extui %9 : i1 to i32
    %c0_i32_9 = arith.constant 0 : i32
    %11 = arith.cmpi ne, %10, %c0_i32_9 : i32
    scf.if %11 {
      %c0_10 = arith.constant 0 : index
      %c0_11 = arith.constant 0 : index
      %12 = vector.load %arg7[%c0_10, %c0_11] : memref<64x128xf32, #tpu.memory_space<vmem>>, vector<64x128xf32>
      %c0_12 = arith.constant 0 : index
      %c0_13 = arith.constant 0 : index
      %13 = vector.load %arg5[%c0_12, %c0_13] : memref<64x128xf32, #tpu.memory_space<vmem>>, vector<64x128xf32>
      %14 = arith.addf %12, %13 : vector<64x128xf32>
      %cst_14 = arith.constant 0.000000e+00 : f32
      %15 = vector.broadcast %cst_14 : f32 to vector<64x128xf32>
      %16 = arith.maximumf %14, %15 : vector<64x128xf32>
      %c0_15 = arith.constant 0 : index
      %c0_16 = arith.constant 0 : index
      %17 = vector.load %arg6[%c0_15, %c0_16] : memref<64x128xf32, #tpu.memory_space<vmem>>, vector<64x128xf32>
      tpu.vector_store %arg6[%c0_15, %c0_16], %16 {strides = array<i32>} : memref<64x128xf32, #tpu.memory_space<vmem>>, vector<64x128xf32>,
    } else {
    }
    return
  }
  func.func @transform_0(%arg0: i32, %arg1: i32, %arg2: i32) -> (i32, i32) {
    %c0_i32 = arith.constant 0 : i32
    return %arg0, %arg2 : i32, i32
  }
  func.func @transform_1(%arg0: i32, %arg1: i32, %arg2: i32) -> (i32, i32) {
    %c0_i32 = arith.constant 0 : i32
    return %arg2, %arg1 : i32, i32
  }
  func.func @transform_2(%arg0: i32, %arg1: i32, %arg2: i32) -> (i32, i32) {
    %c0_i32 = arith.constant 0 : i32
    return %arg0, %arg1 : i32, i32
  }
  func.func @transform_3(%arg0: i32, %arg1: i32, %arg2: i32) -> (i32, i32) {
    %c0_i32 = arith.constant 0 : i32
    return %arg0, %arg1 : i32, i32
  }
}

module attributes {stable_mosaic.version = 11 : i64} {
  func.func @_matmul_kernel(%arg0: i32, %arg1: i32, %arg2: i32, %arg3: memref<64x128xf32, #tpu.memory_space<vmem>>, %arg4: memref<128x128xf32, #tpu.memory_space<vmem>>, %arg5: memref<1x128xf32, #tpu.memory_space<vmem>>, %arg6: memref<64x128xf32, #tpu.memory_space<vmem>>, %arg7: memref<64x128xf32, #tpu.memory_space<vmem>>) attributes {dimension_semantics = [#tpu.dimension_semantics<parallel>, #tpu.dimension_semantics<parallel>, #tpu.dimension_semantics<arbitrary>], iteration_bounds = array<i64: 1, 1, 1>, scalar_prefetch = 0 : i64, scratch_operands = 1 : i64, tpu.core_type = #tpu.core_type<tc>, window_params = [{transform_indices = @transform_0, window_bounds = array<i64: 64, 128>}, {transform_indices = @transform_1, window_bounds = array<i64: 128, 128>}, {transform_indices = @transform_2, window_bounds = array<i64: 1, 128>}, {transform_indices = @transform_3, window_bounds = array<i64: 64, 128>}]} {
    %c0_i32 = arith.constant 0 : i32
    %0 = arith.cmpi eq, %arg2, %c0_i32 : i32
    %1 = arith.extui %0 : i1 to i32
    %c0_i32_0 = arith.constant 0 : i32
    %2 = arith.cmpi ne, %1, %c0_i32_0 : i32
    scf.if %2 {
      %cst_10 = arith.constant 0.000000e+00 : f32
      %12 = vector.broadcast %cst_10 : f32 to vector<64x128xf32>
      %c0_11 = arith.constant 0 : index
      %c0_12 = arith.constant 0 : index
      %13 = vector.load %arg7[%c0_11, %c0_12] : memref<64x128xf32, #tpu.memory_space<vmem>>, vector<64x128xf32>
      tpu.vector_store %arg7[%c0_11, %c0_12], %12 {strides = array<i32>} : memref<64x128xf32, #tpu.memory_space<vmem>>, vector<64x128xf32>,
    } else {
    }
    %c0 = arith.constant 0 : index
    %c0_1 = arith.constant 0 : index
    %3 = vector.load %arg7[%c0, %c0_1] : memref<64x128xf32, #tpu.memory_space<vmem>>, vector<64x128xf32>
    %c0_2 = arith.constant 0 : index
    %c0_3 = arith.constant 0 : index
    %4 = vector.load %arg3[%c0_2, %c0_3] : memref<64x128xf32, #tpu.memory_space<vmem>>, vector<64x128xf32>
    %c0_4 = arith.constant 0 : index
    %c0_5 = arith.constant 0 : index
    %5 = vector.load %arg4[%c0_4, %c0_5] : memref<128x128xf32, #tpu.memory_space<vmem>>, vector<128x128xf32>
    %cst = arith.constant dense<0.000000e+00> : vector<64x128xf32>
    %6 = tpu.matmul %4, %5, %cst {dimension_numbers = #tpu.dot_dimension_numbers<[1], [0], [0], [1], [0, 0, 1, 1], [], []>} : vector<64x128xf32>, vector<128x128xf32>, vector<64x128xf32> -> vector<64x128xf32>
    %7 = arith.addf %3, %6 : vector<64x128xf32>
    %c0_6 = arith.constant 0 : index
    %c0_7 = arith.constant 0 : index
    %8 = vector.load %arg7[%c0_6, %c0_7] : memref<64x128xf32, #tpu.memory_space<vmem>>, vector<64x128xf32>
    tpu.vector_store %arg7[%c0_6, %c0_7], %7 {strides = array<i32>} : memref<64x128xf32, #tpu.memory_space<vmem>>, vector<64x128xf32>,
    %c0_i32_8 = arith.constant 0 : i32
    %9 = arith.cmpi eq, %arg2, %c0_i32_8 : i32
    %10 = arith.extui %9 : i1 to i32
    %c0_i32_9 = arith.constant 0 : i32
    %11 = arith.cmpi ne, %10, %c0_i32_9 : i32
    scf.if %11 {
      %c0_10 = arith.constant 0 : index
      %c0_11 = arith.constant 0 : index
      %12 = vector.load %arg7[%c0_10, %c0_11] : memref<64x128xf32, #tpu.memory_space<vmem>>, vector<64x128xf32>
      %c0_12 = arith.constant 0 : index
      %c0_13 = arith.constant 0 : index
      %13 = vector.load %arg5[%c0_12, %c0_13] : memref<1x128xf32, #tpu.memory_space<vmem>>, vector<1x128xf32>
      %14 = vector.broadcast %13 : vector<1x128xf32> to vector<64x128xf32>
      %15 = arith.addf %12, %14 : vector<64x128xf32>
      %c0_14 = arith.constant 0 : index
      %c0_15 = arith.constant 0 : index
      %16 = vector.load %arg6[%c0_14, %c0_15] : memref<64x128xf32, #tpu.memory_space<vmem>>, vector<64x128xf32>
      tpu.vector_store %arg6[%c0_14, %c0_15], %15 {strides = array<i32>} : memref<64x128xf32, #tpu.memory_space<vmem>>, vector<64x128xf32>,
    } else {
    }
    return
  }
  func.func @transform_0(%arg0: i32, %arg1: i32, %arg2: i32) -> (i32, i32) {
    %c0_i32 = arith.constant 0 : i32
    return %arg0, %arg2 : i32, i32
  }
  func.func @transform_1(%arg0: i32, %arg1: i32, %arg2: i32) -> (i32, i32) {
    %c0_i32 = arith.constant 0 : i32
    return %arg2, %arg1 : i32, i32
  }
  func.func @transform_2(%arg0: i32, %arg1: i32, %arg2: i32) -> (i32, i32) {
    %c0_i32 = arith.constant 0 : i32
    %c0_i32_0 = arith.constant 0 : i32
    return %c0_i32, %arg1 : i32, i32
  }
  func.func @transform_3(%arg0: i32, %arg1: i32, %arg2: i32) -> (i32, i32) {
    %c0_i32 = arith.constant 0 : i32
    return %arg0, %arg1 : i32, i32
  }
}

</mosaic_0001>

<llo_original>
// kernel: fedsage_plus_forward.14
$region0: #{fedsage_plus_forward.14}
  #allocation0 [shape = 'u32[]', space=smem, size = 0x4, offset = 0x4, fixed_abs, tag = 'smem constant byte address 0x4 - core index']
  #allocation1 [shape = 'u32[72,128]{1,0:T(1,128)}', space=vmem, size = 0x9000, scoped, tag = 'internal scratch']
  #allocation2 [shape = 'f32[16,128]{1,0:T(8,128)}', space=vmem, size = 0x2000, scoped, tag = 'scratch operand']
  %s0 = inlined_call_operand.vmem [shape: f32[16,128], index: 0, kind: input, shape index: {}]
  %s1 = inlined_call_operand.vmem [shape: f32[128,128], index: 1, kind: input, shape index: {}]
  %s2 = inlined_call_operand.vmem [shape: f32[16,128], index: 2, kind: output, shape index: {}]
  %s3 = sld [smem:[#allocation0]]
  $region26: #{fedsage_plus_forward.14} parent=0
    _
  %s5 = ssub.s32 1, %s3
  %s6 = scalar_select 0, %s5, %s3
  // Predicated region
  $region2: #{fedsage_plus_forward.14} parent=0 // pred_check
    _
  $region3: #{fedsage_plus_forward.14} parent=0 // pred_check_branch
    %8 = sbr.rel (0) target = $region5
  $region4: #{fedsage_plus_forward.14} parent=0 // pred_region
    _
  $region5: #{fedsage_plus_forward.14} parent=0 // pred_fallthru
    _
  // Predicated region
  $region6: #{fedsage_plus_forward.14} parent=0 // pred_check
    _
  $region7: #{fedsage_plus_forward.14} parent=0 // pred_check_branch
    %10 = sbr.rel (0) target = $region9
  $region8: #{fedsage_plus_forward.14} parent=0 // pred_region
    _
  $region9: #{fedsage_plus_forward.14} parent=0 // pred_fallthru
    _
  %p11 = scmp.eq.s32.totalorder 0, 0
  // Predicated region
  $region10: #{fedsage_plus_forward.14} parent=0 // pred_check
    %p12 = pneg %p11
  $region11: #{fedsage_plus_forward.14} parent=0 // pred_check_branch
    %14 = sbr.rel (%p12) target = $region13
  $region12: #{fedsage_plus_forward.14} parent=0 // pred_region
    %15 = vst [vmem:[#allocation2] sm:$0xff] 0.0
    %16 = vst [vmem:[#allocation2 + $0x8] sm:$0xff] 0.0
  $region13: #{fedsage_plus_forward.14} parent=0 // pred_fallthru
    _
  %v17 = vld [vmem:[#allocation2] sm:$0xff]
  %v18 = vld [vmem:[#allocation2 + $0x8] sm:$0xff]
  %v19 = vld [vmem:[%s0] sm:$0xff]
  %v20 = vld [vmem:[%s0 + $0x8] sm:$0xff]
  %v21 = vld [vmem:[%s1] sm:$0xff]
  %v22 = vld [vmem:[%s1 + $0x8] sm:$0xff]
  %v23 = vld [vmem:[%s1 + $0x10] sm:$0xff]
  %v24 = vld [vmem:[%s1 + $0x18] sm:$0xff]
  %v25 = vld [vmem:[%s1 + $0x20] sm:$0xff]
  %v26 = vld [vmem:[%s1 + $0x28] sm:$0xff]
  %v27 = vld [vmem:[%s1 + $0x30] sm:$0xff]
  %v28 = vld [vmem:[%s1 + $0x38] sm:$0xff]
  %v29 = vld [vmem:[%s1 + $0x40] sm:$0xff]
  %v30 = vld [vmem:[%s1 + $0x48] sm:$0xff]
  %v31 = vld [vmem:[%s1 + $0x50] sm:$0xff]
  %v32 = vld [vmem:[%s1 + $0x58] sm:$0xff]
  %v33 = vld [vmem:[%s1 + $0x60] sm:$0xff]
  %v34 = vld [vmem:[%s1 + $0x68] sm:$0xff]
  %v35 = vld [vmem:[%s1 + $0x70] sm:$0xff]
  %v36 = vld [vmem:[%s1 + $0x78] sm:$0xff]
  %37 = vmatpush.msra.mxu0 %v36
  %38 = vmatpush.msra.mxu0 %v35
  %39 = vmatpush.msra.mxu0 %v34
  %40 = vmatpush.msra.mxu0 %v33
  %41 = vmatpush.msra.mxu0 %v32
  %42 = vmatpush.msra.mxu0 %v31
  %43 = vmatpush.msra.mxu0 %v30
  %44 = vmatpush.msra.mxu0 %v29
  %45 = vmatpush.msra.mxu0 %v28
  %46 = vmatpush.msra.mxu0 %v27
  %47 = vmatpush.msra.mxu0 %v26
  %48 = vmatpush.msra.mxu0 %v25
  %49 = vmatpush.msra.mxu0 %v24
  %50 = vmatpush.msra.mxu0 %v23
  %51 = vmatpush.msra.mxu0 %v22
  %52 = vmatpush.msra.mxu0 %v21
  %53 = vmatmul.f32.gmra.mxu0 %v19
  %v54 = vpop.f32.mrf.mxu0
  %v55 = vadd.f32 0.0, %v54
  %56 = vmatmul.f32.gmra.mxu0 %v20
  %v57 = vpop.f32.mrf.mxu0
  %v58 = vadd.f32 0.0, %v57
  %59 = vdwg.mxu0
  %v60 = vadd.f32 %v17, %v55
  %v61 = vadd.f32 %v18, %v58
  %62 = vst [vmem:[#allocation2] sm:$0xff] %v60
  %63 = vst [vmem:[#allocation2 + $0x8] sm:$0xff] %v61
  // Predicated region
  $region14: #{fedsage_plus_forward.14} parent=0 // pred_check
    %p64 = pneg %p11
  $region15: #{fedsage_plus_forward.14} parent=0 // pred_check_branch
    %66 = sbr.rel (%p64) target = $region17
  $region16: #{fedsage_plus_forward.14} parent=0 // pred_region
    %v67 = vld [vmem:[#allocation2] sm:$0xff]
    %v68 = vld [vmem:[#allocation2 + $0x8] sm:$0xff]
    %69 = vst [vmem:[%s2] sm:$0xff] %v67
    %70 = vst [vmem:[%s2 + $0x8] sm:$0xff] %v68
  $region17: #{fedsage_plus_forward.14} parent=0 // pred_fallthru
    _
  // Predicated region
  $region18: #{fedsage_plus_forward.14} parent=0 // pred_check
    _
  $region19: #{fedsage_plus_forward.14} parent=0 // pred_check_branch
    %72 = sbr.rel (0) target = $region21
  $region20: #{fedsage_plus_forward.14} parent=0 // pred_region
    _
  $region21: #{fedsage_plus_forward.14} parent=0 // pred_fallthru
    _
  // Predicated region
  $region22: #{fedsage_plus_forward.14} parent=0 // pred_check
    _
  $region23: #{fedsage_plus_forward.14} parent=0 // pred_check_branch
    %74 = sbr.rel (0) target = $region25
  $region24: #{fedsage_plus_forward.14} parent=0 // pred_region
    _
  $region25: #{fedsage_plus_forward.14} parent=0 // pred_fallthru
    _

// kernel: fedsage_plus_forward.15
$region0: #{fedsage_plus_forward.15}
  #allocation0 [shape = 'u32[]', space=smem, size = 0x4, offset = 0x4, fixed_abs, tag = 'smem constant byte address 0x4 - core index']
  #allocation1 [shape = 'u32[72,128]{1,0:T(1,128)}', space=vmem, size = 0x9000, scoped, tag = 'internal scratch']
  #allocation2 [shape = 'f32[16,128]{1,0:T(8,128)}', space=vmem, size = 0x2000, scoped, tag = 'scratch operand']
  %s0 = inlined_call_operand.vmem [shape: f32[16,128], index: 0, kind: input, shape index: {}]
  %s1 = inlined_call_operand.vmem [shape: f32[128,128], index: 1, kind: input, shape index: {}]
  %s2 = inlined_call_operand.vmem [shape: f32[1,128], index: 2, kind: input, shape index: {}]
  %s3 = inlined_call_operand.vmem [shape: f32[16,128], index: 3, kind: output, shape index: {}]
  %s4 = sld [smem:[#allocation0]]
  $region30: #{fedsage_plus_forward.15} parent=0
    _
  %s6 = ssub.s32 1, %s4
  %s7 = scalar_select 0, %s6, %s4
  // Predicated region
  $region2: #{fedsage_plus_forward.15} parent=0 // pred_check
    _
  $region3: #{fedsage_plus_forward.15} parent=0 // pred_check_branch
    %9 = sbr.rel (0) target = $region5
  $region4: #{fedsage_plus_forward.15} parent=0 // pred_region
    _
  $region5: #{fedsage_plus_forward.15} parent=0 // pred_fallthru
    _
  // Predicated region
  $region6: #{fedsage_plus_forward.15} parent=0 // pred_check
    _
  $region7: #{fedsage_plus_forward.15} parent=0 // pred_check_branch
    %11 = sbr.rel (0) target = $region9
  $region8: #{fedsage_plus_forward.15} parent=0 // pred_region
    _
  $region9: #{fedsage_plus_forward.15} parent=0 // pred_fallthru
    _
  // Predicated region
  $region10: #{fedsage_plus_forward.15} parent=0 // pred_check
    _
  $region11: #{fedsage_plus_forward.15} parent=0 // pred_check_branch
    %13 = sbr.rel (0) target = $region13
  $region12: #{fedsage_plus_forward.15} parent=0 // pred_region
    _
  $region13: #{fedsage_plus_forward.15} parent=0 // pred_fallthru
    _
  %p14 = scmp.eq.s32.totalorder 0, 0
  // Predicated region
  $region14: #{fedsage_plus_forward.15} parent=0 // pred_check
    %p15 = pneg %p14
  $region15: #{fedsage_plus_forward.15} parent=0 // pred_check_branch
    %17 = sbr.rel (%p15) target = $region17
  $region16: #{fedsage_plus_forward.15} parent=0 // pred_region
    %18 = vst [vmem:[#allocation2] sm:$0xff] 0.0
    %19 = vst [vmem:[#allocation2 + $0x8] sm:$0xff] 0.0
  $region17: #{fedsage_plus_forward.15} parent=0 // pred_fallthru
    _
  %v20 = vld [vmem:[#allocation2] sm:$0xff]
  %v21 = vld [vmem:[#allocation2 + $0x8] sm:$0xff]
  %v22 = vld [vmem:[%s0] sm:$0xff]
  %v23 = vld [vmem:[%s0 + $0x8] sm:$0xff]
  %v24 = vld [vmem:[%s1] sm:$0xff]
  %v25 = vld [vmem:[%s1 + $0x8] sm:$0xff]
  %v26 = vld [vmem:[%s1 + $0x10] sm:$0xff]
  %v27 = vld [vmem:[%s1 + $0x18] sm:$0xff]
  %v28 = vld [vmem:[%s1 + $0x20] sm:$0xff]
  %v29 = vld [vmem:[%s1 + $0x28] sm:$0xff]
  %v30 = vld [vmem:[%s1 + $0x30] sm:$0xff]
  %v31 = vld [vmem:[%s1 + $0x38] sm:$0xff]
  %v32 = vld [vmem:[%s1 + $0x40] sm:$0xff]
  %v33 = vld [vmem:[%s1 + $0x48] sm:$0xff]
  %v34 = vld [vmem:[%s1 + $0x50] sm:$0xff]
  %v35 = vld [vmem:[%s1 + $0x58] sm:$0xff]
  %v36 = vld [vmem:[%s1 + $0x60] sm:$0xff]
  %v37 = vld [vmem:[%s1 + $0x68] sm:$0xff]
  %v38 = vld [vmem:[%s1 + $0x70] sm:$0xff]
  %v39 = vld [vmem:[%s1 + $0x78] sm:$0xff]
  %40 = vmatpush.msra.mxu0 %v39
  %41 = vmatpush.msra.mxu0 %v38
  %42 = vmatpush.msra.mxu0 %v37
  %43 = vmatpush.msra.mxu0 %v36
  %44 = vmatpush.msra.mxu0 %v35
  %45 = vmatpush.msra.mxu0 %v34
  %46 = vmatpush.msra.mxu0 %v33
  %47 = vmatpush.msra.mxu0 %v32
  %48 = vmatpush.msra.mxu0 %v31
  %49 = vmatpush.msra.mxu0 %v30
  %50 = vmatpush.msra.mxu0 %v29
  %51 = vmatpush.msra.mxu0 %v28
  %52 = vmatpush.msra.mxu0 %v27
  %53 = vmatpush.msra.mxu0 %v26
  %54 = vmatpush.msra.mxu0 %v25
  %55 = vmatpush.msra.mxu0 %v24
  %56 = vmatmul.f32.gmra.mxu0 %v22
  %v57 = vpop.f32.mrf.mxu0
  %v58 = vadd.f32 0.0, %v57
  %59 = vmatmul.f32.gmra.mxu0 %v23
  %v60 = vpop.f32.mrf.mxu0
  %v61 = vadd.f32 0.0, %v60
  %62 = vdwg.mxu0
  %v63 = vadd.f32 %v20, %v58
  %v64 = vadd.f32 %v21, %v61
  %65 = vst [vmem:[#allocation2] sm:$0xff] %v63
  %66 = vst [vmem:[#allocation2 + $0x8] sm:$0xff] %v64
  // Predicated region
  $region18: #{fedsage_plus_forward.15} parent=0 // pred_check
    %p67 = pneg %p14
  $region19: #{fedsage_plus_forward.15} parent=0 // pred_check_branch
    %69 = sbr.rel (%p67) target = $region21
  $region20: #{fedsage_plus_forward.15} parent=0 // pred_region
    %v70 = vld [vmem:[#allocation2] sm:$0xff]
    %v71 = vld [vmem:[#allocation2 + $0x8] sm:$0xff]
    %v72 = vld [vmem:[%s2] sm:$0x1]
    %v74 = vperm.slane %v72, 0
    %v76 = vadd.f32 %v70, %v74
    %v77 = vadd.f32 %v71, %v74
    %78 = vst [vmem:[%s3] sm:$0xff] %v76
    %79 = vst [vmem:[%s3 + $0x8] sm:$0xff] %v77
  $region21: #{fedsage_plus_forward.15} parent=0 // pred_fallthru
    _
  // Predicated region
  $region22: #{fedsage_plus_forward.15} parent=0 // pred_check
    _
  $region23: #{fedsage_plus_forward.15} parent=0 // pred_check_branch
    %81 = sbr.rel (0) target = $region25
  $region24: #{fedsage_plus_forward.15} parent=0 // pred_region
    _
  $region25: #{fedsage_plus_forward.15} parent=0 // pred_fallthru
    _
  // Predicated region
  $region26: #{fedsage_plus_forward.15} parent=0 // pred_check
    _
  $region27: #{fedsage_plus_forward.15} parent=0 // pred_check_branch
    %83 = sbr.rel (0) target = $region29
  $region28: #{fedsage_plus_forward.15} parent=0 // pred_region
    _
  $region29: #{fedsage_plus_forward.15} parent=0 // pred_fallthru
    _

// kernel: fedsage_plus_forward.16
$region0: #{fedsage_plus_forward.16}
  #allocation0 [shape = 'u32[]', space=smem, size = 0x4, offset = 0x4, fixed_abs, tag = 'smem constant byte address 0x4 - core index']
  #allocation1 [shape = 'u32[72,128]{1,0:T(1,128)}', space=vmem, size = 0x9000, scoped, tag = 'internal scratch']
  #allocation2 [shape = 'f32[16,128]{1,0:T(8,128)}', space=vmem, size = 0x2000, scoped, tag = 'scratch operand']
  %s0 = inlined_call_operand.vmem [shape: bf16[16,128], index: 0, kind: input, shape index: {}]
  %s1 = inlined_call_operand.vmem [shape: bf16[128,128], index: 1, kind: input, shape index: {}]
  %s2 = inlined_call_operand.vmem [shape: f32[16,128], index: 2, kind: input, shape index: {}]
  %s3 = inlined_call_operand.vmem [shape: f32[16,128], index: 3, kind: output, shape index: {}]
  %s4 = sld [smem:[#allocation0]]
  $region30: #{fedsage_plus_forward.16} parent=0
    _
  %s6 = ssub.s32 1, %s4
  %s7 = scalar_select 0, %s6, %s4
  // Predicated region
  $region2: #{fedsage_plus_forward.16} parent=0 // pred_check
    _
  $region3: #{fedsage_plus_forward.16} parent=0 // pred_check_branch
    %9 = sbr.rel (0) target = $region5
  $region4: #{fedsage_plus_forward.16} parent=0 // pred_region
    _
  $region5: #{fedsage_plus_forward.16} parent=0 // pred_fallthru
    _
  // Predicated region
  $region6: #{fedsage_plus_forward.16} parent=0 // pred_check
    _
  $region7: #{fedsage_plus_forward.16} parent=0 // pred_check_branch
    %11 = sbr.rel (0) target = $region9
  $region8: #{fedsage_plus_forward.16} parent=0 // pred_region
    _
  $region9: #{fedsage_plus_forward.16} parent=0 // pred_fallthru
    _
  // Predicated region
  $region10: #{fedsage_plus_forward.16} parent=0 // pred_check
    _
  $region11: #{fedsage_plus_forward.16} parent=0 // pred_check_branch
    %13 = sbr.rel (0) target = $region13
  $region12: #{fedsage_plus_forward.16} parent=0 // pred_region
    _
  $region13: #{fedsage_plus_forward.16} parent=0 // pred_fallthru
    _
  %p14 = scmp.eq.s32.totalorder 0, 0
  // Predicated region
  $region14: #{fedsage_plus_forward.16} parent=0 // pred_check
    %p15 = pneg %p14
  $region15: #{fedsage_plus_forward.16} parent=0 // pred_check_branch
    %17 = sbr.rel (%p15) target = $region17
  $region16: #{fedsage_plus_forward.16} parent=0 // pred_region
    %18 = vst [vmem:[#allocation2] sm:$0xff] 0.0
    %19 = vst [vmem:[#allocation2 + $0x8] sm:$0xff] 0.0
  $region17: #{fedsage_plus_forward.16} parent=0 // pred_fallthru
    _
  %v20 = vld [vmem:[#allocation2] sm:$0xff]
  %v21 = vld [vmem:[#allocation2 + $0x8] sm:$0xff]
  %v22 = vld [vmem:[%s0] sm:$0xf]
  %v23 = vld [vmem:[%s0 + $0x4] sm:$0xf]
  %v24 = vld [vmem:[%s1] sm:$0xf]
  %v25 = vld [vmem:[%s1 + $0x4] sm:$0xf]
  %v26 = vld [vmem:[%s1 + $0x8] sm:$0xf]
  %v27 = vld [vmem:[%s1 + $0xc] sm:$0xf]
  %v28 = vld [vmem:[%s1 + $0x10] sm:$0xf]
  %v29 = vld [vmem:[%s1 + $0x14] sm:$0xf]
  %v30 = vld [vmem:[%s1 + $0x18] sm:$0xf]
  %v31 = vld [vmem:[%s1 + $0x1c] sm:$0xf]
  %v32 = vld [vmem:[%s1 + $0x20] sm:$0xf]
  %v33 = vld [vmem:[%s1 + $0x24] sm:$0xf]
  %v34 = vld [vmem:[%s1 + $0x28] sm:$0xf]
  %v35 = vld [vmem:[%s1 + $0x2c] sm:$0xf]
  %v36 = vld [vmem:[%s1 + $0x30] sm:$0xf]
  %v37 = vld [vmem:[%s1 + $0x34] sm:$0xf]
  %v38 = vld [vmem:[%s1 + $0x38] sm:$0xf]
  %v39 = vld [vmem:[%s1 + $0x3c] sm:$0xf]
  %v42 = vunpack.c.l.b16 %v22
  %v43 = vunpack.c.l.b16 %v23
  %v44 = vpack.c.b16 %v43, %v42
  %v62 = vunpack.c.l.b16 %v24
  %v63 = vunpack.c.l.b16 %v25
  %v64 = vunpack.c.l.b16 %v26
  %v65 = vunpack.c.l.b16 %v27
  %v66 = vunpack.c.l.b16 %v28
  %v67 = vunpack.c.l.b16 %v29
  %v68 = vunpack.c.l.b16 %v30
  %v69 = vunpack.c.l.b16 %v31
  %v70 = vunpack.c.l.b16 %v32
  %v71 = vunpack.c.l.b16 %v33
  %v72 = vunpack.c.l.b16 %v34
  %v73 = vunpack.c.l.b16 %v35
  %v74 = vunpack.c.l.b16 %v36
  %v75 = vunpack.c.l.b16 %v37
  %v76 = vunpack.c.l.b16 %v38
  %v77 = vunpack.c.l.b16 %v39
  %v78 = vpack.c.b16 %v63, %v62
  %v79 = vpack.c.b16 %v65, %v64
  %v80 = vpack.c.b16 %v67, %v66
  %v81 = vpack.c.b16 %v69, %v68
  %v82 = vpack.c.b16 %v71, %v70
  %v83 = vpack.c.b16 %v73, %v72
  %v84 = vpack.c.b16 %v75, %v74
  %v85 = vpack.c.b16 %v77, %v76
  %94 = vmatpush.bf16.msra.mxu0 %v85
  %95 = vmatpush.bf16.msra.mxu0 %v84
  %96 = vmatpush.bf16.msra.mxu0 %v83
  %97 = vmatpush.bf16.msra.mxu0 %v82
  %98 = vmatpush.bf16.msra.mxu0 %v81
  %99 = vmatpush.bf16.msra.mxu0 %v80
  %100 = vmatpush.bf16.msra.mxu0 %v79
  %101 = vmatpush.bf16.msra.mxu0 %v78
  %102 = vmatmul.bf16.gmra.mxu0 %v44
  %v103 = vpop.f32.mrf.mxu0
  %v104 = vadd.f32 0.0, %v103
  %v105 = vpop.f32.mrf.mxu0
  %v106 = vadd.f32 0.0, %v105
  %107 = vdwg.mxu0
  %v108 = vadd.f32 %v20, %v104
  %v109 = vadd.f32 %v21, %v106
  %110 = vst [vmem:[#allocation2] sm:$0xff] %v108
  %111 = vst [vmem:[#allocation2 + $0x8] sm:$0xff] %v109
  // Predicated region
  $region18: #{fedsage_plus_forward.16} parent=0 // pred_check
    %p112 = pneg %p14
  $region19: #{fedsage_plus_forward.16} parent=0 // pred_check_branch
    %114 = sbr.rel (%p112) target = $region21
  $region20: #{fedsage_plus_forward.16} parent=0 // pred_region
    %v115 = vld [vmem:[#allocation2] sm:$0xff]
    %v116 = vld [vmem:[#allocation2 + $0x8] sm:$0xff]
    %v117 = vld [vmem:[%s2] sm:$0xff]
    %v118 = vld [vmem:[%s2 + $0x8] sm:$0xff]
    %v119 = vadd.f32 %v115, %v117
    %v120 = vadd.f32 %v116, %v118
    %v121 = vmax.f32 %v119, 0.0
    %v122 = vmax.f32 %v120, 0.0
    %123 = vst [vmem:[%s3] sm:$0xff] %v121
    %124 = vst [vmem:[%s3 + $0x8] sm:$0xff] %v122
  $region21: #{fedsage_plus_forward.16} parent=0 // pred_fallthru
    _
  // Predicated region
  $region22: #{fedsage_plus_forward.16} parent=0 // pred_check
    _
  $region23: #{fedsage_plus_forward.16} parent=0 // pred_check_branch
    %126 = sbr.rel (0) target = $region25
  $region24: #{fedsage_plus_forward.16} parent=0 // pred_region
    _
  $region25: #{fedsage_plus_forward.16} parent=0 // pred_fallthru
    _
  // Predicated region
  $region26: #{fedsage_plus_forward.16} parent=0 // pred_check
    _
  $region27: #{fedsage_plus_forward.16} parent=0 // pred_check_branch
    %128 = sbr.rel (0) target = $region29
  $region28: #{fedsage_plus_forward.16} parent=0 // pred_region
    _
  $region29: #{fedsage_plus_forward.16} parent=0 // pred_fallthru
    _

// kernel: fedsage_plus_forward.19
$region0: #{fedsage_plus_forward.19}
  #allocation0 [shape = 'u32[]', space=smem, size = 0x4, offset = 0x4, fixed_abs, tag = 'smem constant byte address 0x4 - core index']
  #allocation1 [shape = 'u32[72,128]{1,0:T(1,128)}', space=vmem, size = 0x9000, scoped, tag = 'internal scratch']
  #allocation2 [shape = 'f32[16,128]{1,0:T(8,128)}', space=vmem, size = 0x2000, scoped, tag = 'scratch operand']
  %s0 = inlined_call_operand.vmem [shape: bf16[16,128], index: 0, kind: input, shape index: {}]
  %s1 = inlined_call_operand.vmem [shape: bf16[128,128], index: 1, kind: input, shape index: {}]
  %s2 = inlined_call_operand.vmem [shape: f32[16,128], index: 2, kind: input, shape index: {}]
  %s3 = inlined_call_operand.vmem [shape: f32[16,128], index: 3, kind: output, shape index: {}]
  %s4 = sld [smem:[#allocation0]]
  $region30: #{fedsage_plus_forward.19} parent=0
    _
  %s6 = ssub.s32 1, %s4
  %s7 = scalar_select 0, %s6, %s4
  // Predicated region
  $region2: #{fedsage_plus_forward.19} parent=0 // pred_check
    _
  $region3: #{fedsage_plus_forward.19} parent=0 // pred_check_branch
    %9 = sbr.rel (0) target = $region5
  $region4: #{fedsage_plus_forward.19} parent=0 // pred_region
    _
  $region5: #{fedsage_plus_forward.19} parent=0 // pred_fallthru
    _
  // Predicated region
  $region6: #{fedsage_plus_forward.19} parent=0 // pred_check
    _
  $region7: #{fedsage_plus_forward.19} parent=0 // pred_check_branch
    %11 = sbr.rel (0) target = $region9
  $region8: #{fedsage_plus_forward.19} parent=0 // pred_region
    _
  $region9: #{fedsage_plus_forward.19} parent=0 // pred_fallthru
    _
  // Predicated region
  $region10: #{fedsage_plus_forward.19} parent=0 // pred_check
    _
  $region11: #{fedsage_plus_forward.19} parent=0 // pred_check_branch
    %13 = sbr.rel (0) target = $region13
  $region12: #{fedsage_plus_forward.19} parent=0 // pred_region
    _
  $region13: #{fedsage_plus_forward.19} parent=0 // pred_fallthru
    _
  %p14 = scmp.eq.s32.totalorder 0, 0
  // Predicated region
  $region14: #{fedsage_plus_forward.19} parent=0 // pred_check
    %p15 = pneg %p14
  $region15: #{fedsage_plus_forward.19} parent=0 // pred_check_branch
    %17 = sbr.rel (%p15) target = $region17
  $region16: #{fedsage_plus_forward.19} parent=0 // pred_region
    %18 = vst [vmem:[#allocation2] sm:$0xff] 0.0
    %19 = vst [vmem:[#allocation2 + $0x8] sm:$0xff] 0.0
  $region17: #{fedsage_plus_forward.19} parent=0 // pred_fallthru
    _
  %v20 = vld [vmem:[#allocation2] sm:$0xff]
  %v21 = vld [vmem:[#allocation2 + $0x8] sm:$0xff]
  %v22 = vld [vmem:[%s0] sm:$0xf]
  %v23 = vld [vmem:[%s0 + $0x4] sm:$0xf]
  %v24 = vld [vmem:[%s1] sm:$0xf]
  %v25 = vld [vmem:[%s1 + $0x4] sm:$0xf]
  %v26 = vld [vmem:[%s1 + $0x8] sm:$0xf]
  %v27 = vld [vmem:[%s1 + $0xc] sm:$0xf]
  %v28 = vld [vmem:[%s1 + $0x10] sm:$0xf]
  %v29 = vld [vmem:[%s1 + $0x14] sm:$0xf]
  %v30 = vld [vmem:[%s1 + $0x18] sm:$0xf]
  %v31 = vld [vmem:[%s1 + $0x1c] sm:$0xf]
  %v32 = vld [vmem:[%s1 + $0x20] sm:$0xf]
  %v33 = vld [vmem:[%s1 + $0x24] sm:$0xf]
  %v34 = vld [vmem:[%s1 + $0x28] sm:$0xf]
  %v35 = vld [vmem:[%s1 + $0x2c] sm:$0xf]
  %v36 = vld [vmem:[%s1 + $0x30] sm:$0xf]
  %v37 = vld [vmem:[%s1 + $0x34] sm:$0xf]
  %v38 = vld [vmem:[%s1 + $0x38] sm:$0xf]
  %v39 = vld [vmem:[%s1 + $0x3c] sm:$0xf]
  %v42 = vunpack.c.l.b16 %v22
  %v43 = vunpack.c.l.b16 %v23
  %v44 = vpack.c.b16 %v43, %v42
  %v62 = vunpack.c.l.b16 %v24
  %v63 = vunpack.c.l.b16 %v25
  %v64 = vunpack.c.l.b16 %v26
  %v65 = vunpack.c.l.b16 %v27
  %v66 = vunpack.c.l.b16 %v28
  %v67 = vunpack.c.l.b16 %v29
  %v68 = vunpack.c.l.b16 %v30
  %v69 = vunpack.c.l.b16 %v31
  %v70 = vunpack.c.l.b16 %v32
  %v71 = vunpack.c.l.b16 %v33
  %v72 = vunpack.c.l.b16 %v34
  %v73 = vunpack.c.l.b16 %v35
  %v74 = vunpack.c.l.b16 %v36
  %v75 = vunpack.c.l.b16 %v37
  %v76 = vunpack.c.l.b16 %v38
  %v77 = vunpack.c.l.b16 %v39
  %v78 = vpack.c.b16 %v63, %v62
  %v79 = vpack.c.b16 %v65, %v64
  %v80 = vpack.c.b16 %v67, %v66
  %v81 = vpack.c.b16 %v69, %v68
  %v82 = vpack.c.b16 %v71, %v70
  %v83 = vpack.c.b16 %v73, %v72
  %v84 = vpack.c.b16 %v75, %v74
  %v85 = vpack.c.b16 %v77, %v76
  %94 = vmatpush.bf16.msra.mxu0 %v85
  %95 = vmatpush.bf16.msra.mxu0 %v84
  %96 = vmatpush.bf16.msra.mxu0 %v83
  %97 = vmatpush.bf16.msra.mxu0 %v82
  %98 = vmatpush.bf16.msra.mxu0 %v81
  %99 = vmatpush.bf16.msra.mxu0 %v80
  %100 = vmatpush.bf16.msra.mxu0 %v79
  %101 = vmatpush.bf16.msra.mxu0 %v78
  %102 = vmatmul.bf16.gmra.mxu0 %v44
  %v103 = vpop.f32.mrf.mxu0
  %v104 = vadd.f32 0.0, %v103
  %v105 = vpop.f32.mrf.mxu0
  %v106 = vadd.f32 0.0, %v105
  %107 = vdwg.mxu0
  %v108 = vadd.f32 %v20, %v104
  %v109 = vadd.f32 %v21, %v106
  %110 = vst [vmem:[#allocation2] sm:$0xff] %v108
  %111 = vst [vmem:[#allocation2 + $0x8] sm:$0xff] %v109
  // Predicated region
  $region18: #{fedsage_plus_forward.19} parent=0 // pred_check
    %p112 = pneg %p14
  $region19: #{fedsage_plus_forward.19} parent=0 // pred_check_branch
    %114 = sbr.rel (%p112) target = $region21
  $region20: #{fedsage_plus_forward.19} parent=0 // pred_region
    %v115 = vld [vmem:[#allocation2] sm:$0xff]
    %v116 = vld [vmem:[#allocation2 + $0x8] sm:$0xff]
    %v117 = vld [vmem:[%s2] sm:$0xff]
    %v118 = vld [vmem:[%s2 + $0x8] sm:$0xff]
    %v119 = vadd.f32 %v115, %v117
    %v120 = vadd.f32 %v116, %v118
    %121 = vst [vmem:[%s3] sm:$0xff] %v119
    %122 = vst [vmem:[%s3 + $0x8] sm:$0xff] %v120
  $region21: #{fedsage_plus_forward.19} parent=0 // pred_fallthru
    _
  // Predicated region
  $region22: #{fedsage_plus_forward.19} parent=0 // pred_check
    _
  $region23: #{fedsage_plus_forward.19} parent=0 // pred_check_branch
    %124 = sbr.rel (0) target = $region25
  $region24: #{fedsage_plus_forward.19} parent=0 // pred_region
    _
  $region25: #{fedsage_plus_forward.19} parent=0 // pred_fallthru
    _
  // Predicated region
  $region26: #{fedsage_plus_forward.19} parent=0 // pred_check
    _
  $region27: #{fedsage_plus_forward.19} parent=0 // pred_check_branch
    %126 = sbr.rel (0) target = $region29
  $region28: #{fedsage_plus_forward.19} parent=0 // pred_region
    _
  $region29: #{fedsage_plus_forward.19} parent=0 // pred_fallthru
    _

// kernel: fedsage_plus_forward.20
$region0: #{fedsage_plus_forward.20}
  #allocation0 [shape = 'u32[]', space=smem, size = 0x4, offset = 0x4, fixed_abs, tag = 'smem constant byte address 0x4 - core index']
  #allocation1 [shape = 'u32[72,128]{1,0:T(1,128)}', space=vmem, size = 0x9000, scoped, tag = 'internal scratch']
  #allocation2 [shape = 'f32[16,128]{1,0:T(8,128)}', space=vmem, size = 0x2000, scoped, tag = 'scratch operand']
  %s0 = inlined_call_operand.vmem [shape: f32[16,128], index: 0, kind: input, shape index: {}]
  %s1 = inlined_call_operand.vmem [shape: f32[128,128], index: 1, kind: input, shape index: {}]
  %s2 = inlined_call_operand.vmem [shape: f32[1,128], index: 2, kind: input, shape index: {}]
  %s3 = inlined_call_operand.vmem [shape: f32[16,128], index: 3, kind: output, shape index: {}]
  %s4 = sld [smem:[#allocation0]]
  $region30: #{fedsage_plus_forward.20} parent=0
    _
  %s6 = ssub.s32 1, %s4
  %s7 = scalar_select 0, %s6, %s4
  // Predicated region
  $region2: #{fedsage_plus_forward.20} parent=0 // pred_check
    _
  $region3: #{fedsage_plus_forward.20} parent=0 // pred_check_branch
    %9 = sbr.rel (0) target = $region5
  $region4: #{fedsage_plus_forward.20} parent=0 // pred_region
    _
  $region5: #{fedsage_plus_forward.20} parent=0 // pred_fallthru
    _
  // Predicated region
  $region6: #{fedsage_plus_forward.20} parent=0 // pred_check
    _
  $region7: #{fedsage_plus_forward.20} parent=0 // pred_check_branch
    %11 = sbr.rel (0) target = $region9
  $region8: #{fedsage_plus_forward.20} parent=0 // pred_region
    _
  $region9: #{fedsage_plus_forward.20} parent=0 // pred_fallthru
    _
  // Predicated region
  $region10: #{fedsage_plus_forward.20} parent=0 // pred_check
    _
  $region11: #{fedsage_plus_forward.20} parent=0 // pred_check_branch
    %13 = sbr.rel (0) target = $region13
  $region12: #{fedsage_plus_forward.20} parent=0 // pred_region
    _
  $region13: #{fedsage_plus_forward.20} parent=0 // pred_fallthru
    _
  %p14 = scmp.eq.s32.totalorder 0, 0
  // Predicated region
  $region14: #{fedsage_plus_forward.20} parent=0 // pred_check
    %p15 = pneg %p14
  $region15: #{fedsage_plus_forward.20} parent=0 // pred_check_branch
    %17 = sbr.rel (%p15) target = $region17
  $region16: #{fedsage_plus_forward.20} parent=0 // pred_region
    %18 = vst [vmem:[#allocation2] sm:$0xff] 0.0
    %19 = vst [vmem:[#allocation2 + $0x8] sm:$0xff] 0.0
  $region17: #{fedsage_plus_forward.20} parent=0 // pred_fallthru
    _
  %v20 = vld [vmem:[#allocation2] sm:$0xff]
  %v21 = vld [vmem:[#allocation2 + $0x8] sm:$0xff]
  %v22 = vld [vmem:[%s0] sm:$0xff]
  %v23 = vld [vmem:[%s0 + $0x8] sm:$0xff]
  %v24 = vld [vmem:[%s1] sm:$0xff]
  %v25 = vld [vmem:[%s1 + $0x8] sm:$0xff]
  %v26 = vld [vmem:[%s1 + $0x10] sm:$0xff]
  %v27 = vld [vmem:[%s1 + $0x18] sm:$0xff]
  %v28 = vld [vmem:[%s1 + $0x20] sm:$0xff]
  %v29 = vld [vmem:[%s1 + $0x28] sm:$0xff]
  %v30 = vld [vmem:[%s1 + $0x30] sm:$0xff]
  %v31 = vld [vmem:[%s1 + $0x38] sm:$0xff]
  %v32 = vld [vmem:[%s1 + $0x40] sm:$0xff]
  %v33 = vld [vmem:[%s1 + $0x48] sm:$0xff]
  %v34 = vld [vmem:[%s1 + $0x50] sm:$0xff]
  %v35 = vld [vmem:[%s1 + $0x58] sm:$0xff]
  %v36 = vld [vmem:[%s1 + $0x60] sm:$0xff]
  %v37 = vld [vmem:[%s1 + $0x68] sm:$0xff]
  %v38 = vld [vmem:[%s1 + $0x70] sm:$0xff]
  %v39 = vld [vmem:[%s1 + $0x78] sm:$0xff]
  %40 = vmatpush.msra.mxu0 %v39
  %41 = vmatpush.msra.mxu0 %v38
  %42 = vmatpush.msra.mxu0 %v37
  %43 = vmatpush.msra.mxu0 %v36
  %44 = vmatpush.msra.mxu0 %v35
  %45 = vmatpush.msra.mxu0 %v34
  %46 = vmatpush.msra.mxu0 %v33
  %47 = vmatpush.msra.mxu0 %v32
  %48 = vmatpush.msra.mxu0 %v31
  %49 = vmatpush.msra.mxu0 %v30
  %50 = vmatpush.msra.mxu0 %v29
  %51 = vmatpush.msra.mxu0 %v28
  %52 = vmatpush.msra.mxu0 %v27
  %53 = vmatpush.msra.mxu0 %v26
  %54 = vmatpush.msra.mxu0 %v25
  %55 = vmatpush.msra.mxu0 %v24
  %56 = vmatmul.f32.gmra.mxu0 %v22
  %v57 = vpop.f32.mrf.mxu0
  %v58 = vadd.f32 0.0, %v57
  %59 = vmatmul.f32.gmra.mxu0 %v23
  %v60 = vpop.f32.mrf.mxu0
  %v61 = vadd.f32 0.0, %v60
  %62 = vdwg.mxu0
  %v63 = vadd.f32 %v20, %v58
  %v64 = vadd.f32 %v21, %v61
  %65 = vst [vmem:[#allocation2] sm:$0xff] %v63
  %66 = vst [vmem:[#allocation2 + $0x8] sm:$0xff] %v64
  // Predicated region
  $region18: #{fedsage_plus_forward.20} parent=0 // pred_check
    %p67 = pneg %p14
  $region19: #{fedsage_plus_forward.20} parent=0 // pred_check_branch
    %69 = sbr.rel (%p67) target = $region21
  $region20: #{fedsage_plus_forward.20} parent=0 // pred_region
    %v70 = vld [vmem:[#allocation2] sm:$0xff]
    %v71 = vld [vmem:[#allocation2 + $0x8] sm:$0xff]
    %v72 = vld [vmem:[%s2] sm:$0x1]
    %v74 = vperm.slane %v72, 0
    %v76 = vadd.f32 %v70, %v74
    %v77 = vadd.f32 %v71, %v74
    %v78 = vmax.f32 %v76, 0.0
    %v79 = vmax.f32 %v77, 0.0
    %80 = vst [vmem:[%s3] sm:$0xff] %v78
    %81 = vst [vmem:[%s3 + $0x8] sm:$0xff] %v79
  $region21: #{fedsage_plus_forward.20} parent=0 // pred_fallthru
    _
  // Predicated region
  $region22: #{fedsage_plus_forward.20} parent=0 // pred_check
    _
  $region23: #{fedsage_plus_forward.20} parent=0 // pred_check_branch
    %83 = sbr.rel (0) target = $region25
  $region24: #{fedsage_plus_forward.20} parent=0 // pred_region
    _
  $region25: #{fedsage_plus_forward.20} parent=0 // pred_fallthru
    _
  // Predicated region
  $region26: #{fedsage_plus_forward.20} parent=0 // pred_check
    _
  $region27: #{fedsage_plus_forward.20} parent=0 // pred_check_branch
    %85 = sbr.rel (0) target = $region29
  $region28: #{fedsage_plus_forward.20} parent=0 // pred_region
    _
  $region29: #{fedsage_plus_forward.20} parent=0 // pred_fallthru
    _

// kernel: fedsage_plus_forward.24
$region0: #{fedsage_plus_forward.24}
  #allocation0 [shape = 'u32[]', space=smem, size = 0x4, offset = 0x4, fixed_abs, tag = 'smem constant byte address 0x4 - core index']
  #allocation1 [shape = 'u32[72,128]{1,0:T(1,128)}', space=vmem, size = 0x9000, scoped, tag = 'internal scratch']
  #allocation2 [shape = 'f32[64,128]{1,0:T(8,128)}', space=vmem, size = 0x8000, scoped, tag = 'scratch operand']
  %s0 = inlined_call_operand.vmem [shape: bf16[64,128], index: 0, kind: input, shape index: {}]
  %s1 = inlined_call_operand.vmem [shape: bf16[128,128], index: 1, kind: input, shape index: {}]
  %s2 = inlined_call_operand.vmem [shape: f32[64,128], index: 2, kind: input, shape index: {}]
  %s3 = inlined_call_operand.vmem [shape: f32[64,128], index: 3, kind: output, shape index: {}]
  %s4 = sld [smem:[#allocation0]]
  $region30: #{fedsage_plus_forward.24} parent=0
    _
  %s6 = ssub.s32 1, %s4
  %s7 = scalar_select 0, %s6, %s4
  // Predicated region
  $region2: #{fedsage_plus_forward.24} parent=0 // pred_check
    _
  $region3: #{fedsage_plus_forward.24} parent=0 // pred_check_branch
    %9 = sbr.rel (0) target = $region5
  $region4: #{fedsage_plus_forward.24} parent=0 // pred_region
    _
  $region5: #{fedsage_plus_forward.24} parent=0 // pred_fallthru
    _
  // Predicated region
  $region6: #{fedsage_plus_forward.24} parent=0 // pred_check
    _
  $region7: #{fedsage_plus_forward.24} parent=0 // pred_check_branch
    %11 = sbr.rel (0) target = $region9
  $region8: #{fedsage_plus_forward.24} parent=0 // pred_region
    _
  $region9: #{fedsage_plus_forward.24} parent=0 // pred_fallthru
    _
  // Predicated region
  $region10: #{fedsage_plus_forward.24} parent=0 // pred_check
    _
  $region11: #{fedsage_plus_forward.24} parent=0 // pred_check_branch
    %13 = sbr.rel (0) target = $region13
  $region12: #{fedsage_plus_forward.24} parent=0 // pred_region
    _
  $region13: #{fedsage_plus_forward.24} parent=0 // pred_fallthru
    _
  %p14 = scmp.eq.s32.totalorder 0, 0
  // Predicated region
  $region14: #{fedsage_plus_forward.24} parent=0 // pred_check
    %p15 = pneg %p14
  $region15: #{fedsage_plus_forward.24} parent=0 // pred_check_branch
    %17 = sbr.rel (%p15) target = $region17
  $region16: #{fedsage_plus_forward.24} parent=0 // pred_region
    %18 = vst [vmem:[#allocation2] sm:$0xff] 0.0
    %19 = vst [vmem:[#allocation2 + $0x8] sm:$0xff] 0.0
    %20 = vst [vmem:[#allocation2 + $0x10] sm:$0xff] 0.0
    %21 = vst [vmem:[#allocation2 + $0x18] sm:$0xff] 0.0
    %22 = vst [vmem:[#allocation2 + $0x20] sm:$0xff] 0.0
    %23 = vst [vmem:[#allocation2 + $0x28] sm:$0xff] 0.0
    %24 = vst [vmem:[#allocation2 + $0x30] sm:$0xff] 0.0
    %25 = vst [vmem:[#allocation2 + $0x38] sm:$0xff] 0.0
  $region17: #{fedsage_plus_forward.24} parent=0 // pred_fallthru
    _
  %v26 = vld [vmem:[#allocation2] sm:$0xff]
  %v27 = vld [vmem:[#allocation2 + $0x8] sm:$0xff]
  %v28 = vld [vmem:[#allocation2 + $0x10] sm:$0xff]
  %v29 = vld [vmem:[#allocation2 + $0x18] sm:$0xff]
  %v30 = vld [vmem:[#allocation2 + $0x20] sm:$0xff]
  %v31 = vld [vmem:[#allocation2 + $0x28] sm:$0xff]
  %v32 = vld [vmem:[#allocation2 + $0x30] sm:$0xff]
  %v33 = vld [vmem:[#allocation2 + $0x38] sm:$0xff]
  %v34 = vld [vmem:[%s0] sm:$0xf]
  %v35 = vld [vmem:[%s0 + $0x4] sm:$0xf]
  %v36 = vld [vmem:[%s0 + $0x8] sm:$0xf]
  %v37 = vld [vmem:[%s0 + $0xc] sm:$0xf]
  %v38 = vld [vmem:[%s0 + $0x10] sm:$0xf]
  %v39 = vld [vmem:[%s0 + $0x14] sm:$0xf]
  %v40 = vld [vmem:[%s0 + $0x18] sm:$0xf]
  %v41 = vld [vmem:[%s0 + $0x1c] sm:$0xf]
  %v42 = vld [vmem:[%s1] sm:$0xf]
  %v43 = vld [vmem:[%s1 + $0x4] sm:$0xf]
  %v44 = vld [vmem:[%s1 + $0x8] sm:$0xf]
  %v45 = vld [vmem:[%s1 + $0xc] sm:$0xf]
  %v46 = vld [vmem:[%s1 + $0x10] sm:$0xf]
  %v47 = vld [vmem:[%s1 + $0x14] sm:$0xf]
  %v48 = vld [vmem:[%s1 + $0x18] sm:$0xf]
  %v49 = vld [vmem:[%s1 + $0x1c] sm:$0xf]
  %v50 = vld [vmem:[%s1 + $0x20] sm:$0xf]
  %v51 = vld [vmem:[%s1 + $0x24] sm:$0xf]
  %v52 = vld [vmem:[%s1 + $0x28] sm:$0xf]
  %v53 = vld [vmem:[%s1 + $0x2c] sm:$0xf]
  %v54 = vld [vmem:[%s1 + $0x30] sm:$0xf]
  %v55 = vld [vmem:[%s1 + $0x34] sm:$0xf]
  %v56 = vld [vmem:[%s1 + $0x38] sm:$0xf]
  %v57 = vld [vmem:[%s1 + $0x3c] sm:$0xf]
  %v66 = vunpack.c.l.b16 %v34
  %v67 = vunpack.c.l.b16 %v35
  %v68 = vunpack.c.l.b16 %v36
  %v69 = vunpack.c.l.b16 %v37
  %v70 = vunpack.c.l.b16 %v38
  %v71 = vunpack.c.l.b16 %v39
  %v72 = vunpack.c.l.b16 %v40
  %v73 = vunpack.c.l.b16 %v41
  %v74 = vpack.c.b16 %v67, %v66
  %v75 = vpack.c.b16 %v69, %v68
  %v76 = vpack.c.b16 %v71, %v70
  %v77 = vpack.c.b16 %v73, %v72
  %v98 = vunpack.c.l.b16 %v42
  %v99 = vunpack.c.l.b16 %v43
  %v100 = vunpack.c.l.b16 %v44
  %v101 = vunpack.c.l.b16 %v45
  %v102 = vunpack.c.l.b16 %v46
  %v103 = vunpack.c.l.b16 %v47
  %v104 = vunpack.c.l.b16 %v48
  %v105 = vunpack.c.l.b16 %v49
  %v106 = vunpack.c.l.b16 %v50
  %v107 = vunpack.c.l.b16 %v51
  %v108 = vunpack.c.l.b16 %v52
  %v109 = vunpack.c.l.b16 %v53
  %v110 = vunpack.c.l.b16 %v54
  %v111 = vunpack.c.l.b16 %v55
  %v112 = vunpack.c.l.b16 %v56
  %v113 = vunpack.c.l.b16 %v57
  %v114 = vpack.c.b16 %v99, %v98
  %v115 = vpack.c.b16 %v101, %v100
  %v116 = vpack.c.b16 %v103, %v102
  %v117 = vpack.c.b16 %v105, %v104
  %v118 = vpack.c.b16 %v107, %v106
  %v119 = vpack.c.b16 %v109, %v108
  %v120 = vpack.c.b16 %v111, %v110
  %v121 = vpack.c.b16 %v113, %v112
  %130 = vmatpush.bf16.msra.mxu0 %v121
  %131 = vmatpush.bf16.msra.mxu0 %v120
  %132 = vmatpush.bf16.msra.mxu0 %v119
  %133 = vmatpush.bf16.msra.mxu0 %v118
  %134 = vmatpush.bf16.msra.mxu0 %v117
  %135 = vmatpush.bf16.msra.mxu0 %v116
  %136 = vmatpush.bf16.msra.mxu0 %v115
  %137 = vmatpush.bf16.msra.mxu0 %v114
  %138 = vmatmul.bf16.gmra.mxu0 %v74
  %v139 = vpop.f32.mrf.mxu0
  %v140 = vadd.f32 0.0, %v139
  %v141 = vpop.f32.mrf.mxu0
  %v142 = vadd.f32 0.0, %v141
  %143 = vmatmul.bf16.gmra.mxu0 %v75
  %v144 = vpop.f32.mrf.mxu0
  %v145 = vadd.f32 0.0, %v144
  %v146 = vpop.f32.mrf.mxu0
  %v147 = vadd.f32 0.0, %v146
  %148 = vmatmul.bf16.gmra.mxu0 %v76
  %v149 = vpop.f32.mrf.mxu0
  %v150 = vadd.f32 0.0, %v149
  %v151 = vpop.f32.mrf.mxu0
  %v152 = vadd.f32 0.0, %v151
  %153 = vmatmul.bf16.gmra.mxu0 %v77
  %v154 = vpop.f32.mrf.mxu0
  %v155 = vadd.f32 0.0, %v154
  %v156 = vpop.f32.mrf.mxu0
  %v157 = vadd.f32 0.0, %v156
  %158 = vdwg.mxu0
  %v159 = vadd.f32 %v26, %v140
  %v160 = vadd.f32 %v27, %v142
  %v161 = vadd.f32 %v28, %v145
  %v162 = vadd.f32 %v29, %v147
  %v163 = vadd.f32 %v30, %v150
  %v164 = vadd.f32 %v31, %v152
  %v165 = vadd.f32 %v32, %v155
  %v166 = vadd.f32 %v33, %v157
  %167 = vst [vmem:[#allocation2] sm:$0xff] %v159
  %168 = vst [vmem:[#allocation2 + $0x8] sm:$0xff] %v160
  %169 = vst [vmem:[#allocation2 + $0x10] sm:$0xff] %v161
  %170 = vst [vmem:[#allocation2 + $0x18] sm:$0xff] %v162
  %171 = vst [vmem:[#allocation2 + $0x20] sm:$0xff] %v163
  %172 = vst [vmem:[#allocation2 + $0x28] sm:$0xff] %v164
  %173 = vst [vmem:[#allocation2 + $0x30] sm:$0xff] %v165
  %174 = vst [vmem:[#allocation2 + $0x38] sm:$0xff] %v166
  // Predicated region
  $region18: #{fedsage_plus_forward.24} parent=0 // pred_check
    %p175 = pneg %p14
  $region19: #{fedsage_plus_forward.24} parent=0 // pred_check_branch
    %177 = sbr.rel (%p175) target = $region21
  $region20: #{fedsage_plus_forward.24} parent=0 // pred_region
    %v178 = vld [vmem:[#allocation2] sm:$0xff]
    %v179 = vld [vmem:[#allocation2 + $0x8] sm:$0xff]
    %v180 = vld [vmem:[#allocation2 + $0x10] sm:$0xff]
    %v181 = vld [vmem:[#allocation2 + $0x18] sm:$0xff]
    %v182 = vld [vmem:[#allocation2 + $0x20] sm:$0xff]
    %v183 = vld [vmem:[#allocation2 + $0x28] sm:$0xff]
    %v184 = vld [vmem:[#allocation2 + $0x30] sm:$0xff]
    %v185 = vld [vmem:[#allocation2 + $0x38] sm:$0xff]
    %v186 = vld [vmem:[%s2] sm:$0xff]
    %v187 = vld [vmem:[%s2 + $0x8] sm:$0xff]
    %v188 = vld [vmem:[%s2 + $0x10] sm:$0xff]
    %v189 = vld [vmem:[%s2 + $0x18] sm:$0xff]
    %v190 = vld [vmem:[%s2 + $0x20] sm:$0xff]
    %v191 = vld [vmem:[%s2 + $0x28] sm:$0xff]
    %v192 = vld [vmem:[%s2 + $0x30] sm:$0xff]
    %v193 = vld [vmem:[%s2 + $0x38] sm:$0xff]
    %v194 = vadd.f32 %v178, %v186
    %v195 = vadd.f32 %v179, %v187
    %v196 = vadd.f32 %v180, %v188
    %v197 = vadd.f32 %v181, %v189
    %v198 = vadd.f32 %v182, %v190
    %v199 = vadd.f32 %v183, %v191
    %v200 = vadd.f32 %v184, %v192
    %v201 = vadd.f32 %v185, %v193
    %v202 = vmax.f32 %v194, 0.0
    %v203 = vmax.f32 %v195, 0.0
    %v204 = vmax.f32 %v196, 0.0
    %v205 = vmax.f32 %v197, 0.0
    %v206 = vmax.f32 %v198, 0.0
    %v207 = vmax.f32 %v199, 0.0
    %v208 = vmax.f32 %v200, 0.0
    %v209 = vmax.f32 %v201, 0.0
    %210 = vst [vmem:[%s3] sm:$0xff] %v202
    %211 = vst [vmem:[%s3 + $0x8] sm:$0xff] %v203
    %212 = vst [vmem:[%s3 + $0x10] sm:$0xff] %v204
    %213 = vst [vmem:[%s3 + $0x18] sm:$0xff] %v205
    %214 = vst [vmem:[%s3 + $0x20] sm:$0xff] %v206
    %215 = vst [vmem:[%s3 + $0x28] sm:$0xff] %v207
    %216 = vst [vmem:[%s3 + $0x30] sm:$0xff] %v208
    %217 = vst [vmem:[%s3 + $0x38] sm:$0xff] %v209
  $region21: #{fedsage_plus_forward.24} parent=0 // pred_fallthru
    _
  // Predicated region
  $region22: #{fedsage_plus_forward.24} parent=0 // pred_check
    _
  $region23: #{fedsage_plus_forward.24} parent=0 // pred_check_branch
    %219 = sbr.rel (0) target = $region25
  $region24: #{fedsage_plus_forward.24} parent=0 // pred_region
    _
  $region25: #{fedsage_plus_forward.24} parent=0 // pred_fallthru
    _
  // Predicated region
  $region26: #{fedsage_plus_forward.24} parent=0 // pred_check
    _
  $region27: #{fedsage_plus_forward.24} parent=0 // pred_check_branch
    %221 = sbr.rel (0) target = $region29
  $region28: #{fedsage_plus_forward.24} parent=0 // pred_region
    _
  $region29: #{fedsage_plus_forward.24} parent=0 // pred_fallthru
    _

// kernel: fedsage_plus_forward.23
$region0: #{fedsage_plus_forward.23}
  #allocation0 [shape = 'u32[]', space=smem, size = 0x4, offset = 0x4, fixed_abs, tag = 'smem constant byte address 0x4 - core index']
  #allocation1 [shape = 'u32[72,128]{1,0:T(1,128)}', space=vmem, size = 0x9000, scoped, tag = 'internal scratch']
  #allocation2 [shape = 'f32[64,128]{1,0:T(8,128)}', space=vmem, size = 0x8000, scoped, tag = 'scratch operand']
  %s0 = inlined_call_operand.vmem [shape: f32[64,128], index: 0, kind: input, shape index: {}]
  %s1 = inlined_call_operand.vmem [shape: f32[128,128], index: 1, kind: input, shape index: {}]
  %s2 = inlined_call_operand.vmem [shape: f32[1,128], index: 2, kind: input, shape index: {}]
  %s3 = inlined_call_operand.vmem [shape: f32[64,128], index: 3, kind: output, shape index: {}]
  %s4 = sld [smem:[#allocation0]]
  $region30: #{fedsage_plus_forward.23} parent=0
    _
  %s6 = ssub.s32 1, %s4
  %s7 = scalar_select 0, %s6, %s4
  // Predicated region
  $region2: #{fedsage_plus_forward.23} parent=0 // pred_check
    _
  $region3: #{fedsage_plus_forward.23} parent=0 // pred_check_branch
    %9 = sbr.rel (0) target = $region5
  $region4: #{fedsage_plus_forward.23} parent=0 // pred_region
    _
  $region5: #{fedsage_plus_forward.23} parent=0 // pred_fallthru
    _
  // Predicated region
  $region6: #{fedsage_plus_forward.23} parent=0 // pred_check
    _
  $region7: #{fedsage_plus_forward.23} parent=0 // pred_check_branch
    %11 = sbr.rel (0) target = $region9
  $region8: #{fedsage_plus_forward.23} parent=0 // pred_region
    _
  $region9: #{fedsage_plus_forward.23} parent=0 // pred_fallthru
    _
  // Predicated region
  $region10: #{fedsage_plus_forward.23} parent=0 // pred_check
    _
  $region11: #{fedsage_plus_forward.23} parent=0 // pred_check_branch
    %13 = sbr.rel (0) target = $region13
  $region12: #{fedsage_plus_forward.23} parent=0 // pred_region
    _
  $region13: #{fedsage_plus_forward.23} parent=0 // pred_fallthru
    _
  %p14 = scmp.eq.s32.totalorder 0, 0
  // Predicated region
  $region14: #{fedsage_plus_forward.23} parent=0 // pred_check
    %p15 = pneg %p14
  $region15: #{fedsage_plus_forward.23} parent=0 // pred_check_branch
    %17 = sbr.rel (%p15) target = $region17
  $region16: #{fedsage_plus_forward.23} parent=0 // pred_region
    %18 = vst [vmem:[#allocation2] sm:$0xff] 0.0
    %19 = vst [vmem:[#allocation2 + $0x8] sm:$0xff] 0.0
    %20 = vst [vmem:[#allocation2 + $0x10] sm:$0xff] 0.0
    %21 = vst [vmem:[#allocation2 + $0x18] sm:$0xff] 0.0
    %22 = vst [vmem:[#allocation2 + $0x20] sm:$0xff] 0.0
    %23 = vst [vmem:[#allocation2 + $0x28] sm:$0xff] 0.0
    %24 = vst [vmem:[#allocation2 + $0x30] sm:$0xff] 0.0
    %25 = vst [vmem:[#allocation2 + $0x38] sm:$0xff] 0.0
  $region17: #{fedsage_plus_forward.23} parent=0 // pred_fallthru
    _
  %v26 = vld [vmem:[#allocation2] sm:$0xff]
  %v27 = vld [vmem:[#allocation2 + $0x8] sm:$0xff]
  %v28 = vld [vmem:[#allocation2 + $0x10] sm:$0xff]
  %v29 = vld [vmem:[#allocation2 + $0x18] sm:$0xff]
  %v30 = vld [vmem:[#allocation2 + $0x20] sm:$0xff]
  %v31 = vld [vmem:[#allocation2 + $0x28] sm:$0xff]
  %v32 = vld [vmem:[#allocation2 + $0x30] sm:$0xff]
  %v33 = vld [vmem:[#allocation2 + $0x38] sm:$0xff]
  %v34 = vld [vmem:[%s0] sm:$0xff]
  %v35 = vld [vmem:[%s0 + $0x8] sm:$0xff]
  %v36 = vld [vmem:[%s0 + $0x10] sm:$0xff]
  %v37 = vld [vmem:[%s0 + $0x18] sm:$0xff]
  %v38 = vld [vmem:[%s0 + $0x20] sm:$0xff]
  %v39 = vld [vmem:[%s0 + $0x28] sm:$0xff]
  %v40 = vld [vmem:[%s0 + $0x30] sm:$0xff]
  %v41 = vld [vmem:[%s0 + $0x38] sm:$0xff]
  %v42 = vld [vmem:[%s1] sm:$0xff]
  %v43 = vld [vmem:[%s1 + $0x8] sm:$0xff]
  %v44 = vld [vmem:[%s1 + $0x10] sm:$0xff]
  %v45 = vld [vmem:[%s1 + $0x18] sm:$0xff]
  %v46 = vld [vmem:[%s1 + $0x20] sm:$0xff]
  %v47 = vld [vmem:[%s1 + $0x28] sm:$0xff]
  %v48 = vld [vmem:[%s1 + $0x30] sm:$0xff]
  %v49 = vld [vmem:[%s1 + $0x38] sm:$0xff]
  %v50 = vld [vmem:[%s1 + $0x40] sm:$0xff]
  %v51 = vld [vmem:[%s1 + $0x48] sm:$0xff]
  %v52 = vld [vmem:[%s1 + $0x50] sm:$0xff]
  %v53 = vld [vmem:[%s1 + $0x58] sm:$0xff]
  %v54 = vld [vmem:[%s1 + $0x60] sm:$0xff]
  %v55 = vld [vmem:[%s1 + $0x68] sm:$0xff]
  %v56 = vld [vmem:[%s1 + $0x70] sm:$0xff]
  %v57 = vld [vmem:[%s1 + $0x78] sm:$0xff]
  %58 = vmatpush.msra.mxu0 %v57
  %59 = vmatpush.msra.mxu0 %v56
  %60 = vmatpush.msra.mxu0 %v55
  %61 = vmatpush.msra.mxu0 %v54
  %62 = vmatpush.msra.mxu0 %v53
  %63 = vmatpush.msra.mxu0 %v52
  %64 = vmatpush.msra.mxu0 %v51
  %65 = vmatpush.msra.mxu0 %v50
  %66 = vmatpush.msra.mxu0 %v49
  %67 = vmatpush.msra.mxu0 %v48
  %68 = vmatpush.msra.mxu0 %v47
  %69 = vmatpush.msra.mxu0 %v46
  %70 = vmatpush.msra.mxu0 %v45
  %71 = vmatpush.msra.mxu0 %v44
  %72 = vmatpush.msra.mxu0 %v43
  %73 = vmatpush.msra.mxu0 %v42
  %74 = vmatmul.f32.gmra.mxu0 %v34
  %v75 = vpop.f32.mrf.mxu0
  %v76 = vadd.f32 0.0, %v75
  %77 = vmatmul.f32.gmra.mxu0 %v35
  %v78 = vpop.f32.mrf.mxu0
  %v79 = vadd.f32 0.0, %v78
  %80 = vmatmul.f32.gmra.mxu0 %v36
  %v81 = vpop.f32.mrf.mxu0
  %v82 = vadd.f32 0.0, %v81
  %83 = vmatmul.f32.gmra.mxu0 %v37
  %v84 = vpop.f32.mrf.mxu0
  %v85 = vadd.f32 0.0, %v84
  %86 = vmatmul.f32.gmra.mxu0 %v38
  %v87 = vpop.f32.mrf.mxu0
  %v88 = vadd.f32 0.0, %v87
  %89 = vmatmul.f32.gmra.mxu0 %v39
  %v90 = vpop.f32.mrf.mxu0
  %v91 = vadd.f32 0.0, %v90
  %92 = vmatmul.f32.gmra.mxu0 %v40
  %v93 = vpop.f32.mrf.mxu0
  %v94 = vadd.f32 0.0, %v93
  %95 = vmatmul.f32.gmra.mxu0 %v41
  %v96 = vpop.f32.mrf.mxu0
  %v97 = vadd.f32 0.0, %v96
  %98 = vdwg.mxu0
  %v99 = vadd.f32 %v26, %v76
  %v100 = vadd.f32 %v27, %v79
  %v101 = vadd.f32 %v28, %v82
  %v102 = vadd.f32 %v29, %v85
  %v103 = vadd.f32 %v30, %v88
  %v104 = vadd.f32 %v31, %v91
  %v105 = vadd.f32 %v32, %v94
  %v106 = vadd.f32 %v33, %v97
  %107 = vst [vmem:[#allocation2] sm:$0xff] %v99
  %108 = vst [vmem:[#allocation2 + $0x8] sm:$0xff] %v100
  %109 = vst [vmem:[#allocation2 + $0x10] sm:$0xff] %v101
  %110 = vst [vmem:[#allocation2 + $0x18] sm:$0xff] %v102
  %111 = vst [vmem:[#allocation2 + $0x20] sm:$0xff] %v103
  %112 = vst [vmem:[#allocation2 + $0x28] sm:$0xff] %v104
  %113 = vst [vmem:[#allocation2 + $0x30] sm:$0xff] %v105
  %114 = vst [vmem:[#allocation2 + $0x38] sm:$0xff] %v106
  // Predicated region
  $region18: #{fedsage_plus_forward.23} parent=0 // pred_check
    %p115 = pneg %p14
  $region19: #{fedsage_plus_forward.23} parent=0 // pred_check_branch
    %117 = sbr.rel (%p115) target = $region21
  $region20: #{fedsage_plus_forward.23} parent=0 // pred_region
    %v118 = vld [vmem:[#allocation2] sm:$0xff]
    %v119 = vld [vmem:[#allocation2 + $0x8] sm:$0xff]
    %v120 = vld [vmem:[#allocation2 + $0x10] sm:$0xff]
    %v121 = vld [vmem:[#allocation2 + $0x18] sm:$0xff]
    %v122 = vld [vmem:[#allocation2 + $0x20] sm:$0xff]
    %v123 = vld [vmem:[#allocation2 + $0x28] sm:$0xff]
    %v124 = vld [vmem:[#allocation2 + $0x30] sm:$0xff]
    %v125 = vld [vmem:[#allocation2 + $0x38] sm:$0xff]
    %v126 = vld [vmem:[%s2] sm:$0x1]
    %v128 = vperm.slane %v126, 0
    %v130 = vadd.f32 %v118, %v128
    %v131 = vadd.f32 %v119, %v128
    %v132 = vadd.f32 %v120, %v128
    %v133 = vadd.f32 %v121, %v128
    %v134 = vadd.f32 %v122, %v128
    %v135 = vadd.f32 %v123, %v128
    %v136 = vadd.f32 %v124, %v128
    %v137 = vadd.f32 %v125, %v128
    %138 = vst [vmem:[%s3] sm:$0xff] %v130
    %139 = vst [vmem:[%s3 + $0x8] sm:$0xff] %v131
    %140 = vst [vmem:[%s3 + $0x10] sm:$0xff] %v132
    %141 = vst [vmem:[%s3 + $0x18] sm:$0xff] %v133
    %142 = vst [vmem:[%s3 + $0x20] sm:$0xff] %v134
    %143 = vst [vmem:[%s3 + $0x28] sm:$0xff] %v135
    %144 = vst [vmem:[%s3 + $0x30] sm:$0xff] %v136
    %145 = vst [vmem:[%s3 + $0x38] sm:$0xff] %v137
  $region21: #{fedsage_plus_forward.23} parent=0 // pred_fallthru
    _
  // Predicated region
  $region22: #{fedsage_plus_forward.23} parent=0 // pred_check
    _
  $region23: #{fedsage_plus_forward.23} parent=0 // pred_check_branch
    %147 = sbr.rel (0) target = $region25
  $region24: #{fedsage_plus_forward.23} parent=0 // pred_region
    _
  $region25: #{fedsage_plus_forward.23} parent=0 // pred_fallthru
    _
  // Predicated region
  $region26: #{fedsage_plus_forward.23} parent=0 // pred_check
    _
  $region27: #{fedsage_plus_forward.23} parent=0 // pred_check_branch
    %149 = sbr.rel (0) target = $region29
  $region28: #{fedsage_plus_forward.23} parent=0 // pred_region
    _
  $region29: #{fedsage_plus_forward.23} parent=0 // pred_fallthru
    _

// kernel: fedsage_plus_forward.21
$region0: #{fedsage_plus_forward.21}
  #allocation0 [shape = 'u32[]', space=smem, size = 0x4, offset = 0x4, fixed_abs, tag = 'smem constant byte address 0x4 - core index']
  #allocation1 [shape = 'u32[72,128]{1,0:T(1,128)}', space=vmem, size = 0x9000, scoped, tag = 'internal scratch']
  %s0 = inlined_call_operand.vmem [shape: f32[16,128], index: 0, kind: input, shape index: {}]
  %s1 = inlined_call_operand.vmem [shape: f32[16,128], index: 1, kind: input, shape index: {}]
  %s2 = inlined_call_operand.vmem [shape: f32[128,256], index: 2, kind: input, shape index: {}]
  %s3 = inlined_call_operand.vmem [shape: f32[1,256], index: 3, kind: input, shape index: {}]
  %s4 = inlined_call_operand.vmem [shape: f32[256,2048], index: 4, kind: input, shape index: {}]
  %s5 = inlined_call_operand.vmem [shape: f32[1,2048], index: 5, kind: input, shape index: {}]
  %s6 = inlined_call_operand.vmem [shape: f32[2048,128], index: 6, kind: input, shape index: {}]
  %s7 = inlined_call_operand.vmem [shape: f32[1,128], index: 7, kind: input, shape index: {}]
  %s8 = inlined_call_operand.vmem [shape: f32[16,128], index: 8, kind: output, shape index: {}]
  %s9 = sld [smem:[#allocation0]]
  $region42: #{fedsage_plus_forward.21} parent=0
    _
  %s11 = ssub.s32 1, %s9
  %s12 = scalar_select 0, %s11, %s9
  // Predicated region
  $region2: #{fedsage_plus_forward.21} parent=0 // pred_check
    _
  $region3: #{fedsage_plus_forward.21} parent=0 // pred_check_branch
    %14 = sbr.rel (0) target = $region5
  $region4: #{fedsage_plus_forward.21} parent=0 // pred_region
    _
  $region5: #{fedsage_plus_forward.21} parent=0 // pred_fallthru
    _
  // Predicated region
  $region6: #{fedsage_plus_forward.21} parent=0 // pred_check
    _
  $region7: #{fedsage_plus_forward.21} parent=0 // pred_check_branch
    %16 = sbr.rel (0) target = $region9
  $region8: #{fedsage_plus_forward.21} parent=0 // pred_region
    _
  $region9: #{fedsage_plus_forward.21} parent=0 // pred_fallthru
    _
  // Predicated region
  $region10: #{fedsage_plus_forward.21} parent=0 // pred_check
    _
  $region11: #{fedsage_plus_forward.21} parent=0 // pred_check_branch
    %18 = sbr.rel (0) target = $region13
  $region12: #{fedsage_plus_forward.21} parent=0 // pred_region
    _
  $region13: #{fedsage_plus_forward.21} parent=0 // pred_fallthru
    _
  // Predicated region
  $region14: #{fedsage_plus_forward.21} parent=0 // pred_check
    _
  $region15: #{fedsage_plus_forward.21} parent=0 // pred_check_branch
    %20 = sbr.rel (0) target = $region17
  $region16: #{fedsage_plus_forward.21} parent=0 // pred_region
    _
  $region17: #{fedsage_plus_forward.21} parent=0 // pred_fallthru
    _
  // Predicated region
  $region18: #{fedsage_plus_forward.21} parent=0 // pred_check
    _
  $region19: #{fedsage_plus_forward.21} parent=0 // pred_check_branch
    %22 = sbr.rel (0) target = $region21
  $region20: #{fedsage_plus_forward.21} parent=0 // pred_region
    _
  $region21: #{fedsage_plus_forward.21} parent=0 // pred_fallthru
    _
  // Predicated region
  $region22: #{fedsage_plus_forward.21} parent=0 // pred_check
    _
  $region23: #{fedsage_plus_forward.21} parent=0 // pred_check_branch
    %24 = sbr.rel (0) target = $region25
  $region24: #{fedsage_plus_forward.21} parent=0 // pred_region
    _
  $region25: #{fedsage_plus_forward.21} parent=0 // pred_fallthru
    _
  // Predicated region
  $region26: #{fedsage_plus_forward.21} parent=0 // pred_check
    _
  $region27: #{fedsage_plus_forward.21} parent=0 // pred_check_branch
    %26 = sbr.rel (0) target = $region29
  $region28: #{fedsage_plus_forward.21} parent=0 // pred_region
    _
  $region29: #{fedsage_plus_forward.21} parent=0 // pred_fallthru
    _
  // Predicated region
  $region30: #{fedsage_plus_forward.21} parent=0 // pred_check
    _
  $region31: #{fedsage_plus_forward.21} parent=0 // pred_check_branch
    %28 = sbr.rel (0) target = $region33
  $region32: #{fedsage_plus_forward.21} parent=0 // pred_region
    _
  $region33: #{fedsage_plus_forward.21} parent=0 // pred_fallthru
    _
  %v29 = vld [vmem:[%s0] sm:$0xff]
  %v30 = vld [vmem:[%s0 + $0x8] sm:$0xff]
  %v31 = vld [vmem:[%s1] sm:$0xff]
  %v32 = vld [vmem:[%s1 + $0x8] sm:$0xff]
  %v33 = vadd.f32 %v29, %v31
  %v34 = vadd.f32 %v30, %v32
  %v35 = vld [vmem:[%s2] sm:$0xff]
  %v36 = vld [vmem:[%s2 + $0x8] sm:$0xff]
  %v37 = vld [vmem:[%s2 + $0x10] sm:$0xff]
  %v38 = vld [vmem:[%s2 + $0x18] sm:$0xff]
  %v39 = vld [vmem:[%s2 + $0x20] sm:$0xff]
  %v40 = vld [vmem:[%s2 + $0x28] sm:$0xff]
  %v41 = vld [vmem:[%s2 + $0x30] sm:$0xff]
  %v42 = vld [vmem:[%s2 + $0x38] sm:$0xff]
  %v43 = vld [vmem:[%s2 + $0x40] sm:$0xff]
  %v44 = vld [vmem:[%s2 + $0x48] sm:$0xff]
  %v45 = vld [vmem:[%s2 + $0x50] sm:$0xff]
  %v46 = vld [vmem:[%s2 + $0x58] sm:$0xff]
  %v47 = vld [vmem:[%s2 + $0x60] sm:$0xff]
  %v48 = vld [vmem:[%s2 + $0x68] sm:$0xff]
  %v49 = vld [vmem:[%s2 + $0x70] sm:$0xff]
  %v50 = vld [vmem:[%s2 + $0x78] sm:$0xff]
  %v51 = vld [vmem:[%s2 + $0x80] sm:$0xff]
  %v52 = vld [vmem:[%s2 + $0x88] sm:$0xff]
  %v53 = vld [vmem:[%s2 + $0x90] sm:$0xff]
  %v54 = vld [vmem:[%s2 + $0x98] sm:$0xff]
  %v55 = vld [vmem:[%s2 + $0xa0] sm:$0xff]
  %v56 = vld [vmem:[%s2 + $0xa8] sm:$0xff]
  %v57 = vld [vmem:[%s2 + $0xb0] sm:$0xff]
  %v58 = vld [vmem:[%s2 + $0xb8] sm:$0xff]
  %v59 = vld [vmem:[%s2 + $0xc0] sm:$0xff]
  %v60 = vld [vmem:[%s2 + $0xc8] sm:$0xff]
  %v61 = vld [vmem:[%s2 + $0xd0] sm:$0xff]
  %v62 = vld [vmem:[%s2 + $0xd8] sm:$0xff]
  %v63 = vld [vmem:[%s2 + $0xe0] sm:$0xff]
  %v64 = vld [vmem:[%s2 + $0xe8] sm:$0xff]
  %v65 = vld [vmem:[%s2 + $0xf0] sm:$0xff]
  %v66 = vld [vmem:[%s2 + $0xf8] sm:$0xff]
  %v67 = vld [vmem:[%s3] sm:$0x3]
  %v69 = vperm.slane %v67, 0
  %v70 = vperm.slane %v67, 1
  %73 = vmatpush.msra.mxu0 %v65
  %74 = vmatpush.msra.mxu0 %v63
  %75 = vmatpush.msra.mxu0 %v61
  %76 = vmatpush.msra.mxu0 %v59
  %77 = vmatpush.msra.mxu0 %v57
  %78 = vmatpush.msra.mxu0 %v55
  %79 = vmatpush.msra.mxu0 %v53
  %80 = vmatpush.msra.mxu0 %v51
  %81 = vmatpush.msra.mxu0 %v49
  %82 = vmatpush.msra.mxu0 %v47
  %83 = vmatpush.msra.mxu0 %v45
  %84 = vmatpush.msra.mxu0 %v43
  %85 = vmatpush.msra.mxu0 %v41
  %86 = vmatpush.msra.mxu0 %v39
  %87 = vmatpush.msra.mxu0 %v37
  %88 = vmatpush.msra.mxu0 %v35
  %89 = vmatmul.f32.gmra.mxu0 %v33
  %v90 = vpop.f32.mrf.mxu0
  %v91 = vadd.f32 %v69, %v90
  %92 = vmatmul.f32.gmra.mxu0 %v34
  %v93 = vpop.f32.mrf.mxu0
  %v94 = vadd.f32 %v69, %v93
  %95 = vdwg.mxu0
  %96 = vmatpush.msra.mxu0 %v66
  %97 = vmatpush.msra.mxu0 %v64
  %98 = vmatpush.msra.mxu0 %v62
  %99 = vmatpush.msra.mxu0 %v60
  %100 = vmatpush.msra.mxu0 %v58
  %101 = vmatpush.msra.mxu0 %v56
  %102 = vmatpush.msra.mxu0 %v54
  %103 = vmatpush.msra.mxu0 %v52
  %104 = vmatpush.msra.mxu0 %v50
  %105 = vmatpush.msra.mxu0 %v48
  %106 = vmatpush.msra.mxu0 %v46
  %107 = vmatpush.msra.mxu0 %v44
  %108 = vmatpush.msra.mxu0 %v42
  %109 = vmatpush.msra.mxu0 %v40
  %110 = vmatpush.msra.mxu0 %v38
  %111 = vmatpush.msra.mxu0 %v36
  %112 = vmatmul.f32.gmra.mxu0 %v33
  %v113 = vpop.f32.mrf.mxu0
  %v114 = vadd.f32 %v70, %v113
  %115 = vmatmul.f32.gmra.mxu0 %v34
  %v116 = vpop.f32.mrf.mxu0
  %v117 = vadd.f32 %v70, %v116
  %118 = vdwg.mxu0
  %v119 = vmax.f32 %v91, 0.0
  %v120 = vmax.f32 %v114, 0.0
  %v121 = vmax.f32 %v94, 0.0
  %v122 = vmax.f32 %v117, 0.0
  %v123 = vld [vmem:[%s4] sm:$0xff]
  %v124 = vld [vmem:[%s4 + $0x8] sm:$0xff]
  %v125 = vld [vmem:[%s4 + $0x10] sm:$0xff]
  %v126 = vld [vmem:[%s4 + $0x18] sm:$0xff]
  %v127 = vld [vmem:[%s4 + $0x20] sm:$0xff]
  %v128 = vld [vmem:[%s4 + $0x28] sm:$0xff]
  %v129 = vld [vmem:[%s4 + $0x30] sm:$0xff]
  %v130 = vld [vmem:[%s4 + $0x38] sm:$0xff]
  %v131 = vld [vmem:[%s4 + $0x40] sm:$0xff]
  %v132 = vld [vmem:[%s4 + $0x48] sm:$0xff]
  %v133 = vld [vmem:[%s4 + $0x50] sm:$0xff]
  %v134 = vld [vmem:[%s4 + $0x58] sm:$0xff]
  %v135 = vld [vmem:[%s4 + $0x60] sm:$0xff]
  %v136 = vld [vmem:[%s4 + $0x68] sm:$0xff]
  %v137 = vld [vmem:[%s4 + $0x70] sm:$0xff]
  %v138 = vld [vmem:[%s4 + $0x78] sm:$0xff]
  %v139 = vld [vmem:[%s4 + $0x80] sm:$0xff]
  %v140 = vld [vmem:[%s4 + $0x88] sm:$0xff]
  %v141 = vld [vmem:[%s4 + $0x90] sm:$0xff]
  %v142 = vld [vmem:[%s4 + $0x98] sm:$0xff]
  %v143 = vld [vmem:[%s4 + $0xa0] sm:$0xff]
  %v144 = vld [vmem:[%s4 + $0xa8] sm:$0xff]
  %v145 = vld [vmem:[%s4 + $0xb0] sm:$0xff]
  %v146 = vld [vmem:[%s4 + $0xb8] sm:$0xff]
  %v147 = vld [vmem:[%s4 + $0xc0] sm:$0xff]
  %v148 = vld [vmem:[%s4 + $0xc8] sm:$0xff]
  %v149 = vld [vmem:[%s4 + $0xd0] sm:$0xff]
  %v150 = vld [vmem:[%s4 + $0xd8] sm:$0xff]
  %v151 = vld [vmem:[%s4 + $0xe0] sm:$0xff]
  %v152 = vld [vmem:[%s4 + $0xe8] sm:$0xff]
  %v153 = vld [vmem:[%s4 + $0xf0] sm:$0xff]
  %v154 = vld [vmem:[%s4 + $0xf8] sm:$0xff]
  %v155 = vld [vmem:[%s4 + $0x100] sm:$0xff]
  %v156 = vld [vmem:[%s4 + $0x108] sm:$0xff]
  %v157 = vld [vmem:[%s4 + $0x110] sm:$0xff]
  %v158 = vld [vmem:[%s4 + $0x118] sm:$0xff]
  %v159 = vld [vmem:[%s4 + $0x120] sm:$0xff]
  %v160 = vld [vmem:[%s4 + $0x128] sm:$0xff]
  %v161 = vld [vmem:[%s4 + $0x130] sm:$0xff]
  %v162 = vld [vmem:[%s4 + $0x138] sm:$0xff]
  %v163 = vld [vmem:[%s4 + $0x140] sm:$0xff]
  %v164 = vld [vmem:[%s4 + $0x148] sm:$0xff]
  %v165 = vld [vmem:[%s4 + $0x150] sm:$0xff]
  %v166 = vld [vmem:[%s4 + $0x158] sm:$0xff]
  %v167 = vld [vmem:[%s4 + $0x160] sm:$0xff]
  %v168 = vld [vmem:[%s4 + $0x168] sm:$0xff]
  %v169 = vld [vmem:[%s4 + $0x170] sm:$0xff]
  %v170 = vld [vmem:[%s4 + $0x178] sm:$0xff]
  %v171 = vld [vmem:[%s4 + $0x180] sm:$0xff]
  %v172 = vld [vmem:[%s4 + $0x188] sm:$0xff]
  %v173 = vld [vmem:[%s4 + $0x190] sm:$0xff]
  %v174 = vld [vmem:[%s4 + $0x198] sm:$0xff]
  %v175 = vld [vmem:[%s4 + $0x1a0] sm:$0xff]
  %v176 = vld [vmem:[%s4 + $0x1a8] sm:$0xff]
  %v177 = vld [vmem:[%s4 + $0x1b0] sm:$0xff]
  %v178 = vld [vmem:[%s4 + $0x1b8] sm:$0xff]
  %v179 = vld [vmem:[%s4 + $0x1c0] sm:$0xff]
  %v180 = vld [vmem:[%s4 + $0x1c8] sm:$0xff]
  %v181 = vld [vmem:[%s4 + $0x1d0] sm:$0xff]
  %v182 = vld [vmem:[%s4 + $0x1d8] sm:$0xff]
  %v183 = vld [vmem:[%s4 + $0x1e0] sm:$0xff]
  %v184 = vld [vmem:[%s4 + $0x1e8] sm:$0xff]
  %v185 = vld [vmem:[%s4 + $0x1f0] sm:$0xff]
  %v186 = vld [vmem:[%s4 + $0x1f8] sm:$0xff]
  %v187 = vld [vmem:[%s4 + $0x200] sm:$0xff]
  %v188 = vld [vmem:[%s4 + $0x208] sm:$0xff]
  %v189 = vld [vmem:[%s4 + $0x210] sm:$0xff]
  %v190 = vld [vmem:[%s4 + $0x218] sm:$0xff]
  %v191 = vld [vmem:[%s4 + $0x220] sm:$0xff]
  %v192 = vld [vmem:[%s4 + $0x228] sm:$0xff]
  %v193 = vld [vmem:[%s4 + $0x230] sm:$0xff]
  %v194 = vld [vmem:[%s4 + $0x238] sm:$0xff]
  %v195 = vld [vmem:[%s4 + $0x240] sm:$0xff]
  %v196 = vld [vmem:[%s4 + $0x248] sm:$0xff]
  %v197 = vld [vmem:[%s4 + $0x250] sm:$0xff]
  %v198 = vld [vmem:[%s4 + $0x258] sm:$0xff]
  %v199 = vld [vmem:[%s4 + $0x260] sm:$0xff]
  %v200 = vld [vmem:[%s4 + $0x268] sm:$0xff]
  %v201 = vld [vmem:[%s4 + $0x270] sm:$0xff]
  %v202 = vld [vmem:[%s4 + $0x278] sm:$0xff]
  %v203 = vld [vmem:[%s4 + $0x280] sm:$0xff]
  %v204 = vld [vmem:[%s4 + $0x288] sm:$0xff]
  %v205 = vld [vmem:[%s4 + $0x290] sm:$0xff]
  %v206 = vld [vmem:[%s4 + $0x298] sm:$0xff]
  %v207 = vld [vmem:[%s4 + $0x2a0] sm:$0xff]
  %v208 = vld [vmem:[%s4 + $0x2a8] sm:$0xff]
  %v209 = vld [vmem:[%s4 + $0x2b0] sm:$0xff]
  %v210 = vld [vmem:[%s4 + $0x2b8] sm:$0xff]
  %v211 = vld [vmem:[%s4 + $0x2c0] sm:$0xff]
  %v212 = vld [vmem:[%s4 + $0x2c8] sm:$0xff]
  %v213 = vld [vmem:[%s4 + $0x2d0] sm:$0xff]
  %v214 = vld [vmem:[%s4 + $0x2d8] sm:$0xff]
  %v215 = vld [vmem:[%s4 + $0x2e0] sm:$0xff]
  %v216 = vld [vmem:[%s4 + $0x2e8] sm:$0xff]
  %v217 = vld [vmem:[%s4 + $0x2f0] sm:$0xff]
  %v218 = vld [vmem:[%s4 + $0x2f8] sm:$0xff]
  %v219 = vld [vmem:[%s4 + $0x300] sm:$0xff]
  %v220 = vld [vmem:[%s4 + $0x308] sm:$0xff]
  %v221 = vld [vmem:[%s4 + $0x310] sm:$0xff]
  %v222 = vld [vmem:[%s4 + $0x318] sm:$0xff]
  %v223 = vld [vmem:[%s4 + $0x320] sm:$0xff]
  %v224 = vld [vmem:[%s4 + $0x328] sm:$0xff]
  %v225 = vld [vmem:[%s4 + $0x330] sm:$0xff]
  %v226 = vld [vmem:[%s4 + $0x338] sm:$0xff]
  %v227 = vld [vmem:[%s4 + $0x340] sm:$0xff]
  %v228 = vld [vmem:[%s4 + $0x348] sm:$0xff]
  %v229 = vld [vmem:[%s4 + $0x350] sm:$0xff]
  %v230 = vld [vmem:[%s4 + $0x358] sm:$0xff]
  %v231 = vld [vmem:[%s4 + $0x360] sm:$0xff]
  %v232 = vld [vmem:[%s4 + $0x368] sm:$0xff]
  %v233 = vld [vmem:[%s4 + $0x370] sm:$0xff]
  %v234 = vld [vmem:[%s4 + $0x378] sm:$0xff]
  %v235 = vld [vmem:[%s4 + $0x380] sm:$0xff]
  %v236 = vld [vmem:[%s4 + $0x388] sm:$0xff]
  %v237 = vld [vmem:[%s4 + $0x390] sm:$0xff]
  %v238 = vld [vmem:[%s4 + $0x398] sm:$0xff]
  %v239 = vld [vmem:[%s4 + $0x3a0] sm:$0xff]
  %v240 = vld [vmem:[%s4 + $0x3a8] sm:$0xff]
  %v241 = vld [vmem:[%s4 + $0x3b0] sm:$0xff]
  %v242 = vld [vmem:[%s4 + $0x3b8] sm:$0xff]
  %v243 = vld [vmem:[%s4 + $0x3c0] sm:$0xff]
  %v244 = vld [vmem:[%s4 + $0x3c8] sm:$0xff]
  %v245 = vld [vmem:[%s4 + $0x3d0] sm:$0xff]
  %v246 = vld [vmem:[%s4 + $0x3d8] sm:$0xff]
  %v247 = vld [vmem:[%s4 + $0x3e0] sm:$0xff]
  %v248 = vld [vmem:[%s4 + $0x3e8] sm:$0xff]
  %v249 = vld [vmem:[%s4 + $0x3f0] sm:$0xff]
  %v250 = vld [vmem:[%s4 + $0x3f8] sm:$0xff]
  %v251 = vld [vmem:[%s4 + $0x400] sm:$0xff]
  %v252 = vld [vmem:[%s4 + $0x408] sm:$0xff]
  %v253 = vld [vmem:[%s4 + $0x410] sm:$0xff]
  %v254 = vld [vmem:[%s4 + $0x418] sm:$0xff]
  %v255 = vld [vmem:[%s4 + $0x420] sm:$0xff]
  %v256 = vld [vmem:[%s4 + $0x428] sm:$0xff]
  %v257 = vld [vmem:[%s4 + $0x430] sm:$0xff]
  %v258 = vld [vmem:[%s4 + $0x438] sm:$0xff]
  %v259 = vld [vmem:[%s4 + $0x440] sm:$0xff]
  %v260 = vld [vmem:[%s4 + $0x448] sm:$0xff]
  %v261 = vld [vmem:[%s4 + $0x450] sm:$0xff]
  %v262 = vld [vmem:[%s4 + $0x458] sm:$0xff]
  %v263 = vld [vmem:[%s4 + $0x460] sm:$0xff]
  %v264 = vld [vmem:[%s4 + $0x468] sm:$0xff]
  %v265 = vld [vmem:[%s4 + $0x470] sm:$0xff]
  %v266 = vld [vmem:[%s4 + $0x478] sm:$0xff]
  %v267 = vld [vmem:[%s4 + $0x480] sm:$0xff]
  %v268 = vld [vmem:[%s4 + $0x488] sm:$0xff]
  %v269 = vld [vmem:[%s4 + $0x490] sm:$0xff]
  %v270 = vld [vmem:[%s4 + $0x498] sm:$0xff]
  %v271 = vld [vmem:[%s4 + $0x4a0] sm:$0xff]
  %v272 = vld [vmem:[%s4 + $0x4a8] sm:$0xff]
  %v273 = vld [vmem:[%s4 + $0x4b0] sm:$0xff]
  %v274 = vld [vmem:[%s4 + $0x4b8] sm:$0xff]
  %v275 = vld [vmem:[%s4 + $0x4c0] sm:$0xff]
  %v276 = vld [vmem:[%s4 + $0x4c8] sm:$0xff]
  %v277 = vld [vmem:[%s4 + $0x4d0] sm:$0xff]
  %v278 = vld [vmem:[%s4 + $0x4d8] sm:$0xff]
  %v279 = vld [vmem:[%s4 + $0x4e0] sm:$0xff]
  %v280 = vld [vmem:[%s4 + $0x4e8] sm:$0xff]
  %v281 = vld [vmem:[%s4 + $0x4f0] sm:$0xff]
  %v282 = vld [vmem:[%s4 + $0x4f8] sm:$0xff]
  %v283 = vld [vmem:[%s4 + $0x500] sm:$0xff]
  %v284 = vld [vmem:[%s4 + $0x508] sm:$0xff]
  %v285 = vld [vmem:[%s4 + $0x510] sm:$0xff]
  %v286 = vld [vmem:[%s4 + $0x518] sm:$0xff]
  %v287 = vld [vmem:[%s4 + $0x520] sm:$0xff]
  %v288 = vld [vmem:[%s4 + $0x528] sm:$0xff]
  %v289 = vld [vmem:[%s4 + $0x530] sm:$0xff]
  %v290 = vld [vmem:[%s4 + $0x538] sm:$0xff]
  %v291 = vld [vmem:[%s4 + $0x540] sm:$0xff]
  %v292 = vld [vmem:[%s4 + $0x548] sm:$0xff]
  %v293 = vld [vmem:[%s4 + $0x550] sm:$0xff]
  %v294 = vld [vmem:[%s4 + $0x558] sm:$0xff]
  %v295 = vld [vmem:[%s4 + $0x560] sm:$0xff]
  %v296 = vld [vmem:[%s4 + $0x568] sm:$0xff]
  %v297 = vld [vmem:[%s4 + $0x570] sm:$0xff]
  %v298 = vld [vmem:[%s4 + $0x578] sm:$0xff]
  %v299 = vld [vmem:[%s4 + $0x580] sm:$0xff]
  %v300 = vld [vmem:[%s4 + $0x588] sm:$0xff]
  %v301 = vld [vmem:[%s4 + $0x590] sm:$0xff]
  %v302 = vld [vmem:[%s4 + $0x598] sm:$0xff]
  %v303 = vld [vmem:[%s4 + $0x5a0] sm:$0xff]
  %v304 = vld [vmem:[%s4 + $0x5a8] sm:$0xff]
  %v305 = vld [vmem:[%s4 + $0x5b0] sm:$0xff]
  %v306 = vld [vmem:[%s4 + $0x5b8] sm:$0xff]
  %v307 = vld [vmem:[%s4 + $0x5c0] sm:$0xff]
  %v308 = vld [vmem:[%s4 + $0x5c8] sm:$0xff]
  %v309 = vld [vmem:[%s4 + $0x5d0] sm:$0xff]
  %v310 = vld [vmem:[%s4 + $0x5d8] sm:$0xff]
  %v311 = vld [vmem:[%s4 + $0x5e0] sm:$0xff]
  %v312 = vld [vmem:[%s4 + $0x5e8] sm:$0xff]
  %v313 = vld [vmem:[%s4 + $0x5f0] sm:$0xff]
  %v314 = vld [vmem:[%s4 + $0x5f8] sm:$0xff]
  %v315 = vld [vmem:[%s4 + $0x600] sm:$0xff]
  %v316 = vld [vmem:[%s4 + $0x608] sm:$0xff]
  %v317 = vld [vmem:[%s4 + $0x610] sm:$0xff]
  %v318 = vld [vmem:[%s4 + $0x618] sm:$0xff]
  %v319 = vld [vmem:[%s4 + $0x620] sm:$0xff]
  %v320 = vld [vmem:[%s4 + $0x628] sm:$0xff]
  %v321 = vld [vmem:[%s4 + $0x630] sm:$0xff]
  %v322 = vld [vmem:[%s4 + $0x638] sm:$0xff]
  %v323 = vld [vmem:[%s4 + $0x640] sm:$0xff]
  %v324 = vld [vmem:[%s4 + $0x648] sm:$0xff]
  %v325 = vld [vmem:[%s4 + $0x650] sm:$0xff]
  %v326 = vld [vmem:[%s4 + $0x658] sm:$0xff]
  %v327 = vld [vmem:[%s4 + $0x660] sm:$0xff]
  %v328 = vld [vmem:[%s4 + $0x668] sm:$0xff]
  %v329 = vld [vmem:[%s4 + $0x670] sm:$0xff]
  %v330 = vld [vmem:[%s4 + $0x678] sm:$0xff]
  %v331 = vld [vmem:[%s4 + $0x680] sm:$0xff]
  %v332 = vld [vmem:[%s4 + $0x688] sm:$0xff]
  %v333 = vld [vmem:[%s4 + $0x690] sm:$0xff]
  %v334 = vld [vmem:[%s4 + $0x698] sm:$0xff]
  %v335 = vld [vmem:[%s4 + $0x6a0] sm:$0xff]
  %v336 = vld [vmem:[%s4 + $0x6a8] sm:$0xff]
  %v337 = vld [vmem:[%s4 + $0x6b0] sm:$0xff]
  %v338 = vld [vmem:[%s4 + $0x6b8] sm:$0xff]
  %v339 = vld [vmem:[%s4 + $0x6c0] sm:$0xff]
  %v340 = vld [vmem:[%s4 + $0x6c8] sm:$0xff]
  %v341 = vld [vmem:[%s4 + $0x6d0] sm:$0xff]
  %v342 = vld [vmem:[%s4 + $0x6d8] sm:$0xff]
  %v343 = vld [vmem:[%s4 + $0x6e0] sm:$0xff]
  %v344 = vld [vmem:[%s4 + $0x6e8] sm:$0xff]
  %v345 = vld [vmem:[%s4 + $0x6f0] sm:$0xff]
  %v346 = vld [vmem:[%s4 + $0x6f8] sm:$0xff]
  %v347 = vld [vmem:[%s4 + $0x700] sm:$0xff]
  %v348 = vld [vmem:[%s4 + $0x708] sm:$0xff]
  %v349 = vld [vmem:[%s4 + $0x710] sm:$0xff]
  %v350 = vld [vmem:[%s4 + $0x718] sm:$0xff]
  %v351 = vld [vmem:[%s4 + $0x720] sm:$0xff]
  %v352 = vld [vmem:[%s4 + $0x728] sm:$0xff]
  %v353 = vld [vmem:[%s4 + $0x730] sm:$0xff]
  %v354 = vld [vmem:[%s4 + $0x738] sm:$0xff]
  %v355 = vld [vmem:[%s4 + $0x740] sm:$0xff]
  %v356 = vld [vmem:[%s4 + $0x748] sm:$0xff]
  %v357 = vld [vmem:[%s4 + $0x750] sm:$0xff]
  %v358 = vld [vmem:[%s4 + $0x758] sm:$0xff]
  %v359 = vld [vmem:[%s4 + $0x760] sm:$0xff]
  %v360 = vld [vmem:[%s4 + $0x768] sm:$0xff]
  %v361 = vld [vmem:[%s4 + $0x770] sm:$0xff]
  %v362 = vld [vmem:[%s4 + $0x778] sm:$0xff]
  %v363 = vld [vmem:[%s4 + $0x780] sm:$0xff]
  %v364 = vld [vmem:[%s4 + $0x788] sm:$0xff]
  %v365 = vld [vmem:[%s4 + $0x790] sm:$0xff]
  %v366 = vld [vmem:[%s4 + $0x798] sm:$0xff]
  %v367 = vld [vmem:[%s4 + $0x7a0] sm:$0xff]
  %v368 = vld [vmem:[%s4 + $0x7a8] sm:$0xff]
  %v369 = vld [vmem:[%s4 + $0x7b0] sm:$0xff]
  %v370 = vld [vmem:[%s4 + $0x7b8] sm:$0xff]
  %v371 = vld [vmem:[%s4 + $0x7c0] sm:$0xff]
  %v372 = vld [vmem:[%s4 + $0x7c8] sm:$0xff]
  %v373 = vld [vmem:[%s4 + $0x7d0] sm:$0xff]
  %v374 = vld [vmem:[%s4 + $0x7d8] sm:$0xff]
  %v375 = vld [vmem:[%s4 + $0x7e0] sm:$0xff]
  %v376 = vld [vmem:[%s4 + $0x7e8] sm:$0xff]
  %v377 = vld [vmem:[%s4 + $0x7f0] sm:$0xff]
  %v378 = vld [vmem:[%s4 + $0x7f8] sm:$0xff]
  %v379 = vld [vmem:[%s4 + $0x800] sm:$0xff]
  %v380 = vld [vmem:[%s4 + $0x808] sm:$0xff]
  %v381 = vld [vmem:[%s4 + $0x810] sm:$0xff]
  %v382 = vld [vmem:[%s4 + $0x818] sm:$0xff]
  %v383 = vld [vmem:[%s4 + $0x820] sm:$0xff]
  %v384 = vld [vmem:[%s4 + $0x828] sm:$0xff]
  %v385 = vld [vmem:[%s4 + $0x830] sm:$0xff]
  %v386 = vld [vmem:[%s4 + $0x838] sm:$0xff]
  %v387 = vld [vmem:[%s4 + $0x840] sm:$0xff]
  %v388 = vld [vmem:[%s4 + $0x848] sm:$0xff]
  %v389 = vld [vmem:[%s4 + $0x850] sm:$0xff]
  %v390 = vld [vmem:[%s4 + $0x858] sm:$0xff]
  %v391 = vld [vmem:[%s4 + $0x860] sm:$0xff]
  %v392 = vld [vmem:[%s4 + $0x868] sm:$0xff]
  %v393 = vld [vmem:[%s4 + $0x870] sm:$0xff]
  %v394 = vld [vmem:[%s4 + $0x878] sm:$0xff]
  %v395 = vld [vmem:[%s4 + $0x880] sm:$0xff]
  %v396 = vld [vmem:[%s4 + $0x888] sm:$0xff]
  %v397 = vld [vmem:[%s4 + $0x890] sm:$0xff]
  %v398 = vld [vmem:[%s4 + $0x898] sm:$0xff]
  %v399 = vld [vmem:[%s4 + $0x8a0] sm:$0xff]
  %v400 = vld [vmem:[%s4 + $0x8a8] sm:$0xff]
  %v401 = vld [vmem:[%s4 + $0x8b0] sm:$0xff]
  %v402 = vld [vmem:[%s4 + $0x8b8] sm:$0xff]
  %v403 = vld [vmem:[%s4 + $0x8c0] sm:$0xff]
  %v404 = vld [vmem:[%s4 + $0x8c8] sm:$0xff]
  %v405 = vld [vmem:[%s4 + $0x8d0] sm:$0xff]
  %v406 = vld [vmem:[%s4 + $0x8d8] sm:$0xff]
  %v407 = vld [vmem:[%s4 + $0x8e0] sm:$0xff]
  %v408 = vld [vmem:[%s4 + $0x8e8] sm:$0xff]
  %v409 = vld [vmem:[%s4 + $0x8f0] sm:$0xff]
  %v410 = vld [vmem:[%s4 + $0x8f8] sm:$0xff]
  %v411 = vld [vmem:[%s4 + $0x900] sm:$0xff]
  %v412 = vld [vmem:[%s4 + $0x908] sm:$0xff]
  %v413 = vld [vmem:[%s4 + $0x910] sm:$0xff]
  %v414 = vld [vmem:[%s4 + $0x918] sm:$0xff]
  %v415 = vld [vmem:[%s4 + $0x920] sm:$0xff]
  %v416 = vld [vmem:[%s4 + $0x928] sm:$0xff]
  %v417 = vld [vmem:[%s4 + $0x930] sm:$0xff]
  %v418 = vld [vmem:[%s4 + $0x938] sm:$0xff]
  %v419 = vld [vmem:[%s4 + $0x940] sm:$0xff]
  %v420 = vld [vmem:[%s4 + $0x948] sm:$0xff]
  %v421 = vld [vmem:[%s4 + $0x950] sm:$0xff]
  %v422 = vld [vmem:[%s4 + $0x958] sm:$0xff]
  %v423 = vld [vmem:[%s4 + $0x960] sm:$0xff]
  %v424 = vld [vmem:[%s4 + $0x968] sm:$0xff]
  %v425 = vld [vmem:[%s4 + $0x970] sm:$0xff]
  %v426 = vld [vmem:[%s4 + $0x978] sm:$0xff]
  %v427 = vld [vmem:[%s4 + $0x980] sm:$0xff]
  %v428 = vld [vmem:[%s4 + $0x988] sm:$0xff]
  %v429 = vld [vmem:[%s4 + $0x990] sm:$0xff]
  %v430 = vld [vmem:[%s4 + $0x998] sm:$0xff]
  %v431 = vld [vmem:[%s4 + $0x9a0] sm:$0xff]
  %v432 = vld [vmem:[%s4 + $0x9a8] sm:$0xff]
  %v433 = vld [vmem:[%s4 + $0x9b0] sm:$0xff]
  %v434 = vld [vmem:[%s4 + $0x9b8] sm:$0xff]
  %v435 = vld [vmem:[%s4 + $0x9c0] sm:$0xff]
  %v436 = vld [vmem:[%s4 + $0x9c8] sm:$0xff]
  %v437 = vld [vmem:[%s4 + $0x9d0] sm:$0xff]
  %v438 = vld [vmem:[%s4 + $0x9d8] sm:$0xff]
  %v439 = vld [vmem:[%s4 + $0x9e0] sm:$0xff]
  %v440 = vld [vmem:[%s4 + $0x9e8] sm:$0xff]
  %v441 = vld [vmem:[%s4 + $0x9f0] sm:$0xff]
  %v442 = vld [vmem:[%s4 + $0x9f8] sm:$0xff]
  %v443 = vld [vmem:[%s4 + $0xa00] sm:$0xff]
  %v444 = vld [vmem:[%s4 + $0xa08] sm:$0xff]
  %v445 = vld [vmem:[%s4 + $0xa10] sm:$0xff]
  %v446 = vld [vmem:[%s4 + $0xa18] sm:$0xff]
  %v447 = vld [vmem:[%s4 + $0xa20] sm:$0xff]
  %v448 = vld [vmem:[%s4 + $0xa28] sm:$0xff]
  %v449 = vld [vmem:[%s4 + $0xa30] sm:$0xff]
  %v450 = vld [vmem:[%s4 + $0xa38] sm:$0xff]
  %v451 = vld [vmem:[%s4 + $0xa40] sm:$0xff]
  %v452 = vld [vmem:[%s4 + $0xa48] sm:$0xff]
  %v453 = vld [vmem:[%s4 + $0xa50] sm:$0xff]
  %v454 = vld [vmem:[%s4 + $0xa58] sm:$0xff]
  %v455 = vld [vmem:[%s4 + $0xa60] sm:$0xff]
  %v456 = vld [vmem:[%s4 + $0xa68] sm:$0xff]
  %v457 = vld [vmem:[%s4 + $0xa70] sm:$0xff]
  %v458 = vld [vmem:[%s4 + $0xa78] sm:$0xff]
  %v459 = vld [vmem:[%s4 + $0xa80] sm:$0xff]
  %v460 = vld [vmem:[%s4 + $0xa88] sm:$0xff]
  %v461 = vld [vmem:[%s4 + $0xa90] sm:$0xff]
  %v462 = vld [vmem:[%s4 + $0xa98] sm:$0xff]
  %v463 = vld [vmem:[%s4 + $0xaa0] sm:$0xff]
  %v464 = vld [vmem:[%s4 + $0xaa8] sm:$0xff]
  %v465 = vld [vmem:[%s4 + $0xab0] sm:$0xff]
  %v466 = vld [vmem:[%s4 + $0xab8] sm:$0xff]
  %v467 = vld [vmem:[%s4 + $0xac0] sm:$0xff]
  %v468 = vld [vmem:[%s4 + $0xac8] sm:$0xff]
  %v469 = vld [vmem:[%s4 + $0xad0] sm:$0xff]
  %v470 = vld [vmem:[%s4 + $0xad8] sm:$0xff]
  %v471 = vld [vmem:[%s4 + $0xae0] sm:$0xff]
  %v472 = vld [vmem:[%s4 + $0xae8] sm:$0xff]
  %v473 = vld [vmem:[%s4 + $0xaf0] sm:$0xff]
  %v474 = vld [vmem:[%s4 + $0xaf8] sm:$0xff]
  %v475 = vld [vmem:[%s4 + $0xb00] sm:$0xff]
  %v476 = vld [vmem:[%s4 + $0xb08] sm:$0xff]
  %v477 = vld [vmem:[%s4 + $0xb10] sm:$0xff]
  %v478 = vld [vmem:[%s4 + $0xb18] sm:$0xff]
  %v479 = vld [vmem:[%s4 + $0xb20] sm:$0xff]
  %v480 = vld [vmem:[%s4 + $0xb28] sm:$0xff]
  %v481 = vld [vmem:[%s4 + $0xb30] sm:$0xff]
  %v482 = vld [vmem:[%s4 + $0xb38] sm:$0xff]
  %v483 = vld [vmem:[%s4 + $0xb40] sm:$0xff]
  %v484 = vld [vmem:[%s4 + $0xb48] sm:$0xff]
  %v485 = vld [vmem:[%s4 + $0xb50] sm:$0xff]
  %v486 = vld [vmem:[%s4 + $0xb58] sm:$0xff]
  %v487 = vld [vmem:[%s4 + $0xb60] sm:$0xff]
  %v488 = vld [vmem:[%s4 + $0xb68] sm:$0xff]
  %v489 = vld [vmem:[%s4 + $0xb70] sm:$0xff]
  %v490 = vld [vmem:[%s4 + $0xb78] sm:$0xff]
  %v491 = vld [vmem:[%s4 + $0xb80] sm:$0xff]
  %v492 = vld [vmem:[%s4 + $0xb88] sm:$0xff]
  %v493 = vld [vmem:[%s4 + $0xb90] sm:$0xff]
  %v494 = vld [vmem:[%s4 + $0xb98] sm:$0xff]
  %v495 = vld [vmem:[%s4 + $0xba0] sm:$0xff]
  %v496 = vld [vmem:[%s4 + $0xba8] sm:$0xff]
  %v497 = vld [vmem:[%s4 + $0xbb0] sm:$0xff]
  %v498 = vld [vmem:[%s4 + $0xbb8] sm:$0xff]
  %v499 = vld [vmem:[%s4 + $0xbc0] sm:$0xff]
  %v500 = vld [vmem:[%s4 + $0xbc8] sm:$0xff]
  %v501 = vld [vmem:[%s4 + $0xbd0] sm:$0xff]
  %v502 = vld [vmem:[%s4 + $0xbd8] sm:$0xff]
  %v503 = vld [vmem:[%s4 + $0xbe0] sm:$0xff]
  %v504 = vld [vmem:[%s4 + $0xbe8] sm:$0xff]
  %v505 = vld [vmem:[%s4 + $0xbf0] sm:$0xff]
  %v506 = vld [vmem:[%s4 + $0xbf8] sm:$0xff]
  %v507 = vld [vmem:[%s4 + $0xc00] sm:$0xff]
  %v508 = vld [vmem:[%s4 + $0xc08] sm:$0xff]
  %v509 = vld [vmem:[%s4 + $0xc10] sm:$0xff]
  %v510 = vld [vmem:[%s4 + $0xc18] sm:$0xff]
  %v511 = vld [vmem:[%s4 + $0xc20] sm:$0xff]
  %v512 = vld [vmem:[%s4 + $0xc28] sm:$0xff]
  %v513 = vld [vmem:[%s4 + $0xc30] sm:$0xff]
  %v514 = vld [vmem:[%s4 + $0xc38] sm:$0xff]
  %v515 = vld [vmem:[%s4 + $0xc40] sm:$0xff]
  %v516 = vld [vmem:[%s4 + $0xc48] sm:$0xff]
  %v517 = vld [vmem:[%s4 + $0xc50] sm:$0xff]
  %v518 = vld [vmem:[%s4 + $0xc58] sm:$0xff]
  %v519 = vld [vmem:[%s4 + $0xc60] sm:$0xff]
  %v520 = vld [vmem:[%s4 + $0xc68] sm:$0xff]
  %v521 = vld [vmem:[%s4 + $0xc70] sm:$0xff]
  %v522 = vld [vmem:[%s4 + $0xc78] sm:$0xff]
  %v523 = vld [vmem:[%s4 + $0xc80] sm:$0xff]
  %v524 = vld [vmem:[%s4 + $0xc88] sm:$0xff]
  %v525 = vld [vmem:[%s4 + $0xc90] sm:$0xff]
  %v526 = vld [vmem:[%s4 + $0xc98] sm:$0xff]
  %v527 = vld [vmem:[%s4 + $0xca0] sm:$0xff]
  %v528 = vld [vmem:[%s4 + $0xca8] sm:$0xff]
  %v529 = vld [vmem:[%s4 + $0xcb0] sm:$0xff]
  %v530 = vld [vmem:[%s4 + $0xcb8] sm:$0xff]
  %v531 = vld [vmem:[%s4 + $0xcc0] sm:$0xff]
  %v532 = vld [vmem:[%s4 + $0xcc8] sm:$0xff]
  %v533 = vld [vmem:[%s4 + $0xcd0] sm:$0xff]
  %v534 = vld [vmem:[%s4 + $0xcd8] sm:$0xff]
  %v535 = vld [vmem:[%s4 + $0xce0] sm:$0xff]
  %v536 = vld [vmem:[%s4 + $0xce8] sm:$0xff]
  %v537 = vld [vmem:[%s4 + $0xcf0] sm:$0xff]
  %v538 = vld [vmem:[%s4 + $0xcf8] sm:$0xff]
  %v539 = vld [vmem:[%s4 + $0xd00] sm:$0xff]
  %v540 = vld [vmem:[%s4 + $0xd08] sm:$0xff]
  %v541 = vld [vmem:[%s4 + $0xd10] sm:$0xff]
  %v542 = vld [vmem:[%s4 + $0xd18] sm:$0xff]
  %v543 = vld [vmem:[%s4 + $0xd20] sm:$0xff]
  %v544 = vld [vmem:[%s4 + $0xd28] sm:$0xff]
  %v545 = vld [vmem:[%s4 + $0xd30] sm:$0xff]
  %v546 = vld [vmem:[%s4 + $0xd38] sm:$0xff]
  %v547 = vld [vmem:[%s4 + $0xd40] sm:$0xff]
  %v548 = vld [vmem:[%s4 + $0xd48] sm:$0xff]
  %v549 = vld [vmem:[%s4 + $0xd50] sm:$0xff]
  %v550 = vld [vmem:[%s4 + $0xd58] sm:$0xff]
  %v551 = vld [vmem:[%s4 + $0xd60] sm:$0xff]
  %v552 = vld [vmem:[%s4 + $0xd68] sm:$0xff]
  %v553 = vld [vmem:[%s4 + $0xd70] sm:$0xff]
  %v554 = vld [vmem:[%s4 + $0xd78] sm:$0xff]
  %v555 = vld [vmem:[%s4 + $0xd80] sm:$0xff]
  %v556 = vld [vmem:[%s4 + $0xd88] sm:$0xff]
  %v557 = vld [vmem:[%s4 + $0xd90] sm:$0xff]
  %v558 = vld [vmem:[%s4 + $0xd98] sm:$0xff]
  %v559 = vld [vmem:[%s4 + $0xda0] sm:$0xff]
  %v560 = vld [vmem:[%s4 + $0xda8] sm:$0xff]
  %v561 = vld [vmem:[%s4 + $0xdb0] sm:$0xff]
  %v562 = vld [vmem:[%s4 + $0xdb8] sm:$0xff]
  %v563 = vld [vmem:[%s4 + $0xdc0] sm:$0xff]
  %v564 = vld [vmem:[%s4 + $0xdc8] sm:$0xff]
  %v565 = vld [vmem:[%s4 + $0xdd0] sm:$0xff]
  %v566 = vld [vmem:[%s4 + $0xdd8] sm:$0xff]
  %v567 = vld [vmem:[%s4 + $0xde0] sm:$0xff]
  %v568 = vld [vmem:[%s4 + $0xde8] sm:$0xff]
  %v569 = vld [vmem:[%s4 + $0xdf0] sm:$0xff]
  %v570 = vld [vmem:[%s4 + $0xdf8] sm:$0xff]
  %v571 = vld [vmem:[%s4 + $0xe00] sm:$0xff]
  %v572 = vld [vmem:[%s4 + $0xe08] sm:$0xff]
  %v573 = vld [vmem:[%s4 + $0xe10] sm:$0xff]
  %v574 = vld [vmem:[%s4 + $0xe18] sm:$0xff]
  %v575 = vld [vmem:[%s4 + $0xe20] sm:$0xff]
  %v576 = vld [vmem:[%s4 + $0xe28] sm:$0xff]
  %v577 = vld [vmem:[%s4 + $0xe30] sm:$0xff]
  %v578 = vld [vmem:[%s4 + $0xe38] sm:$0xff]
  %v579 = vld [vmem:[%s4 + $0xe40] sm:$0xff]
  %v580 = vld [vmem:[%s4 + $0xe48] sm:$0xff]
  %v581 = vld [vmem:[%s4 + $0xe50] sm:$0xff]
  %v582 = vld [vmem:[%s4 + $0xe58] sm:$0xff]
  %v583 = vld [vmem:[%s4 + $0xe60] sm:$0xff]
  %v584 = vld [vmem:[%s4 + $0xe68] sm:$0xff]
  %v585 = vld [vmem:[%s4 + $0xe70] sm:$0xff]
  %v586 = vld [vmem:[%s4 + $0xe78] sm:$0xff]
  %v587 = vld [vmem:[%s4 + $0xe80] sm:$0xff]
  %v588 = vld [vmem:[%s4 + $0xe88] sm:$0xff]
  %v589 = vld [vmem:[%s4 + $0xe90] sm:$0xff]
  %v590 = vld [vmem:[%s4 + $0xe98] sm:$0xff]
  %v591 = vld [vmem:[%s4 + $0xea0] sm:$0xff]
  %v592 = vld [vmem:[%s4 + $0xea8] sm:$0xff]
  %v593 = vld [vmem:[%s4 + $0xeb0] sm:$0xff]
  %v594 = vld [vmem:[%s4 + $0xeb8] sm:$0xff]
  %v595 = vld [vmem:[%s4 + $0xec0] sm:$0xff]
  %v596 = vld [vmem:[%s4 + $0xec8] sm:$0xff]
  %v597 = vld [vmem:[%s4 + $0xed0] sm:$0xff]
  %v598 = vld [vmem:[%s4 + $0xed8] sm:$0xff]
  %v599 = vld [vmem:[%s4 + $0xee0] sm:$0xff]
  %v600 = vld [vmem:[%s4 + $0xee8] sm:$0xff]
  %v601 = vld [vmem:[%s4 + $0xef0] sm:$0xff]
  %v602 = vld [vmem:[%s4 + $0xef8] sm:$0xff]
  %v603 = vld [vmem:[%s4 + $0xf00] sm:$0xff]
  %v604 = vld [vmem:[%s4 + $0xf08] sm:$0xff]
  %v605 = vld [vmem:[%s4 + $0xf10] sm:$0xff]
  %v606 = vld [vmem:[%s4 + $0xf18] sm:$0xff]
  %v607 = vld [vmem:[%s4 + $0xf20] sm:$0xff]
  %v608 = vld [vmem:[%s4 + $0xf28] sm:$0xff]
  %v609 = vld [vmem:[%s4 + $0xf30] sm:$0xff]
  %v610 = vld [vmem:[%s4 + $0xf38] sm:$0xff]
  %v611 = vld [vmem:[%s4 + $0xf40] sm:$0xff]
  %v612 = vld [vmem:[%s4 + $0xf48] sm:$0xff]
  %v613 = vld [vmem:[%s4 + $0xf50] sm:$0xff]
  %v614 = vld [vmem:[%s4 + $0xf58] sm:$0xff]
  %v615 = vld [vmem:[%s4 + $0xf60] sm:$0xff]
  %v616 = vld [vmem:[%s4 + $0xf68] sm:$0xff]
  %v617 = vld [vmem:[%s4 + $0xf70] sm:$0xff]
  %v618 = vld [vmem:[%s4 + $0xf78] sm:$0xff]
  %v619 = vld [vmem:[%s4 + $0xf80] sm:$0xff]
  %v620 = vld [vmem:[%s4 + $0xf88] sm:$0xff]
  %v621 = vld [vmem:[%s4 + $0xf90] sm:$0xff]
  %v622 = vld [vmem:[%s4 + $0xf98] sm:$0xff]
  %v623 = vld [vmem:[%s4 + $0xfa0] sm:$0xff]
  %v624 = vld [vmem:[%s4 + $0xfa8] sm:$0xff]
  %v625 = vld [vmem:[%s4 + $0xfb0] sm:$0xff]
  %v626 = vld [vmem:[%s4 + $0xfb8] sm:$0xff]
  %v627 = vld [vmem:[%s4 + $0xfc0] sm:$0xff]
  %v628 = vld [vmem:[%s4 + $0xfc8] sm:$0xff]
  %v629 = vld [vmem:[%s4 + $0xfd0] sm:$0xff]
  %v630 = vld [vmem:[%s4 + $0xfd8] sm:$0xff]
  %v631 = vld [vmem:[%s4 + $0xfe0] sm:$0xff]
  %v632 = vld [vmem:[%s4 + $0xfe8] sm:$0xff]
  %v633 = vld [vmem:[%s4 + $0xff0] sm:$0xff]
  %v634 = vld [vmem:[%s4 + $0xff8] sm:$0xff]
  %v635 = vld [vmem:[%s5] sm:$0xff]
  %v636 = vld [vmem:[%s5 + $0x8] sm:$0xff]
  %v639 = vperm.slane %v635, 0
  %v640 = vperm.slane %v635, 1
  %v641 = vperm.slane %v635, 2
  %v642 = vperm.slane %v635, 3
  %v643 = vperm.slane %v635, 4
  %v644 = vperm.slane %v635, 5
  %v645 = vperm.slane %v635, 6
  %v646 = vperm.slane %v635, 7
  %v647 = vperm.slane %v636, 0
  %v648 = vperm.slane %v636, 1
  %v649 = vperm.slane %v636, 2
  %v650 = vperm.slane %v636, 3
  %v651 = vperm.slane %v636, 4
  %v652 = vperm.slane %v636, 5
  %v653 = vperm.slane %v636, 6
  %v654 = vperm.slane %v636, 7
  %671 = vmatpush.msra.mxu0 %v363
  %672 = vmatpush.msra.mxu0 %v347
  %673 = vmatpush.msra.mxu0 %v331
  %674 = vmatpush.msra.mxu0 %v315
  %675 = vmatpush.msra.mxu0 %v299
  %676 = vmatpush.msra.mxu0 %v283
  %677 = vmatpush.msra.mxu0 %v267
  %678 = vmatpush.msra.mxu0 %v251
  %679 = vmatpush.msra.mxu0 %v235
  %680 = vmatpush.msra.mxu0 %v219
  %681 = vmatpush.msra.mxu0 %v203
  %682 = vmatpush.msra.mxu0 %v187
  %683 = vmatpush.msra.mxu0 %v171
  %684 = vmatpush.msra.mxu0 %v155
  %685 = vmatpush.msra.mxu0 %v139
  %686 = vmatpush.msra.mxu0 %v123
  %687 = vmatmul.f32.gmra.mxu0 %v119
  %v688 = vpop.f32.mrf.mxu0
  %v689 = vadd.f32 %v639, %v688
  %690 = vmatmul.f32.gmra.mxu0 %v121
  %v691 = vpop.f32.mrf.mxu0
  %v692 = vadd.f32 %v639, %v691
  %693 = vdwg.mxu0
  %694 = vmatpush.msra.mxu0 %v619
  %695 = vmatpush.msra.mxu0 %v603
  %696 = vmatpush.msra.mxu0 %v587
  %697 = vmatpush.msra.mxu0 %v571
  %698 = vmatpush.msra.mxu0 %v555
  %699 = vmatpush.msra.mxu0 %v539
  %700 = vmatpush.msra.mxu0 %v523
  %701 = vmatpush.msra.mxu0 %v507
  %702 = vmatpush.msra.mxu0 %v491
  %703 = vmatpush.msra.mxu0 %v475
  %704 = vmatpush.msra.mxu0 %v459
  %705 = vmatpush.msra.mxu0 %v443
  %706 = vmatpush.msra.mxu0 %v427
  %707 = vmatpush.msra.mxu0 %v411
  %708 = vmatpush.msra.mxu0 %v395
  %709 = vmatpush.msra.mxu0 %v379
  %710 = vmatmul.f32.gmra.mxu0 %v120
  %v711 = vpop.f32.mrf.mxu0
  %v712 = vadd.f32 %v689, %v711
  %713 = vmatmul.f32.gmra.mxu0 %v122
  %v714 = vpop.f32.mrf.mxu0
  %v715 = vadd.f32 %v692, %v714
  %716 = vdwg.mxu0
  %717 = vmatpush.msra.mxu0 %v364
  %718 = vmatpush.msra.mxu0 %v348
  %719 = vmatpush.msra.mxu0 %v332
  %720 = vmatpush.msra.mxu0 %v316
  %721 = vmatpush.msra.mxu0 %v300
  %722 = vmatpush.msra.mxu0 %v284
  %723 = vmatpush.msra.mxu0 %v268
  %724 = vmatpush.msra.mxu0 %v252
  %725 = vmatpush.msra.mxu0 %v236
  %726 = vmatpush.msra.mxu0 %v220
  %727 = vmatpush.msra.mxu0 %v204
  %728 = vmatpush.msra.mxu0 %v188
  %729 = vmatpush.msra.mxu0 %v172
  %730 = vmatpush.msra.mxu0 %v156
  %731 = vmatpush.msra.mxu0 %v140
  %732 = vmatpush.msra.mxu0 %v124
  %733 = vmatmul.f32.gmra.mxu0 %v119
  %v734 = vpop.f32.mrf.mxu0
  %v735 = vadd.f32 %v640, %v734
  %736 = vmatmul.f32.gmra.mxu0 %v121
  %v737 = vpop.f32.mrf.mxu0
  %v738 = vadd.f32 %v640, %v737
  %739 = vdwg.mxu0
  %740 = vmatpush.msra.mxu0 %v620
  %741 = vmatpush.msra.mxu0 %v604
  %742 = vmatpush.msra.mxu0 %v588
  %743 = vmatpush.msra.mxu0 %v572
  %744 = vmatpush.msra.mxu0 %v556
  %745 = vmatpush.msra.mxu0 %v540
  %746 = vmatpush.msra.mxu0 %v524
  %747 = vmatpush.msra.mxu0 %v508
  %748 = vmatpush.msra.mxu0 %v492
  %749 = vmatpush.msra.mxu0 %v476
  %750 = vmatpush.msra.mxu0 %v460
  %751 = vmatpush.msra.mxu0 %v444
  %752 = vmatpush.msra.mxu0 %v428
  %753 = vmatpush.msra.mxu0 %v412
  %754 = vmatpush.msra.mxu0 %v396
  %755 = vmatpush.msra.mxu0 %v380
  %756 = vmatmul.f32.gmra.mxu0 %v120
  %v757 = vpop.f32.mrf.mxu0
  %v758 = vadd.f32 %v735, %v757
  %759 = vmatmul.f32.gmra.mxu0 %v122
  %v760 = vpop.f32.mrf.mxu0
  %v761 = vadd.f32 %v738, %v760
  %762 = vdwg.mxu0
  %763 = vmatpush.msra.mxu0 %v365
  %764 = vmatpush.msra.mxu0 %v349
  %765 = vmatpush.msra.mxu0 %v333
  %766 = vmatpush.msra.mxu0 %v317
  %767 = vmatpush.msra.mxu0 %v301
  %768 = vmatpush.msra.mxu0 %v285
  %769 = vmatpush.msra.mxu0 %v269
  %770 = vmatpush.msra.mxu0 %v253
  %771 = vmatpush.msra.mxu0 %v237
  %772 = vmatpush.msra.mxu0 %v221
  %773 = vmatpush.msra.mxu0 %v205
  %774 = vmatpush.msra.mxu0 %v189
  %775 = vmatpush.msra.mxu0 %v173
  %776 = vmatpush.msra.mxu0 %v157
  %777 = vmatpush.msra.mxu0 %v141
  %778 = vmatpush.msra.mxu0 %v125
  %779 = vmatmul.f32.gmra.mxu0 %v119
  %v780 = vpop.f32.mrf.mxu0
  %v781 = vadd.f32 %v641, %v780
  %782 = vmatmul.f32.gmra.mxu0 %v121
  %v783 = vpop.f32.mrf.mxu0
  %v784 = vadd.f32 %v641, %v783
  %785 = vdwg.mxu0
  %786 = vmatpush.msra.mxu0 %v621
  %787 = vmatpush.msra.mxu0 %v605
  %788 = vmatpush.msra.mxu0 %v589
  %789 = vmatpush.msra.mxu0 %v573
  %790 = vmatpush.msra.mxu0 %v557
  %791 = vmatpush.msra.mxu0 %v541
  %792 = vmatpush.msra.mxu0 %v525
  %793 = vmatpush.msra.mxu0 %v509
  %794 = vmatpush.msra.mxu0 %v493
  %795 = vmatpush.msra.mxu0 %v477
  %796 = vmatpush.msra.mxu0 %v461
  %797 = vmatpush.msra.mxu0 %v445
  %798 = vmatpush.msra.mxu0 %v429
  %799 = vmatpush.msra.mxu0 %v413
  %800 = vmatpush.msra.mxu0 %v397
  %801 = vmatpush.msra.mxu0 %v381
  %802 = vmatmul.f32.gmra.mxu0 %v120
  %v803 = vpop.f32.mrf.mxu0
  %v804 = vadd.f32 %v781, %v803
  %805 = vmatmul.f32.gmra.mxu0 %v122
  %v806 = vpop.f32.mrf.mxu0
  %v807 = vadd.f32 %v784, %v806
  %808 = vdwg.mxu0
  %809 = vmatpush.msra.mxu0 %v366
  %810 = vmatpush.msra.mxu0 %v350
  %811 = vmatpush.msra.mxu0 %v334
  %812 = vmatpush.msra.mxu0 %v318
  %813 = vmatpush.msra.mxu0 %v302
  %814 = vmatpush.msra.mxu0 %v286
  %815 = vmatpush.msra.mxu0 %v270
  %816 = vmatpush.msra.mxu0 %v254
  %817 = vmatpush.msra.mxu0 %v238
  %818 = vmatpush.msra.mxu0 %v222
  %819 = vmatpush.msra.mxu0 %v206
  %820 = vmatpush.msra.mxu0 %v190
  %821 = vmatpush.msra.mxu0 %v174
  %822 = vmatpush.msra.mxu0 %v158
  %823 = vmatpush.msra.mxu0 %v142
  %824 = vmatpush.msra.mxu0 %v126
  %825 = vmatmul.f32.gmra.mxu0 %v119
  %v826 = vpop.f32.mrf.mxu0
  %v827 = vadd.f32 %v642, %v826
  %828 = vmatmul.f32.gmra.mxu0 %v121
  %v829 = vpop.f32.mrf.mxu0
  %v830 = vadd.f32 %v642, %v829
  %831 = vdwg.mxu0
  %832 = vmatpush.msra.mxu0 %v622
  %833 = vmatpush.msra.mxu0 %v606
  %834 = vmatpush.msra.mxu0 %v590
  %835 = vmatpush.msra.mxu0 %v574
  %836 = vmatpush.msra.mxu0 %v558
  %837 = vmatpush.msra.mxu0 %v542
  %838 = vmatpush.msra.mxu0 %v526
  %839 = vmatpush.msra.mxu0 %v510
  %840 = vmatpush.msra.mxu0 %v494
  %841 = vmatpush.msra.mxu0 %v478
  %842 = vmatpush.msra.mxu0 %v462
  %843 = vmatpush.msra.mxu0 %v446
  %844 = vmatpush.msra.mxu0 %v430
  %845 = vmatpush.msra.mxu0 %v414
  %846 = vmatpush.msra.mxu0 %v398
  %847 = vmatpush.msra.mxu0 %v382
  %848 = vmatmul.f32.gmra.mxu0 %v120
  %v849 = vpop.f32.mrf.mxu0
  %v850 = vadd.f32 %v827, %v849
  %851 = vmatmul.f32.gmra.mxu0 %v122
  %v852 = vpop.f32.mrf.mxu0
  %v853 = vadd.f32 %v830, %v852
  %854 = vdwg.mxu0
  %855 = vmatpush.msra.mxu0 %v367
  %856 = vmatpush.msra.mxu0 %v351
  %857 = vmatpush.msra.mxu0 %v335
  %858 = vmatpush.msra.mxu0 %v319
  %859 = vmatpush.msra.mxu0 %v303
  %860 = vmatpush.msra.mxu0 %v287
  %861 = vmatpush.msra.mxu0 %v271
  %862 = vmatpush.msra.mxu0 %v255
  %863 = vmatpush.msra.mxu0 %v239
  %864 = vmatpush.msra.mxu0 %v223
  %865 = vmatpush.msra.mxu0 %v207
  %866 = vmatpush.msra.mxu0 %v191
  %867 = vmatpush.msra.mxu0 %v175
  %868 = vmatpush.msra.mxu0 %v159
  %869 = vmatpush.msra.mxu0 %v143
  %870 = vmatpush.msra.mxu0 %v127
  %871 = vmatmul.f32.gmra.mxu0 %v119
  %v872 = vpop.f32.mrf.mxu0
  %v873 = vadd.f32 %v643, %v872
  %874 = vmatmul.f32.gmra.mxu0 %v121
  %v875 = vpop.f32.mrf.mxu0
  %v876 = vadd.f32 %v643, %v875
  %877 = vdwg.mxu0
  %878 = vmatpush.msra.mxu0 %v623
  %879 = vmatpush.msra.mxu0 %v607
  %880 = vmatpush.msra.mxu0 %v591
  %881 = vmatpush.msra.mxu0 %v575
  %882 = vmatpush.msra.mxu0 %v559
  %883 = vmatpush.msra.mxu0 %v543
  %884 = vmatpush.msra.mxu0 %v527
  %885 = vmatpush.msra.mxu0 %v511
  %886 = vmatpush.msra.mxu0 %v495
  %887 = vmatpush.msra.mxu0 %v479
  %888 = vmatpush.msra.mxu0 %v463
  %889 = vmatpush.msra.mxu0 %v447
  %890 = vmatpush.msra.mxu0 %v431
  %891 = vmatpush.msra.mxu0 %v415
  %892 = vmatpush.msra.mxu0 %v399
  %893 = vmatpush.msra.mxu0 %v383
  %894 = vmatmul.f32.gmra.mxu0 %v120
  %v895 = vpop.f32.mrf.mxu0
  %v896 = vadd.f32 %v873, %v895
  %897 = vmatmul.f32.gmra.mxu0 %v122
  %v898 = vpop.f32.mrf.mxu0
  %v899 = vadd.f32 %v876, %v898
  %900 = vdwg.mxu0
  %901 = vmatpush.msra.mxu0 %v368
  %902 = vmatpush.msra.mxu0 %v352
  %903 = vmatpush.msra.mxu0 %v336
  %904 = vmatpush.msra.mxu0 %v320
  %905 = vmatpush.msra.mxu0 %v304
  %906 = vmatpush.msra.mxu0 %v288
  %907 = vmatpush.msra.mxu0 %v272
  %908 = vmatpush.msra.mxu0 %v256
  %909 = vmatpush.msra.mxu0 %v240
  %910 = vmatpush.msra.mxu0 %v224
  %911 = vmatpush.msra.mxu0 %v208
  %912 = vmatpush.msra.mxu0 %v192
  %913 = vmatpush.msra.mxu0 %v176
  %914 = vmatpush.msra.mxu0 %v160
  %915 = vmatpush.msra.mxu0 %v144
  %916 = vmatpush.msra.mxu0 %v128
  %917 = vmatmul.f32.gmra.mxu0 %v119
  %v918 = vpop.f32.mrf.mxu0
  %v919 = vadd.f32 %v644, %v918
  %920 = vmatmul.f32.gmra.mxu0 %v121
  %v921 = vpop.f32.mrf.mxu0
  %v922 = vadd.f32 %v644, %v921
  %923 = vdwg.mxu0
  %924 = vmatpush.msra.mxu0 %v624
  %925 = vmatpush.msra.mxu0 %v608
  %926 = vmatpush.msra.mxu0 %v592
  %927 = vmatpush.msra.mxu0 %v576
  %928 = vmatpush.msra.mxu0 %v560
  %929 = vmatpush.msra.mxu0 %v544
  %930 = vmatpush.msra.mxu0 %v528
  %931 = vmatpush.msra.mxu0 %v512
  %932 = vmatpush.msra.mxu0 %v496
  %933 = vmatpush.msra.mxu0 %v480
  %934 = vmatpush.msra.mxu0 %v464
  %935 = vmatpush.msra.mxu0 %v448
  %936 = vmatpush.msra.mxu0 %v432
  %937 = vmatpush.msra.mxu0 %v416
  %938 = vmatpush.msra.mxu0 %v400
  %939 = vmatpush.msra.mxu0 %v384
  %940 = vmatmul.f32.gmra.mxu0 %v120
  %v941 = vpop.f32.mrf.mxu0
  %v942 = vadd.f32 %v919, %v941
  %943 = vmatmul.f32.gmra.mxu0 %v122
  %v944 = vpop.f32.mrf.mxu0
  %v945 = vadd.f32 %v922, %v944
  %946 = vdwg.mxu0
  %947 = vmatpush.msra.mxu0 %v369
  %948 = vmatpush.msra.mxu0 %v353
  %949 = vmatpush.msra.mxu0 %v337
  %950 = vmatpush.msra.mxu0 %v321
  %951 = vmatpush.msra.mxu0 %v305
  %952 = vmatpush.msra.mxu0 %v289
  %953 = vmatpush.msra.mxu0 %v273
  %954 = vmatpush.msra.mxu0 %v257
  %955 = vmatpush.msra.mxu0 %v241
  %956 = vmatpush.msra.mxu0 %v225
  %957 = vmatpush.msra.mxu0 %v209
  %958 = vmatpush.msra.mxu0 %v193
  %959 = vmatpush.msra.mxu0 %v177
  %960 = vmatpush.msra.mxu0 %v161
  %961 = vmatpush.msra.mxu0 %v145
  %962 = vmatpush.msra.mxu0 %v129
  %963 = vmatmul.f32.gmra.mxu0 %v119
  %v964 = vpop.f32.mrf.mxu0
  %v965 = vadd.f32 %v645, %v964
  %966 = vmatmul.f32.gmra.mxu0 %v121
  %v967 = vpop.f32.mrf.mxu0
  %v968 = vadd.f32 %v645, %v967
  %969 = vdwg.mxu0
  %970 = vmatpush.msra.mxu0 %v625
  %971 = vmatpush.msra.mxu0 %v609
  %972 = vmatpush.msra.mxu0 %v593
  %973 = vmatpush.msra.mxu0 %v577
  %974 = vmatpush.msra.mxu0 %v561
  %975 = vmatpush.msra.mxu0 %v545
  %976 = vmatpush.msra.mxu0 %v529
  %977 = vmatpush.msra.mxu0 %v513
  %978 = vmatpush.msra.mxu0 %v497
  %979 = vmatpush.msra.mxu0 %v481
  %980 = vmatpush.msra.mxu0 %v465
  %981 = vmatpush.msra.mxu0 %v449
  %982 = vmatpush.msra.mxu0 %v433
  %983 = vmatpush.msra.mxu0 %v417
  %984 = vmatpush.msra.mxu0 %v401
  %985 = vmatpush.msra.mxu0 %v385
  %986 = vmatmul.f32.gmra.mxu0 %v120
  %v987 = vpop.f32.mrf.mxu0
  %v988 = vadd.f32 %v965, %v987
  %989 = vmatmul.f32.gmra.mxu0 %v122
  %v990 = vpop.f32.mrf.mxu0
  %v991 = vadd.f32 %v968, %v990
  %992 = vdwg.mxu0
  %993 = vmatpush.msra.mxu0 %v370
  %994 = vmatpush.msra.mxu0 %v354
  %995 = vmatpush.msra.mxu0 %v338
  %996 = vmatpush.msra.mxu0 %v322
  %997 = vmatpush.msra.mxu0 %v306
  %998 = vmatpush.msra.mxu0 %v290
  %999 = vmatpush.msra.mxu0 %v274
  %1000 = vmatpush.msra.mxu0 %v258
  %1001 = vmatpush.msra.mxu0 %v242
  %1002 = vmatpush.msra.mxu0 %v226
  %1003 = vmatpush.msra.mxu0 %v210
  %1004 = vmatpush.msra.mxu0 %v194
  %1005 = vmatpush.msra.mxu0 %v178
  %1006 = vmatpush.msra.mxu0 %v162
  %1007 = vmatpush.msra.mxu0 %v146
  %1008 = vmatpush.msra.mxu0 %v130
  %1009 = vmatmul.f32.gmra.mxu0 %v119
  %v1010 = vpop.f32.mrf.mxu0
  %v1011 = vadd.f32 %v646, %v1010
  %1012 = vmatmul.f32.gmra.mxu0 %v121
  %v1013 = vpop.f32.mrf.mxu0
  %v1014 = vadd.f32 %v646, %v1013
  %1015 = vdwg.mxu0
  %1016 = vmatpush.msra.mxu0 %v626
  %1017 = vmatpush.msra.mxu0 %v610
  %1018 = vmatpush.msra.mxu0 %v594
  %1019 = vmatpush.msra.mxu0 %v578
  %1020 = vmatpush.msra.mxu0 %v562
  %1021 = vmatpush.msra.mxu0 %v546
  %1022 = vmatpush.msra.mxu0 %v530
  %1023 = vmatpush.msra.mxu0 %v514
  %1024 = vmatpush.msra.mxu0 %v498
  %1025 = vmatpush.msra.mxu0 %v482
  %1026 = vmatpush.msra.mxu0 %v466
  %1027 = vmatpush.msra.mxu0 %v450
  %1028 = vmatpush.msra.mxu0 %v434
  %1029 = vmatpush.msra.mxu0 %v418
  %1030 = vmatpush.msra.mxu0 %v402
  %1031 = vmatpush.msra.mxu0 %v386
  %1032 = vmatmul.f32.gmra.mxu0 %v120
  %v1033 = vpop.f32.mrf.mxu0
  %v1034 = vadd.f32 %v1011, %v1033
  %1035 = vmatmul.f32.gmra.mxu0 %v122
  %v1036 = vpop.f32.mrf.mxu0
  %v1037 = vadd.f32 %v1014, %v1036
  %1038 = vdwg.mxu0
  %1039 = vmatpush.msra.mxu0 %v371
  %1040 = vmatpush.msra.mxu0 %v355
  %1041 = vmatpush.msra.mxu0 %v339
  %1042 = vmatpush.msra.mxu0 %v323
  %1043 = vmatpush.msra.mxu0 %v307
  %1044 = vmatpush.msra.mxu0 %v291
  %1045 = vmatpush.msra.mxu0 %v275
  %1046 = vmatpush.msra.mxu0 %v259
  %1047 = vmatpush.msra.mxu0 %v243
  %1048 = vmatpush.msra.mxu0 %v227
  %1049 = vmatpush.msra.mxu0 %v211
  %1050 = vmatpush.msra.mxu0 %v195
  %1051 = vmatpush.msra.mxu0 %v179
  %1052 = vmatpush.msra.mxu0 %v163
  %1053 = vmatpush.msra.mxu0 %v147
  %1054 = vmatpush.msra.mxu0 %v131
  %1055 = vmatmul.f32.gmra.mxu0 %v119
  %v1056 = vpop.f32.mrf.mxu0
  %v1057 = vadd.f32 %v647, %v1056
  %1058 = vmatmul.f32.gmra.mxu0 %v121
  %v1059 = vpop.f32.mrf.mxu0
  %v1060 = vadd.f32 %v647, %v1059
  %1061 = vdwg.mxu0
  %1062 = vmatpush.msra.mxu0 %v627
  %1063 = vmatpush.msra.mxu0 %v611
  %1064 = vmatpush.msra.mxu0 %v595
  %1065 = vmatpush.msra.mxu0 %v579
  %1066 = vmatpush.msra.mxu0 %v563
  %1067 = vmatpush.msra.mxu0 %v547
  %1068 = vmatpush.msra.mxu0 %v531
  %1069 = vmatpush.msra.mxu0 %v515
  %1070 = vmatpush.msra.mxu0 %v499
  %1071 = vmatpush.msra.mxu0 %v483
  %1072 = vmatpush.msra.mxu0 %v467
  %1073 = vmatpush.msra.mxu0 %v451
  %1074 = vmatpush.msra.mxu0 %v435
  %1075 = vmatpush.msra.mxu0 %v419
  %1076 = vmatpush.msra.mxu0 %v403
  %1077 = vmatpush.msra.mxu0 %v387
  %1078 = vmatmul.f32.gmra.mxu0 %v120
  %v1079 = vpop.f32.mrf.mxu0
  %v1080 = vadd.f32 %v1057, %v1079
  %1081 = vmatmul.f32.gmra.mxu0 %v122
  %v1082 = vpop.f32.mrf.mxu0
  %v1083 = vadd.f32 %v1060, %v1082
  %1084 = vdwg.mxu0
  %1085 = vmatpush.msra.mxu0 %v372
  %1086 = vmatpush.msra.mxu0 %v356
  %1087 = vmatpush.msra.mxu0 %v340
  %1088 = vmatpush.msra.mxu0 %v324
  %1089 = vmatpush.msra.mxu0 %v308
  %1090 = vmatpush.msra.mxu0 %v292
  %1091 = vmatpush.msra.mxu0 %v276
  %1092 = vmatpush.msra.mxu0 %v260
  %1093 = vmatpush.msra.mxu0 %v244
  %1094 = vmatpush.msra.mxu0 %v228
  %1095 = vmatpush.msra.mxu0 %v212
  %1096 = vmatpush.msra.mxu0 %v196
  %1097 = vmatpush.msra.mxu0 %v180
  %1098 = vmatpush.msra.mxu0 %v164
  %1099 = vmatpush.msra.mxu0 %v148
  %1100 = vmatpush.msra.mxu0 %v132
  %1101 = vmatmul.f32.gmra.mxu0 %v119
  %v1102 = vpop.f32.mrf.mxu0
  %v1103 = vadd.f32 %v648, %v1102
  %1104 = vmatmul.f32.gmra.mxu0 %v121
  %v1105 = vpop.f32.mrf.mxu0
  %v1106 = vadd.f32 %v648, %v1105
  %1107 = vdwg.mxu0
  %1108 = vmatpush.msra.mxu0 %v628
  %1109 = vmatpush.msra.mxu0 %v612
  %1110 = vmatpush.msra.mxu0 %v596
  %1111 = vmatpush.msra.mxu0 %v580
  %1112 = vmatpush.msra.mxu0 %v564
  %1113 = vmatpush.msra.mxu0 %v548
  %1114 = vmatpush.msra.mxu0 %v532
  %1115 = vmatpush.msra.mxu0 %v516
  %1116 = vmatpush.msra.mxu0 %v500
  %1117 = vmatpush.msra.mxu0 %v484
  %1118 = vmatpush.msra.mxu0 %v468
  %1119 = vmatpush.msra.mxu0 %v452
  %1120 = vmatpush.msra.mxu0 %v436
  %1121 = vmatpush.msra.mxu0 %v420
  %1122 = vmatpush.msra.mxu0 %v404
  %1123 = vmatpush.msra.mxu0 %v388
  %1124 = vmatmul.f32.gmra.mxu0 %v120
  %v1125 = vpop.f32.mrf.mxu0
  %v1126 = vadd.f32 %v1103, %v1125
  %1127 = vmatmul.f32.gmra.mxu0 %v122
  %v1128 = vpop.f32.mrf.mxu0
  %v1129 = vadd.f32 %v1106, %v1128
  %1130 = vdwg.mxu0
  %1131 = vmatpush.msra.mxu0 %v373
  %1132 = vmatpush.msra.mxu0 %v357
  %1133 = vmatpush.msra.mxu0 %v341
  %1134 = vmatpush.msra.mxu0 %v325
  %1135 = vmatpush.msra.mxu0 %v309
  %1136 = vmatpush.msra.mxu0 %v293
  %1137 = vmatpush.msra.mxu0 %v277
  %1138 = vmatpush.msra.mxu0 %v261
  %1139 = vmatpush.msra.mxu0 %v245
  %1140 = vmatpush.msra.mxu0 %v229
  %1141 = vmatpush.msra.mxu0 %v213
  %1142 = vmatpush.msra.mxu0 %v197
  %1143 = vmatpush.msra.mxu0 %v181
  %1144 = vmatpush.msra.mxu0 %v165
  %1145 = vmatpush.msra.mxu0 %v149
  %1146 = vmatpush.msra.mxu0 %v133
  %1147 = vmatmul.f32.gmra.mxu0 %v119
  %v1148 = vpop.f32.mrf.mxu0
  %v1149 = vadd.f32 %v649, %v1148
  %1150 = vmatmul.f32.gmra.mxu0 %v121
  %v1151 = vpop.f32.mrf.mxu0
  %v1152 = vadd.f32 %v649, %v1151
  %1153 = vdwg.mxu0
  %1154 = vmatpush.msra.mxu0 %v629
  %1155 = vmatpush.msra.mxu0 %v613
  %1156 = vmatpush.msra.mxu0 %v597
  %1157 = vmatpush.msra.mxu0 %v581
  %1158 = vmatpush.msra.mxu0 %v565
  %1159 = vmatpush.msra.mxu0 %v549
  %1160 = vmatpush.msra.mxu0 %v533
  %1161 = vmatpush.msra.mxu0 %v517
  %1162 = vmatpush.msra.mxu0 %v501
  %1163 = vmatpush.msra.mxu0 %v485
  %1164 = vmatpush.msra.mxu0 %v469
  %1165 = vmatpush.msra.mxu0 %v453
  %1166 = vmatpush.msra.mxu0 %v437
  %1167 = vmatpush.msra.mxu0 %v421
  %1168 = vmatpush.msra.mxu0 %v405
  %1169 = vmatpush.msra.mxu0 %v389
  %1170 = vmatmul.f32.gmra.mxu0 %v120
  %v1171 = vpop.f32.mrf.mxu0
  %v1172 = vadd.f32 %v1149, %v1171
  %1173 = vmatmul.f32.gmra.mxu0 %v122
  %v1174 = vpop.f32.mrf.mxu0
  %v1175 = vadd.f32 %v1152, %v1174
  %1176 = vdwg.mxu0
  %1177 = vmatpush.msra.mxu0 %v374
  %1178 = vmatpush.msra.mxu0 %v358
  %1179 = vmatpush.msra.mxu0 %v342
  %1180 = vmatpush.msra.mxu0 %v326
  %1181 = vmatpush.msra.mxu0 %v310
  %1182 = vmatpush.msra.mxu0 %v294
  %1183 = vmatpush.msra.mxu0 %v278
  %1184 = vmatpush.msra.mxu0 %v262
  %1185 = vmatpush.msra.mxu0 %v246
  %1186 = vmatpush.msra.mxu0 %v230
  %1187 = vmatpush.msra.mxu0 %v214
  %1188 = vmatpush.msra.mxu0 %v198
  %1189 = vmatpush.msra.mxu0 %v182
  %1190 = vmatpush.msra.mxu0 %v166
  %1191 = vmatpush.msra.mxu0 %v150
  %1192 = vmatpush.msra.mxu0 %v134
  %1193 = vmatmul.f32.gmra.mxu0 %v119
  %v1194 = vpop.f32.mrf.mxu0
  %v1195 = vadd.f32 %v650, %v1194
  %1196 = vmatmul.f32.gmra.mxu0 %v121
  %v1197 = vpop.f32.mrf.mxu0
  %v1198 = vadd.f32 %v650, %v1197
  %1199 = vdwg.mxu0
  %1200 = vmatpush.msra.mxu0 %v630
  %1201 = vmatpush.msra.mxu0 %v614
  %1202 = vmatpush.msra.mxu0 %v598
  %1203 = vmatpush.msra.mxu0 %v582
  %1204 = vmatpush.msra.mxu0 %v566
  %1205 = vmatpush.msra.mxu0 %v550
  %1206 = vmatpush.msra.mxu0 %v534
  %1207 = vmatpush.msra.mxu0 %v518
  %1208 = vmatpush.msra.mxu0 %v502
  %1209 = vmatpush.msra.mxu0 %v486
  %1210 = vmatpush.msra.mxu0 %v470
  %1211 = vmatpush.msra.mxu0 %v454
  %1212 = vmatpush.msra.mxu0 %v438
  %1213 = vmatpush.msra.mxu0 %v422
  %1214 = vmatpush.msra.mxu0 %v406
  %1215 = vmatpush.msra.mxu0 %v390
  %1216 = vmatmul.f32.gmra.mxu0 %v120
  %v1217 = vpop.f32.mrf.mxu0
  %v1218 = vadd.f32 %v1195, %v1217
  %1219 = vmatmul.f32.gmra.mxu0 %v122
  %v1220 = vpop.f32.mrf.mxu0
  %v1221 = vadd.f32 %v1198, %v1220
  %1222 = vdwg.mxu0
  %1223 = vmatpush.msra.mxu0 %v375
  %1224 = vmatpush.msra.mxu0 %v359
  %1225 = vmatpush.msra.mxu0 %v343
  %1226 = vmatpush.msra.mxu0 %v327
  %1227 = vmatpush.msra.mxu0 %v311
  %1228 = vmatpush.msra.mxu0 %v295
  %1229 = vmatpush.msra.mxu0 %v279
  %1230 = vmatpush.msra.mxu0 %v263
  %1231 = vmatpush.msra.mxu0 %v247
  %1232 = vmatpush.msra.mxu0 %v231
  %1233 = vmatpush.msra.mxu0 %v215
  %1234 = vmatpush.msra.mxu0 %v199
  %1235 = vmatpush.msra.mxu0 %v183
  %1236 = vmatpush.msra.mxu0 %v167
  %1237 = vmatpush.msra.mxu0 %v151
  %1238 = vmatpush.msra.mxu0 %v135
  %1239 = vmatmul.f32.gmra.mxu0 %v119
  %v1240 = vpop.f32.mrf.mxu0
  %v1241 = vadd.f32 %v651, %v1240
  %1242 = vmatmul.f32.gmra.mxu0 %v121
  %v1243 = vpop.f32.mrf.mxu0
  %v1244 = vadd.f32 %v651, %v1243
  %1245 = vdwg.mxu0
  %1246 = vmatpush.msra.mxu0 %v631
  %1247 = vmatpush.msra.mxu0 %v615
  %1248 = vmatpush.msra.mxu0 %v599
  %1249 = vmatpush.msra.mxu0 %v583
  %1250 = vmatpush.msra.mxu0 %v567
  %1251 = vmatpush.msra.mxu0 %v551
  %1252 = vmatpush.msra.mxu0 %v535
  %1253 = vmatpush.msra.mxu0 %v519
  %1254 = vmatpush.msra.mxu0 %v503
  %1255 = vmatpush.msra.mxu0 %v487
  %1256 = vmatpush.msra.mxu0 %v471
  %1257 = vmatpush.msra.mxu0 %v455
  %1258 = vmatpush.msra.mxu0 %v439
  %1259 = vmatpush.msra.mxu0 %v423
  %1260 = vmatpush.msra.mxu0 %v407
  %1261 = vmatpush.msra.mxu0 %v391
  %1262 = vmatmul.f32.gmra.mxu0 %v120
  %v1263 = vpop.f32.mrf.mxu0
  %v1264 = vadd.f32 %v1241, %v1263
  %1265 = vmatmul.f32.gmra.mxu0 %v122
  %v1266 = vpop.f32.mrf.mxu0
  %v1267 = vadd.f32 %v1244, %v1266
  %1268 = vdwg.mxu0
  %1269 = vmatpush.msra.mxu0 %v376
  %1270 = vmatpush.msra.mxu0 %v360
  %1271 = vmatpush.msra.mxu0 %v344
  %1272 = vmatpush.msra.mxu0 %v328
  %1273 = vmatpush.msra.mxu0 %v312
  %1274 = vmatpush.msra.mxu0 %v296
  %1275 = vmatpush.msra.mxu0 %v280
  %1276 = vmatpush.msra.mxu0 %v264
  %1277 = vmatpush.msra.mxu0 %v248
  %1278 = vmatpush.msra.mxu0 %v232
  %1279 = vmatpush.msra.mxu0 %v216
  %1280 = vmatpush.msra.mxu0 %v200
  %1281 = vmatpush.msra.mxu0 %v184
  %1282 = vmatpush.msra.mxu0 %v168
  %1283 = vmatpush.msra.mxu0 %v152
  %1284 = vmatpush.msra.mxu0 %v136
  %1285 = vmatmul.f32.gmra.mxu0 %v119
  %v1286 = vpop.f32.mrf.mxu0
  %v1287 = vadd.f32 %v652, %v1286
  %1288 = vmatmul.f32.gmra.mxu0 %v121
  %v1289 = vpop.f32.mrf.mxu0
  %v1290 = vadd.f32 %v652, %v1289
  %1291 = vdwg.mxu0
  %1292 = vmatpush.msra.mxu0 %v632
  %1293 = vmatpush.msra.mxu0 %v616
  %1294 = vmatpush.msra.mxu0 %v600
  %1295 = vmatpush.msra.mxu0 %v584
  %1296 = vmatpush.msra.mxu0 %v568
  %1297 = vmatpush.msra.mxu0 %v552
  %1298 = vmatpush.msra.mxu0 %v536
  %1299 = vmatpush.msra.mxu0 %v520
  %1300 = vmatpush.msra.mxu0 %v504
  %1301 = vmatpush.msra.mxu0 %v488
  %1302 = vmatpush.msra.mxu0 %v472
  %1303 = vmatpush.msra.mxu0 %v456
  %1304 = vmatpush.msra.mxu0 %v440
  %1305 = vmatpush.msra.mxu0 %v424
  %1306 = vmatpush.msra.mxu0 %v408
  %1307 = vmatpush.msra.mxu0 %v392
  %1308 = vmatmul.f32.gmra.mxu0 %v120
  %v1309 = vpop.f32.mrf.mxu0
  %v1310 = vadd.f32 %v1287, %v1309
  %1311 = vmatmul.f32.gmra.mxu0 %v122
  %v1312 = vpop.f32.mrf.mxu0
  %v1313 = vadd.f32 %v1290, %v1312
  %1314 = vdwg.mxu0
  %1315 = vmatpush.msra.mxu0 %v377
  %1316 = vmatpush.msra.mxu0 %v361
  %1317 = vmatpush.msra.mxu0 %v345
  %1318 = vmatpush.msra.mxu0 %v329
  %1319 = vmatpush.msra.mxu0 %v313
  %1320 = vmatpush.msra.mxu0 %v297
  %1321 = vmatpush.msra.mxu0 %v281
  %1322 = vmatpush.msra.mxu0 %v265
  %1323 = vmatpush.msra.mxu0 %v249
  %1324 = vmatpush.msra.mxu0 %v233
  %1325 = vmatpush.msra.mxu0 %v217
  %1326 = vmatpush.msra.mxu0 %v201
  %1327 = vmatpush.msra.mxu0 %v185
  %1328 = vmatpush.msra.mxu0 %v169
  %1329 = vmatpush.msra.mxu0 %v153
  %1330 = vmatpush.msra.mxu0 %v137
  %1331 = vmatmul.f32.gmra.mxu0 %v119
  %v1332 = vpop.f32.mrf.mxu0
  %v1333 = vadd.f32 %v653, %v1332
  %1334 = vmatmul.f32.gmra.mxu0 %v121
  %v1335 = vpop.f32.mrf.mxu0
  %v1336 = vadd.f32 %v653, %v1335
  %1337 = vdwg.mxu0
  %1338 = vmatpush.msra.mxu0 %v633
  %1339 = vmatpush.msra.mxu0 %v617
  %1340 = vmatpush.msra.mxu0 %v601
  %1341 = vmatpush.msra.mxu0 %v585
  %1342 = vmatpush.msra.mxu0 %v569
  %1343 = vmatpush.msra.mxu0 %v553
  %1344 = vmatpush.msra.mxu0 %v537
  %1345 = vmatpush.msra.mxu0 %v521
  %1346 = vmatpush.msra.mxu0 %v505
  %1347 = vmatpush.msra.mxu0 %v489
  %1348 = vmatpush.msra.mxu0 %v473
  %1349 = vmatpush.msra.mxu0 %v457
  %1350 = vmatpush.msra.mxu0 %v441
  %1351 = vmatpush.msra.mxu0 %v425
  %1352 = vmatpush.msra.mxu0 %v409
  %1353 = vmatpush.msra.mxu0 %v393
  %1354 = vmatmul.f32.gmra.mxu0 %v120
  %v1355 = vpop.f32.mrf.mxu0
  %v1356 = vadd.f32 %v1333, %v1355
  %1357 = vmatmul.f32.gmra.mxu0 %v122
  %v1358 = vpop.f32.mrf.mxu0
  %v1359 = vadd.f32 %v1336, %v1358
  %1360 = vdwg.mxu0
  %1361 = vmatpush.msra.mxu0 %v378
  %1362 = vmatpush.msra.mxu0 %v362
  %1363 = vmatpush.msra.mxu0 %v346
  %1364 = vmatpush.msra.mxu0 %v330
  %1365 = vmatpush.msra.mxu0 %v314
  %1366 = vmatpush.msra.mxu0 %v298
  %1367 = vmatpush.msra.mxu0 %v282
  %1368 = vmatpush.msra.mxu0 %v266
  %1369 = vmatpush.msra.mxu0 %v250
  %1370 = vmatpush.msra.mxu0 %v234
  %1371 = vmatpush.msra.mxu0 %v218
  %1372 = vmatpush.msra.mxu0 %v202
  %1373 = vmatpush.msra.mxu0 %v186
  %1374 = vmatpush.msra.mxu0 %v170
  %1375 = vmatpush.msra.mxu0 %v154
  %1376 = vmatpush.msra.mxu0 %v138
  %1377 = vmatmul.f32.gmra.mxu0 %v119
  %v1378 = vpop.f32.mrf.mxu0
  %v1379 = vadd.f32 %v654, %v1378
  %1380 = vmatmul.f32.gmra.mxu0 %v121
  %v1381 = vpop.f32.mrf.mxu0
  %v1382 = vadd.f32 %v654, %v1381
  %1383 = vdwg.mxu0
  %1384 = vmatpush.msra.mxu0 %v634
  %1385 = vmatpush.msra.mxu0 %v618
  %1386 = vmatpush.msra.mxu0 %v602
  %1387 = vmatpush.msra.mxu0 %v586
  %1388 = vmatpush.msra.mxu0 %v570
  %1389 = vmatpush.msra.mxu0 %v554
  %1390 = vmatpush.msra.mxu0 %v538
  %1391 = vmatpush.msra.mxu0 %v522
  %1392 = vmatpush.msra.mxu0 %v506
  %1393 = vmatpush.msra.mxu0 %v490
  %1394 = vmatpush.msra.mxu0 %v474
  %1395 = vmatpush.msra.mxu0 %v458
  %1396 = vmatpush.msra.mxu0 %v442
  %1397 = vmatpush.msra.mxu0 %v426
  %1398 = vmatpush.msra.mxu0 %v410
  %1399 = vmatpush.msra.mxu0 %v394
  %1400 = vmatmul.f32.gmra.mxu0 %v120
  %v1401 = vpop.f32.mrf.mxu0
  %v1402 = vadd.f32 %v1379, %v1401
  %1403 = vmatmul.f32.gmra.mxu0 %v122
  %v1404 = vpop.f32.mrf.mxu0
  %v1405 = vadd.f32 %v1382, %v1404
  %1406 = vdwg.mxu0
  %v1407 = vmax.f32 %v712, 0.0
  %v1408 = vmax.f32 %v758, 0.0
  %v1409 = vmax.f32 %v804, 0.0
  %v1410 = vmax.f32 %v850, 0.0
  %v1411 = vmax.f32 %v896, 0.0
  %v1412 = vmax.f32 %v942, 0.0
  %v1413 = vmax.f32 %v988, 0.0
  %v1414 = vmax.f32 %v1034, 0.0
  %v1415 = vmax.f32 %v1080, 0.0
  %v1416 = vmax.f32 %v1126, 0.0
  %v1417 = vmax.f32 %v1172, 0.0
  %v1418 = vmax.f32 %v1218, 0.0
  %v1419 = vmax.f32 %v1264, 0.0
  %v1420 = vmax.f32 %v1310, 0.0
  %v1421 = vmax.f32 %v1356, 0.0
  %v1422 = vmax.f32 %v1402, 0.0
  %v1423 = vmax.f32 %v715, 0.0
  %v1424 = vmax.f32 %v761, 0.0
  %v1425 = vmax.f32 %v807, 0.0
  %v1426 = vmax.f32 %v853, 0.0
  %v1427 = vmax.f32 %v899, 0.0
  %v1428 = vmax.f32 %v945, 0.0
  %v1429 = vmax.f32 %v991, 0.0
  %v1430 = vmax.f32 %v1037, 0.0
  %v1431 = vmax.f32 %v1083, 0.0
  %v1432 = vmax.f32 %v1129, 0.0
  %v1433 = vmax.f32 %v1175, 0.0
  %v1434 = vmax.f32 %v1221, 0.0
  %v1435 = vmax.f32 %v1267, 0.0
  %v1436 = vmax.f32 %v1313, 0.0
  %v1437 = vmax.f32 %v1359, 0.0
  %v1438 = vmax.f32 %v1405, 0.0
  %v1439 = vld [vmem:[%s6] sm:$0xff]
  %v1440 = vld [vmem:[%s6 + $0x8] sm:$0xff]
  %v1441 = vld [vmem:[%s6 + $0x10] sm:$0xff]
  %v1442 = vld [vmem:[%s6 + $0x18] sm:$0xff]
  %v1443 = vld [vmem:[%s6 + $0x20] sm:$0xff]
  %v1444 = vld [vmem:[%s6 + $0x28] sm:$0xff]
  %v1445 = vld [vmem:[%s6 + $0x30] sm:$0xff]
  %v1446 = vld [vmem:[%s6 + $0x38] sm:$0xff]
  %v1447 = vld [vmem:[%s6 + $0x40] sm:$0xff]
  %v1448 = vld [vmem:[%s6 + $0x48] sm:$0xff]
  %v1449 = vld [vmem:[%s6 + $0x50] sm:$0xff]
  %v1450 = vld [vmem:[%s6 + $0x58] sm:$0xff]
  %v1451 = vld [vmem:[%s6 + $0x60] sm:$0xff]
  %v1452 = vld [vmem:[%s6 + $0x68] sm:$0xff]
  %v1453 = vld [vmem:[%s6 + $0x70] sm:$0xff]
  %v1454 = vld [vmem:[%s6 + $0x78] sm:$0xff]
  %v1455 = vld [vmem:[%s6 + $0x80] sm:$0xff]
  %v1456 = vld [vmem:[%s6 + $0x88] sm:$0xff]
  %v1457 = vld [vmem:[%s6 + $0x90] sm:$0xff]
  %v1458 = vld [vmem:[%s6 + $0x98] sm:$0xff]
  %v1459 = vld [vmem:[%s6 + $0xa0] sm:$0xff]
  %v1460 = vld [vmem:[%s6 + $0xa8] sm:$0xff]
  %v1461 = vld [vmem:[%s6 + $0xb0] sm:$0xff]
  %v1462 = vld [vmem:[%s6 + $0xb8] sm:$0xff]
  %v1463 = vld [vmem:[%s6 + $0xc0] sm:$0xff]
  %v1464 = vld [vmem:[%s6 + $0xc8] sm:$0xff]
  %v1465 = vld [vmem:[%s6 + $0xd0] sm:$0xff]
  %v1466 = vld [vmem:[%s6 + $0xd8] sm:$0xff]
  %v1467 = vld [vmem:[%s6 + $0xe0] sm:$0xff]
  %v1468 = vld [vmem:[%s6 + $0xe8] sm:$0xff]
  %v1469 = vld [vmem:[%s6 + $0xf0] sm:$0xff]
  %v1470 = vld [vmem:[%s6 + $0xf8] sm:$0xff]
  %v1471 = vld [vmem:[%s6 + $0x100] sm:$0xff]
  %v1472 = vld [vmem:[%s6 + $0x108] sm:$0xff]
  %v1473 = vld [vmem:[%s6 + $0x110] sm:$0xff]
  %v1474 = vld [vmem:[%s6 + $0x118] sm:$0xff]
  %v1475 = vld [vmem:[%s6 + $0x120] sm:$0xff]
  %v1476 = vld [vmem:[%s6 + $0x128] sm:$0xff]
  %v1477 = vld [vmem:[%s6 + $0x130] sm:$0xff]
  %v1478 = vld [vmem:[%s6 + $0x138] sm:$0xff]
  %v1479 = vld [vmem:[%s6 + $0x140] sm:$0xff]
  %v1480 = vld [vmem:[%s6 + $0x148] sm:$0xff]
  %v1481 = vld [vmem:[%s6 + $0x150] sm:$0xff]
  %v1482 = vld [vmem:[%s6 + $0x158] sm:$0xff]
  %v1483 = vld [vmem:[%s6 + $0x160] sm:$0xff]
  %v1484 = vld [vmem:[%s6 + $0x168] sm:$0xff]
  %v1485 = vld [vmem:[%s6 + $0x170] sm:$0xff]
  %v1486 = vld [vmem:[%s6 + $0x178] sm:$0xff]
  %v1487 = vld [vmem:[%s6 + $0x180] sm:$0xff]
  %v1488 = vld [vmem:[%s6 + $0x188] sm:$0xff]
  %v1489 = vld [vmem:[%s6 + $0x190] sm:$0xff]
  %v1490 = vld [vmem:[%s6 + $0x198] sm:$0xff]
  %v1491 = vld [vmem:[%s6 + $0x1a0] sm:$0xff]
  %v1492 = vld [vmem:[%s6 + $0x1a8] sm:$0xff]
  %v1493 = vld [vmem:[%s6 + $0x1b0] sm:$0xff]
  %v1494 = vld [vmem:[%s6 + $0x1b8] sm:$0xff]
  %v1495 = vld [vmem:[%s6 + $0x1c0] sm:$0xff]
  %v1496 = vld [vmem:[%s6 + $0x1c8] sm:$0xff]
  %v1497 = vld [vmem:[%s6 + $0x1d0] sm:$0xff]
  %v1498 = vld [vmem:[%s6 + $0x1d8] sm:$0xff]
  %v1499 = vld [vmem:[%s6 + $0x1e0] sm:$0xff]
  %v1500 = vld [vmem:[%s6 + $0x1e8] sm:$0xff]
  %v1501 = vld [vmem:[%s6 + $0x1f0] sm:$0xff]
  %v1502 = vld [vmem:[%s6 + $0x1f8] sm:$0xff]
  %v1503 = vld [vmem:[%s6 + $0x200] sm:$0xff]
  %v1504 = vld [vmem:[%s6 + $0x208] sm:$0xff]
  %v1505 = vld [vmem:[%s6 + $0x210] sm:$0xff]
  %v1506 = vld [vmem:[%s6 + $0x218] sm:$0xff]
  %v1507 = vld [vmem:[%s6 + $0x220] sm:$0xff]
  %v1508 = vld [vmem:[%s6 + $0x228] sm:$0xff]
  %v1509 = vld [vmem:[%s6 + $0x230] sm:$0xff]
  %v1510 = vld [vmem:[%s6 + $0x238] sm:$0xff]
  %v1511 = vld [vmem:[%s6 + $0x240] sm:$0xff]
  %v1512 = vld [vmem:[%s6 + $0x248] sm:$0xff]
  %v1513 = vld [vmem:[%s6 + $0x250] sm:$0xff]
  %v1514 = vld [vmem:[%s6 + $0x258] sm:$0xff]
  %v1515 = vld [vmem:[%s6 + $0x260] sm:$0xff]
  %v1516 = vld [vmem:[%s6 + $0x268] sm:$0xff]
  %v1517 = vld [vmem:[%s6 + $0x270] sm:$0xff]
  %v1518 = vld [vmem:[%s6 + $0x278] sm:$0xff]
  %v1519 = vld [vmem:[%s6 + $0x280] sm:$0xff]
  %v1520 = vld [vmem:[%s6 + $0x288] sm:$0xff]
  %v1521 = vld [vmem:[%s6 + $0x290] sm:$0xff]
  %v1522 = vld [vmem:[%s6 + $0x298] sm:$0xff]
  %v1523 = vld [vmem:[%s6 + $0x2a0] sm:$0xff]
  %v1524 = vld [vmem:[%s6 + $0x2a8] sm:$0xff]
  %v1525 = vld [vmem:[%s6 + $0x2b0] sm:$0xff]
  %v1526 = vld [vmem:[%s6 + $0x2b8] sm:$0xff]
  %v1527 = vld [vmem:[%s6 + $0x2c0] sm:$0xff]
  %v1528 = vld [vmem:[%s6 + $0x2c8] sm:$0xff]
  %v1529 = vld [vmem:[%s6 + $0x2d0] sm:$0xff]
  %v1530 = vld [vmem:[%s6 + $0x2d8] sm:$0xff]
  %v1531 = vld [vmem:[%s6 + $0x2e0] sm:$0xff]
  %v1532 = vld [vmem:[%s6 + $0x2e8] sm:$0xff]
  %v1533 = vld [vmem:[%s6 + $0x2f0] sm:$0xff]
  %v1534 = vld [vmem:[%s6 + $0x2f8] sm:$0xff]
  %v1535 = vld [vmem:[%s6 + $0x300] sm:$0xff]
  %v1536 = vld [vmem:[%s6 + $0x308] sm:$0xff]
  %v1537 = vld [vmem:[%s6 + $0x310] sm:$0xff]
  %v1538 = vld [vmem:[%s6 + $0x318] sm:$0xff]
  %v1539 = vld [vmem:[%s6 + $0x320] sm:$0xff]
  %v1540 = vld [vmem:[%s6 + $0x328] sm:$0xff]
  %v1541 = vld [vmem:[%s6 + $0x330] sm:$0xff]
  %v1542 = vld [vmem:[%s6 + $0x338] sm:$0xff]
  %v1543 = vld [vmem:[%s6 + $0x340] sm:$0xff]
  %v1544 = vld [vmem:[%s6 + $0x348] sm:$0xff]
  %v1545 = vld [vmem:[%s6 + $0x350] sm:$0xff]
  %v1546 = vld [vmem:[%s6 + $0x358] sm:$0xff]
  %v1547 = vld [vmem:[%s6 + $0x360] sm:$0xff]
  %v1548 = vld [vmem:[%s6 + $0x368] sm:$0xff]
  %v1549 = vld [vmem:[%s6 + $0x370] sm:$0xff]
  %v1550 = vld [vmem:[%s6 + $0x378] sm:$0xff]
  %v1551 = vld [vmem:[%s6 + $0x380] sm:$0xff]
  %v1552 = vld [vmem:[%s6 + $0x388] sm:$0xff]
  %v1553 = vld [vmem:[%s6 + $0x390] sm:$0xff]
  %v1554 = vld [vmem:[%s6 + $0x398] sm:$0xff]
  %v1555 = vld [vmem:[%s6 + $0x3a0] sm:$0xff]
  %v1556 = vld [vmem:[%s6 + $0x3a8] sm:$0xff]
  %v1557 = vld [vmem:[%s6 + $0x3b0] sm:$0xff]
  %v1558 = vld [vmem:[%s6 + $0x3b8] sm:$0xff]
  %v1559 = vld [vmem:[%s6 + $0x3c0] sm:$0xff]
  %v1560 = vld [vmem:[%s6 + $0x3c8] sm:$0xff]
  %v1561 = vld [vmem:[%s6 + $0x3d0] sm:$0xff]
  %v1562 = vld [vmem:[%s6 + $0x3d8] sm:$0xff]
  %v1563 = vld [vmem:[%s6 + $0x3e0] sm:$0xff]
  %v1564 = vld [vmem:[%s6 + $0x3e8] sm:$0xff]
  %v1565 = vld [vmem:[%s6 + $0x3f0] sm:$0xff]
  %v1566 = vld [vmem:[%s6 + $0x3f8] sm:$0xff]
  %v1567 = vld [vmem:[%s6 + $0x400] sm:$0xff]
  %v1568 = vld [vmem:[%s6 + $0x408] sm:$0xff]
  %v1569 = vld [vmem:[%s6 + $0x410] sm:$0xff]
  %v1570 = vld [vmem:[%s6 + $0x418] sm:$0xff]
  %v1571 = vld [vmem:[%s6 + $0x420] sm:$0xff]
  %v1572 = vld [vmem:[%s6 + $0x428] sm:$0xff]
  %v1573 = vld [vmem:[%s6 + $0x430] sm:$0xff]
  %v1574 = vld [vmem:[%s6 + $0x438] sm:$0xff]
  %v1575 = vld [vmem:[%s6 + $0x440] sm:$0xff]
  %v1576 = vld [vmem:[%s6 + $0x448] sm:$0xff]
  %v1577 = vld [vmem:[%s6 + $0x450] sm:$0xff]
  %v1578 = vld [vmem:[%s6 + $0x458] sm:$0xff]
  %v1579 = vld [vmem:[%s6 + $0x460] sm:$0xff]
  %v1580 = vld [vmem:[%s6 + $0x468] sm:$0xff]
  %v1581 = vld [vmem:[%s6 + $0x470] sm:$0xff]
  %v1582 = vld [vmem:[%s6 + $0x478] sm:$0xff]
  %v1583 = vld [vmem:[%s6 + $0x480] sm:$0xff]
  %v1584 = vld [vmem:[%s6 + $0x488] sm:$0xff]
  %v1585 = vld [vmem:[%s6 + $0x490] sm:$0xff]
  %v1586 = vld [vmem:[%s6 + $0x498] sm:$0xff]
  %v1587 = vld [vmem:[%s6 + $0x4a0] sm:$0xff]
  %v1588 = vld [vmem:[%s6 + $0x4a8] sm:$0xff]
  %v1589 = vld [vmem:[%s6 + $0x4b0] sm:$0xff]
  %v1590 = vld [vmem:[%s6 + $0x4b8] sm:$0xff]
  %v1591 = vld [vmem:[%s6 + $0x4c0] sm:$0xff]
  %v1592 = vld [vmem:[%s6 + $0x4c8] sm:$0xff]
  %v1593 = vld [vmem:[%s6 + $0x4d0] sm:$0xff]
  %v1594 = vld [vmem:[%s6 + $0x4d8] sm:$0xff]
  %v1595 = vld [vmem:[%s6 + $0x4e0] sm:$0xff]
  %v1596 = vld [vmem:[%s6 + $0x4e8] sm:$0xff]
  %v1597 = vld [vmem:[%s6 + $0x4f0] sm:$0xff]
  %v1598 = vld [vmem:[%s6 + $0x4f8] sm:$0xff]
  %v1599 = vld [vmem:[%s6 + $0x500] sm:$0xff]
  %v1600 = vld [vmem:[%s6 + $0x508] sm:$0xff]
  %v1601 = vld [vmem:[%s6 + $0x510] sm:$0xff]
  %v1602 = vld [vmem:[%s6 + $0x518] sm:$0xff]
  %v1603 = vld [vmem:[%s6 + $0x520] sm:$0xff]
  %v1604 = vld [vmem:[%s6 + $0x528] sm:$0xff]
  %v1605 = vld [vmem:[%s6 + $0x530] sm:$0xff]
  %v1606 = vld [vmem:[%s6 + $0x538] sm:$0xff]
  %v1607 = vld [vmem:[%s6 + $0x540] sm:$0xff]
  %v1608 = vld [vmem:[%s6 + $0x548] sm:$0xff]
  %v1609 = vld [vmem:[%s6 + $0x550] sm:$0xff]
  %v1610 = vld [vmem:[%s6 + $0x558] sm:$0xff]
  %v1611 = vld [vmem:[%s6 + $0x560] sm:$0xff]
  %v1612 = vld [vmem:[%s6 + $0x568] sm:$0xff]
  %v1613 = vld [vmem:[%s6 + $0x570] sm:$0xff]
  %v1614 = vld [vmem:[%s6 + $0x578] sm:$0xff]
  %v1615 = vld [vmem:[%s6 + $0x580] sm:$0xff]
  %v1616 = vld [vmem:[%s6 + $0x588] sm:$0xff]
  %v1617 = vld [vmem:[%s6 + $0x590] sm:$0xff]
  %v1618 = vld [vmem:[%s6 + $0x598] sm:$0xff]
  %v1619 = vld [vmem:[%s6 + $0x5a0] sm:$0xff]
  %v1620 = vld [vmem:[%s6 + $0x5a8] sm:$0xff]
  %v1621 = vld [vmem:[%s6 + $0x5b0] sm:$0xff]
  %v1622 = vld [vmem:[%s6 + $0x5b8] sm:$0xff]
  %v1623 = vld [vmem:[%s6 + $0x5c0] sm:$0xff]
  %v1624 = vld [vmem:[%s6 + $0x5c8] sm:$0xff]
  %v1625 = vld [vmem:[%s6 + $0x5d0] sm:$0xff]
  %v1626 = vld [vmem:[%s6 + $0x5d8] sm:$0xff]
  %v1627 = vld [vmem:[%s6 + $0x5e0] sm:$0xff]
  %v1628 = vld [vmem:[%s6 + $0x5e8] sm:$0xff]
  %v1629 = vld [vmem:[%s6 + $0x5f0] sm:$0xff]
  %v1630 = vld [vmem:[%s6 + $0x5f8] sm:$0xff]
  %v1631 = vld [vmem:[%s6 + $0x600] sm:$0xff]
  %v1632 = vld [vmem:[%s6 + $0x608] sm:$0xff]
  %v1633 = vld [vmem:[%s6 + $0x610] sm:$0xff]
  %v1634 = vld [vmem:[%s6 + $0x618] sm:$0xff]
  %v1635 = vld [vmem:[%s6 + $0x620] sm:$0xff]
  %v1636 = vld [vmem:[%s6 + $0x628] sm:$0xff]
  %v1637 = vld [vmem:[%s6 + $0x630] sm:$0xff]
  %v1638 = vld [vmem:[%s6 + $0x638] sm:$0xff]
  %v1639 = vld [vmem:[%s6 + $0x640] sm:$0xff]
  %v1640 = vld [vmem:[%s6 + $0x648] sm:$0xff]
  %v1641 = vld [vmem:[%s6 + $0x650] sm:$0xff]
  %v1642 = vld [vmem:[%s6 + $0x658] sm:$0xff]
  %v1643 = vld [vmem:[%s6 + $0x660] sm:$0xff]
  %v1644 = vld [vmem:[%s6 + $0x668] sm:$0xff]
  %v1645 = vld [vmem:[%s6 + $0x670] sm:$0xff]
  %v1646 = vld [vmem:[%s6 + $0x678] sm:$0xff]
  %v1647 = vld [vmem:[%s6 + $0x680] sm:$0xff]
  %v1648 = vld [vmem:[%s6 + $0x688] sm:$0xff]
  %v1649 = vld [vmem:[%s6 + $0x690] sm:$0xff]
  %v1650 = vld [vmem:[%s6 + $0x698] sm:$0xff]
  %v1651 = vld [vmem:[%s6 + $0x6a0] sm:$0xff]
  %v1652 = vld [vmem:[%s6 + $0x6a8] sm:$0xff]
  %v1653 = vld [vmem:[%s6 + $0x6b0] sm:$0xff]
  %v1654 = vld [vmem:[%s6 + $0x6b8] sm:$0xff]
  %v1655 = vld [vmem:[%s6 + $0x6c0] sm:$0xff]
  %v1656 = vld [vmem:[%s6 + $0x6c8] sm:$0xff]
  %v1657 = vld [vmem:[%s6 + $0x6d0] sm:$0xff]
  %v1658 = vld [vmem:[%s6 + $0x6d8] sm:$0xff]
  %v1659 = vld [vmem:[%s6 + $0x6e0] sm:$0xff]
  %v1660 = vld [vmem:[%s6 + $0x6e8] sm:$0xff]
  %v1661 = vld [vmem:[%s6 + $0x6f0] sm:$0xff]
  %v1662 = vld [vmem:[%s6 + $0x6f8] sm:$0xff]
  %v1663 = vld [vmem:[%s6 + $0x700] sm:$0xff]
  %v1664 = vld [vmem:[%s6 + $0x708] sm:$0xff]
  %v1665 = vld [vmem:[%s6 + $0x710] sm:$0xff]
  %v1666 = vld [vmem:[%s6 + $0x718] sm:$0xff]
  %v1667 = vld [vmem:[%s6 + $0x720] sm:$0xff]
  %v1668 = vld [vmem:[%s6 + $0x728] sm:$0xff]
  %v1669 = vld [vmem:[%s6 + $0x730] sm:$0xff]
  %v1670 = vld [vmem:[%s6 + $0x738] sm:$0xff]
  %v1671 = vld [vmem:[%s6 + $0x740] sm:$0xff]
  %v1672 = vld [vmem:[%s6 + $0x748] sm:$0xff]
  %v1673 = vld [vmem:[%s6 + $0x750] sm:$0xff]
  %v1674 = vld [vmem:[%s6 + $0x758] sm:$0xff]
  %v1675 = vld [vmem:[%s6 + $0x760] sm:$0xff]
  %v1676 = vld [vmem:[%s6 + $0x768] sm:$0xff]
  %v1677 = vld [vmem:[%s6 + $0x770] sm:$0xff]
  %v1678 = vld [vmem:[%s6 + $0x778] sm:$0xff]
  %v1679 = vld [vmem:[%s6 + $0x780] sm:$0xff]
  %v1680 = vld [vmem:[%s6 + $0x788] sm:$0xff]
  %v1681 = vld [vmem:[%s6 + $0x790] sm:$0xff]
  %v1682 = vld [vmem:[%s6 + $0x798] sm:$0xff]
  %v1683 = vld [vmem:[%s6 + $0x7a0] sm:$0xff]
  %v1684 = vld [vmem:[%s6 + $0x7a8] sm:$0xff]
  %v1685 = vld [vmem:[%s6 + $0x7b0] sm:$0xff]
  %v1686 = vld [vmem:[%s6 + $0x7b8] sm:$0xff]
  %v1687 = vld [vmem:[%s6 + $0x7c0] sm:$0xff]
  %v1688 = vld [vmem:[%s6 + $0x7c8] sm:$0xff]
  %v1689 = vld [vmem:[%s6 + $0x7d0] sm:$0xff]
  %v1690 = vld [vmem:[%s6 + $0x7d8] sm:$0xff]
  %v1691 = vld [vmem:[%s6 + $0x7e0] sm:$0xff]
  %v1692 = vld [vmem:[%s6 + $0x7e8] sm:$0xff]
  %v1693 = vld [vmem:[%s6 + $0x7f0] sm:$0xff]
  %v1694 = vld [vmem:[%s6 + $0x7f8] sm:$0xff]
  %v1695 = vld [vmem:[%s7] sm:$0x1]
  %v1697 = vperm.slane %v1695, 0
  %1699 = vmatpush.msra.mxu0 %v1454
  %1700 = vmatpush.msra.mxu0 %v1453
  %1701 = vmatpush.msra.mxu0 %v1452
  %1702 = vmatpush.msra.mxu0 %v1451
  %1703 = vmatpush.msra.mxu0 %v1450
  %1704 = vmatpush.msra.mxu0 %v1449
  %1705 = vmatpush.msra.mxu0 %v1448
  %1706 = vmatpush.msra.mxu0 %v1447
  %1707 = vmatpush.msra.mxu0 %v1446
  %1708 = vmatpush.msra.mxu0 %v1445
  %1709 = vmatpush.msra.mxu0 %v1444
  %1710 = vmatpush.msra.mxu0 %v1443
  %1711 = vmatpush.msra.mxu0 %v1442
  %1712 = vmatpush.msra.mxu0 %v1441
  %1713 = vmatpush.msra.mxu0 %v1440
  %1714 = vmatpush.msra.mxu0 %v1439
  %1715 = vmatmul.f32.gmra.mxu0 %v1407
  %v1716 = vpop.f32.mrf.mxu0
  %v1717 = vadd.f32 %v1697, %v1716
  %1718 = vmatmul.f32.gmra.mxu0 %v1423
  %v1719 = vpop.f32.mrf.mxu0
  %v1720 = vadd.f32 %v1697, %v1719
  %1721 = vdwg.mxu0
  %1722 = vmatpush.msra.mxu0 %v1470
  %1723 = vmatpush.msra.mxu0 %v1469
  %1724 = vmatpush.msra.mxu0 %v1468
  %1725 = vmatpush.msra.mxu0 %v1467
  %1726 = vmatpush.msra.mxu0 %v1466
  %1727 = vmatpush.msra.mxu0 %v1465
  %1728 = vmatpush.msra.mxu0 %v1464
  %1729 = vmatpush.msra.mxu0 %v1463
  %1730 = vmatpush.msra.mxu0 %v1462
  %1731 = vmatpush.msra.mxu0 %v1461
  %1732 = vmatpush.msra.mxu0 %v1460
  %1733 = vmatpush.msra.mxu0 %v1459
  %1734 = vmatpush.msra.mxu0 %v1458
  %1735 = vmatpush.msra.mxu0 %v1457
  %1736 = vmatpush.msra.mxu0 %v1456
  %1737 = vmatpush.msra.mxu0 %v1455
  %1738 = vmatmul.f32.gmra.mxu0 %v1408
  %v1739 = vpop.f32.mrf.mxu0
  %v1740 = vadd.f32 %v1717, %v1739
  %1741 = vmatmul.f32.gmra.mxu0 %v1424
  %v1742 = vpop.f32.mrf.mxu0
  %v1743 = vadd.f32 %v1720, %v1742
  %1744 = vdwg.mxu0
  %1745 = vmatpush.msra.mxu0 %v1486
  %1746 = vmatpush.msra.mxu0 %v1485
  %1747 = vmatpush.msra.mxu0 %v1484
  %1748 = vmatpush.msra.mxu0 %v1483
  %1749 = vmatpush.msra.mxu0 %v1482
  %1750 = vmatpush.msra.mxu0 %v1481
  %1751 = vmatpush.msra.mxu0 %v1480
  %1752 = vmatpush.msra.mxu0 %v1479
  %1753 = vmatpush.msra.mxu0 %v1478
  %1754 = vmatpush.msra.mxu0 %v1477
  %1755 = vmatpush.msra.mxu0 %v1476
  %1756 = vmatpush.msra.mxu0 %v1475
  %1757 = vmatpush.msra.mxu0 %v1474
  %1758 = vmatpush.msra.mxu0 %v1473
  %1759 = vmatpush.msra.mxu0 %v1472
  %1760 = vmatpush.msra.mxu0 %v1471
  %1761 = vmatmul.f32.gmra.mxu0 %v1409
  %v1762 = vpop.f32.mrf.mxu0
  %v1763 = vadd.f32 %v1740, %v1762
  %1764 = vmatmul.f32.gmra.mxu0 %v1425
  %v1765 = vpop.f32.mrf.mxu0
  %v1766 = vadd.f32 %v1743, %v1765
  %1767 = vdwg.mxu0
  %1768 = vmatpush.msra.mxu0 %v1502
  %1769 = vmatpush.msra.mxu0 %v1501
  %1770 = vmatpush.msra.mxu0 %v1500
  %1771 = vmatpush.msra.mxu0 %v1499
  %1772 = vmatpush.msra.mxu0 %v1498
  %1773 = vmatpush.msra.mxu0 %v1497
  %1774 = vmatpush.msra.mxu0 %v1496
  %1775 = vmatpush.msra.mxu0 %v1495
  %1776 = vmatpush.msra.mxu0 %v1494
  %1777 = vmatpush.msra.mxu0 %v1493
  %1778 = vmatpush.msra.mxu0 %v1492
  %1779 = vmatpush.msra.mxu0 %v1491
  %1780 = vmatpush.msra.mxu0 %v1490
  %1781 = vmatpush.msra.mxu0 %v1489
  %1782 = vmatpush.msra.mxu0 %v1488
  %1783 = vmatpush.msra.mxu0 %v1487
  %1784 = vmatmul.f32.gmra.mxu0 %v1410
  %v1785 = vpop.f32.mrf.mxu0
  %v1786 = vadd.f32 %v1763, %v1785
  %1787 = vmatmul.f32.gmra.mxu0 %v1426
  %v1788 = vpop.f32.mrf.mxu0
  %v1789 = vadd.f32 %v1766, %v1788
  %1790 = vdwg.mxu0
  %1791 = vmatpush.msra.mxu0 %v1518
  %1792 = vmatpush.msra.mxu0 %v1517
  %1793 = vmatpush.msra.mxu0 %v1516
  %1794 = vmatpush.msra.mxu0 %v1515
  %1795 = vmatpush.msra.mxu0 %v1514
  %1796 = vmatpush.msra.mxu0 %v1513
  %1797 = vmatpush.msra.mxu0 %v1512
  %1798 = vmatpush.msra.mxu0 %v1511
  %1799 = vmatpush.msra.mxu0 %v1510
  %1800 = vmatpush.msra.mxu0 %v1509
  %1801 = vmatpush.msra.mxu0 %v1508
  %1802 = vmatpush.msra.mxu0 %v1507
  %1803 = vmatpush.msra.mxu0 %v1506
  %1804 = vmatpush.msra.mxu0 %v1505
  %1805 = vmatpush.msra.mxu0 %v1504
  %1806 = vmatpush.msra.mxu0 %v1503
  %1807 = vmatmul.f32.gmra.mxu0 %v1411
  %v1808 = vpop.f32.mrf.mxu0
  %v1809 = vadd.f32 %v1786, %v1808
  %1810 = vmatmul.f32.gmra.mxu0 %v1427
  %v1811 = vpop.f32.mrf.mxu0
  %v1812 = vadd.f32 %v1789, %v1811
  %1813 = vdwg.mxu0
  %1814 = vmatpush.msra.mxu0 %v1534
  %1815 = vmatpush.msra.mxu0 %v1533
  %1816 = vmatpush.msra.mxu0 %v1532
  %1817 = vmatpush.msra.mxu0 %v1531
  %1818 = vmatpush.msra.mxu0 %v1530
  %1819 = vmatpush.msra.mxu0 %v1529
  %1820 = vmatpush.msra.mxu0 %v1528
  %1821 = vmatpush.msra.mxu0 %v1527
  %1822 = vmatpush.msra.mxu0 %v1526
  %1823 = vmatpush.msra.mxu0 %v1525
  %1824 = vmatpush.msra.mxu0 %v1524
  %1825 = vmatpush.msra.mxu0 %v1523
  %1826 = vmatpush.msra.mxu0 %v1522
  %1827 = vmatpush.msra.mxu0 %v1521
  %1828 = vmatpush.msra.mxu0 %v1520
  %1829 = vmatpush.msra.mxu0 %v1519
  %1830 = vmatmul.f32.gmra.mxu0 %v1412
  %v1831 = vpop.f32.mrf.mxu0
  %v1832 = vadd.f32 %v1809, %v1831
  %1833 = vmatmul.f32.gmra.mxu0 %v1428
  %v1834 = vpop.f32.mrf.mxu0
  %v1835 = vadd.f32 %v1812, %v1834
  %1836 = vdwg.mxu0
  %1837 = vmatpush.msra.mxu0 %v1550
  %1838 = vmatpush.msra.mxu0 %v1549
  %1839 = vmatpush.msra.mxu0 %v1548
  %1840 = vmatpush.msra.mxu0 %v1547
  %1841 = vmatpush.msra.mxu0 %v1546
  %1842 = vmatpush.msra.mxu0 %v1545
  %1843 = vmatpush.msra.mxu0 %v1544
  %1844 = vmatpush.msra.mxu0 %v1543
  %1845 = vmatpush.msra.mxu0 %v1542
  %1846 = vmatpush.msra.mxu0 %v1541
  %1847 = vmatpush.msra.mxu0 %v1540
  %1848 = vmatpush.msra.mxu0 %v1539
  %1849 = vmatpush.msra.mxu0 %v1538
  %1850 = vmatpush.msra.mxu0 %v1537
  %1851 = vmatpush.msra.mxu0 %v1536
  %1852 = vmatpush.msra.mxu0 %v1535
  %1853 = vmatmul.f32.gmra.mxu0 %v1413
  %v1854 = vpop.f32.mrf.mxu0
  %v1855 = vadd.f32 %v1832, %v1854
  %1856 = vmatmul.f32.gmra.mxu0 %v1429
  %v1857 = vpop.f32.mrf.mxu0
  %v1858 = vadd.f32 %v1835, %v1857
  %1859 = vdwg.mxu0
  %1860 = vmatpush.msra.mxu0 %v1566
  %1861 = vmatpush.msra.mxu0 %v1565
  %1862 = vmatpush.msra.mxu0 %v1564
  %1863 = vmatpush.msra.mxu0 %v1563
  %1864 = vmatpush.msra.mxu0 %v1562
  %1865 = vmatpush.msra.mxu0 %v1561
  %1866 = vmatpush.msra.mxu0 %v1560
  %1867 = vmatpush.msra.mxu0 %v1559
  %1868 = vmatpush.msra.mxu0 %v1558
  %1869 = vmatpush.msra.mxu0 %v1557
  %1870 = vmatpush.msra.mxu0 %v1556
  %1871 = vmatpush.msra.mxu0 %v1555
  %1872 = vmatpush.msra.mxu0 %v1554
  %1873 = vmatpush.msra.mxu0 %v1553
  %1874 = vmatpush.msra.mxu0 %v1552
  %1875 = vmatpush.msra.mxu0 %v1551
  %1876 = vmatmul.f32.gmra.mxu0 %v1414
  %v1877 = vpop.f32.mrf.mxu0
  %v1878 = vadd.f32 %v1855, %v1877
  %1879 = vmatmul.f32.gmra.mxu0 %v1430
  %v1880 = vpop.f32.mrf.mxu0
  %v1881 = vadd.f32 %v1858, %v1880
  %1882 = vdwg.mxu0
  %1883 = vmatpush.msra.mxu0 %v1582
  %1884 = vmatpush.msra.mxu0 %v1581
  %1885 = vmatpush.msra.mxu0 %v1580
  %1886 = vmatpush.msra.mxu0 %v1579
  %1887 = vmatpush.msra.mxu0 %v1578
  %1888 = vmatpush.msra.mxu0 %v1577
  %1889 = vmatpush.msra.mxu0 %v1576
  %1890 = vmatpush.msra.mxu0 %v1575
  %1891 = vmatpush.msra.mxu0 %v1574
  %1892 = vmatpush.msra.mxu0 %v1573
  %1893 = vmatpush.msra.mxu0 %v1572
  %1894 = vmatpush.msra.mxu0 %v1571
  %1895 = vmatpush.msra.mxu0 %v1570
  %1896 = vmatpush.msra.mxu0 %v1569
  %1897 = vmatpush.msra.mxu0 %v1568
  %1898 = vmatpush.msra.mxu0 %v1567
  %1899 = vmatmul.f32.gmra.mxu0 %v1415
  %v1900 = vpop.f32.mrf.mxu0
  %v1901 = vadd.f32 %v1878, %v1900
  %1902 = vmatmul.f32.gmra.mxu0 %v1431
  %v1903 = vpop.f32.mrf.mxu0
  %v1904 = vadd.f32 %v1881, %v1903
  %1905 = vdwg.mxu0
  %1906 = vmatpush.msra.mxu0 %v1598
  %1907 = vmatpush.msra.mxu0 %v1597
  %1908 = vmatpush.msra.mxu0 %v1596
  %1909 = vmatpush.msra.mxu0 %v1595
  %1910 = vmatpush.msra.mxu0 %v1594
  %1911 = vmatpush.msra.mxu0 %v1593
  %1912 = vmatpush.msra.mxu0 %v1592
  %1913 = vmatpush.msra.mxu0 %v1591
  %1914 = vmatpush.msra.mxu0 %v1590
  %1915 = vmatpush.msra.mxu0 %v1589
  %1916 = vmatpush.msra.mxu0 %v1588
  %1917 = vmatpush.msra.mxu0 %v1587
  %1918 = vmatpush.msra.mxu0 %v1586
  %1919 = vmatpush.msra.mxu0 %v1585
  %1920 = vmatpush.msra.mxu0 %v1584
  %1921 = vmatpush.msra.mxu0 %v1583
  %1922 = vmatmul.f32.gmra.mxu0 %v1416
  %v1923 = vpop.f32.mrf.mxu0
  %v1924 = vadd.f32 %v1901, %v1923
  %1925 = vmatmul.f32.gmra.mxu0 %v1432
  %v1926 = vpop.f32.mrf.mxu0
  %v1927 = vadd.f32 %v1904, %v1926
  %1928 = vdwg.mxu0
  %1929 = vmatpush.msra.mxu0 %v1614
  %1930 = vmatpush.msra.mxu0 %v1613
  %1931 = vmatpush.msra.mxu0 %v1612
  %1932 = vmatpush.msra.mxu0 %v1611
  %1933 = vmatpush.msra.mxu0 %v1610
  %1934 = vmatpush.msra.mxu0 %v1609
  %1935 = vmatpush.msra.mxu0 %v1608
  %1936 = vmatpush.msra.mxu0 %v1607
  %1937 = vmatpush.msra.mxu0 %v1606
  %1938 = vmatpush.msra.mxu0 %v1605
  %1939 = vmatpush.msra.mxu0 %v1604
  %1940 = vmatpush.msra.mxu0 %v1603
  %1941 = vmatpush.msra.mxu0 %v1602
  %1942 = vmatpush.msra.mxu0 %v1601
  %1943 = vmatpush.msra.mxu0 %v1600
  %1944 = vmatpush.msra.mxu0 %v1599
  %1945 = vmatmul.f32.gmra.mxu0 %v1417
  %v1946 = vpop.f32.mrf.mxu0
  %v1947 = vadd.f32 %v1924, %v1946
  %1948 = vmatmul.f32.gmra.mxu0 %v1433
  %v1949 = vpop.f32.mrf.mxu0
  %v1950 = vadd.f32 %v1927, %v1949
  %1951 = vdwg.mxu0
  %1952 = vmatpush.msra.mxu0 %v1630
  %1953 = vmatpush.msra.mxu0 %v1629
  %1954 = vmatpush.msra.mxu0 %v1628
  %1955 = vmatpush.msra.mxu0 %v1627
  %1956 = vmatpush.msra.mxu0 %v1626
  %1957 = vmatpush.msra.mxu0 %v1625
  %1958 = vmatpush.msra.mxu0 %v1624
  %1959 = vmatpush.msra.mxu0 %v1623
  %1960 = vmatpush.msra.mxu0 %v1622
  %1961 = vmatpush.msra.mxu0 %v1621
  %1962 = vmatpush.msra.mxu0 %v1620
  %1963 = vmatpush.msra.mxu0 %v1619
  %1964 = vmatpush.msra.mxu0 %v1618
  %1965 = vmatpush.msra.mxu0 %v1617
  %1966 = vmatpush.msra.mxu0 %v1616
  %1967 = vmatpush.msra.mxu0 %v1615
  %1968 = vmatmul.f32.gmra.mxu0 %v1418
  %v1969 = vpop.f32.mrf.mxu0
  %v1970 = vadd.f32 %v1947, %v1969
  %1971 = vmatmul.f32.gmra.mxu0 %v1434
  %v1972 = vpop.f32.mrf.mxu0
  %v1973 = vadd.f32 %v1950, %v1972
  %1974 = vdwg.mxu0
  %1975 = vmatpush.msra.mxu0 %v1646
  %1976 = vmatpush.msra.mxu0 %v1645
  %1977 = vmatpush.msra.mxu0 %v1644
  %1978 = vmatpush.msra.mxu0 %v1643
  %1979 = vmatpush.msra.mxu0 %v1642
  %1980 = vmatpush.msra.mxu0 %v1641
  %1981 = vmatpush.msra.mxu0 %v1640
  %1982 = vmatpush.msra.mxu0 %v1639
  %1983 = vmatpush.msra.mxu0 %v1638
  %1984 = vmatpush.msra.mxu0 %v1637
  %1985 = vmatpush.msra.mxu0 %v1636
  %1986 = vmatpush.msra.mxu0 %v1635
  %1987 = vmatpush.msra.mxu0 %v1634
  %1988 = vmatpush.msra.mxu0 %v1633
  %1989 = vmatpush.msra.mxu0 %v1632
  %1990 = vmatpush.msra.mxu0 %v1631
  %1991 = vmatmul.f32.gmra.mxu0 %v1419
  %v1992 = vpop.f32.mrf.mxu0
  %v1993 = vadd.f32 %v1970, %v1992
  %1994 = vmatmul.f32.gmra.mxu0 %v1435
  %v1995 = vpop.f32.mrf.mxu0
  %v1996 = vadd.f32 %v1973, %v1995
  %1997 = vdwg.mxu0
  %1998 = vmatpush.msra.mxu0 %v1662
  %1999 = vmatpush.msra.mxu0 %v1661
  %2000 = vmatpush.msra.mxu0 %v1660
  %2001 = vmatpush.msra.mxu0 %v1659
  %2002 = vmatpush.msra.mxu0 %v1658
  %2003 = vmatpush.msra.mxu0 %v1657
  %2004 = vmatpush.msra.mxu0 %v1656
  %2005 = vmatpush.msra.mxu0 %v1655
  %2006 = vmatpush.msra.mxu0 %v1654
  %2007 = vmatpush.msra.mxu0 %v1653
  %2008 = vmatpush.msra.mxu0 %v1652
  %2009 = vmatpush.msra.mxu0 %v1651
  %2010 = vmatpush.msra.mxu0 %v1650
  %2011 = vmatpush.msra.mxu0 %v1649
  %2012 = vmatpush.msra.mxu0 %v1648
  %2013 = vmatpush.msra.mxu0 %v1647
  %2014 = vmatmul.f32.gmra.mxu0 %v1420
  %v2015 = vpop.f32.mrf.mxu0
  %v2016 = vadd.f32 %v1993, %v2015
  %2017 = vmatmul.f32.gmra.mxu0 %v1436
  %v2018 = vpop.f32.mrf.mxu0
  %v2019 = vadd.f32 %v1996, %v2018
  %2020 = vdwg.mxu0
  %2021 = vmatpush.msra.mxu0 %v1678
  %2022 = vmatpush.msra.mxu0 %v1677
  %2023 = vmatpush.msra.mxu0 %v1676
  %2024 = vmatpush.msra.mxu0 %v1675
  %2025 = vmatpush.msra.mxu0 %v1674
  %2026 = vmatpush.msra.mxu0 %v1673
  %2027 = vmatpush.msra.mxu0 %v1672
  %2028 = vmatpush.msra.mxu0 %v1671
  %2029 = vmatpush.msra.mxu0 %v1670
  %2030 = vmatpush.msra.mxu0 %v1669
  %2031 = vmatpush.msra.mxu0 %v1668
  %2032 = vmatpush.msra.mxu0 %v1667
  %2033 = vmatpush.msra.mxu0 %v1666
  %2034 = vmatpush.msra.mxu0 %v1665
  %2035 = vmatpush.msra.mxu0 %v1664
  %2036 = vmatpush.msra.mxu0 %v1663
  %2037 = vmatmul.f32.gmra.mxu0 %v1421
  %v2038 = vpop.f32.mrf.mxu0
  %v2039 = vadd.f32 %v2016, %v2038
  %2040 = vmatmul.f32.gmra.mxu0 %v1437
  %v2041 = vpop.f32.mrf.mxu0
  %v2042 = vadd.f32 %v2019, %v2041
  %2043 = vdwg.mxu0
  %2044 = vmatpush.msra.mxu0 %v1694
  %2045 = vmatpush.msra.mxu0 %v1693
  %2046 = vmatpush.msra.mxu0 %v1692
  %2047 = vmatpush.msra.mxu0 %v1691
  %2048 = vmatpush.msra.mxu0 %v1690
  %2049 = vmatpush.msra.mxu0 %v1689
  %2050 = vmatpush.msra.mxu0 %v1688
  %2051 = vmatpush.msra.mxu0 %v1687
  %2052 = vmatpush.msra.mxu0 %v1686
  %2053 = vmatpush.msra.mxu0 %v1685
  %2054 = vmatpush.msra.mxu0 %v1684
  %2055 = vmatpush.msra.mxu0 %v1683
  %2056 = vmatpush.msra.mxu0 %v1682
  %2057 = vmatpush.msra.mxu0 %v1681
  %2058 = vmatpush.msra.mxu0 %v1680
  %2059 = vmatpush.msra.mxu0 %v1679
  %2060 = vmatmul.f32.gmra.mxu0 %v1422
  %v2061 = vpop.f32.mrf.mxu0
  %v2062 = vadd.f32 %v2039, %v2061
  %2063 = vmatmul.f32.gmra.mxu0 %v1438
  %v2064 = vpop.f32.mrf.mxu0
  %v2065 = vadd.f32 %v2042, %v2064
  %2066 = vdwg.mxu0
  %v2067 = vtanh.pop %v2062
  %v2068 = vtanh.pop %v2065
  %2069 = vst [vmem:[%s8] sm:$0xff] %v2067
  %2070 = vst [vmem:[%s8 + $0x8] sm:$0xff] %v2068
  // Predicated region
  $region34: #{fedsage_plus_forward.21} parent=0 // pred_check
    _
  $region35: #{fedsage_plus_forward.21} parent=0 // pred_check_branch
    %2072 = sbr.rel (0) target = $region37
  $region36: #{fedsage_plus_forward.21} parent=0 // pred_region
    _
  $region37: #{fedsage_plus_forward.21} parent=0 // pred_fallthru
    _
  // Predicated region
  $region38: #{fedsage_plus_forward.21} parent=0 // pred_check
    _
  $region39: #{fedsage_plus_forward.21} parent=0 // pred_check_branch
    %2074 = sbr.rel (0) target = $region41
  $region40: #{fedsage_plus_forward.21} parent=0 // pred_region
    _
  $region41: #{fedsage_plus_forward.21} parent=0 // pred_fallthru
    _

</llo_original>
